<compile_context>
chip_gen: v5e
topology: v5e:2x2
jax: 0.10.0
libtpu: 0.0.40
codegen_flags: <defaults>
</compile_context>

<pallas_src>
import functools

import jax
import jax.numpy as jnp
from jax.experimental import pallas as pl
from jax.experimental.pallas import tpu as pltpu


# 3x3 taps in (dy, dx) order; t = (dy+1)*3 + (dx+1) matches OIHW kernel order.
_TAPS = tuple((dy, dx) for dy in (-1, 0, 1) for dx in (-1, 0, 1))
_GROUP = 16                   # channels per im2col group (all convs use this)
_GROUP_ROWS = 9 * _GROUP      # 144 im2col rows per 16-channel group
_TARGET_LANES = 2048          # aim for 1-2K lanes per matmul (amortize MXU fill)


# --------------------------------------------------------------------------
# Fused encoder kernel (one grid step == B_TILE packed batch elements)
# --------------------------------------------------------------------------
def _encoder1_kernel(mask_ref, x_ref, w1_ref, b1_ref, wd_ref, bd_ref,
                     wc1_ref, bc1_ref, wc2_ref, bc2_ref, wc3_ref, bc3_ref,
                     o_ref, pbuf_ref, *, W, lanes):
    # mask_ref: (9, lanes) f32   per-tap validity masks, tiled per packed image
    # x_ref   : (1, 16, lanes) bf16  input, channels zero-padded 3 -> 16
    # w*_ref  : (Cout, 9*Cin) bf16   im2col-ordered weights
    # b*_ref  : (Cout, 1) f32        biases
    # o_ref   : (1, 64, lanes) f32   [Conv_d | Dense1 | Dense2 | Dense3] rows
    # pbuf    : (432, lanes) bf16    reused im2col slab
    f32, bf16 = jnp.float32, jnp.bfloat16
    R = _GROUP_ROWS                                   # 144

    def fill_group(act_f32, base_row):
        """im2col-expand one 16-channel f32 group into pbuf rows
        [base_row, base_row + 144).  Boundary taps are masked in f32 and cast
        to bf16 exactly once per tap (no bf16 VALU work on v5e).  The mask is
        also what keeps roll-wrap across packed-batch boundaries at zero."""
        for t, (dy, dx) in enumerate(_TAPS):
            delta = dy * W + dx
            if delta == 0:
                chunk = act_f32                        # center tap: always valid
            else:
                shift = (-delta) % lanes
                chunk = (pltpu.roll(act_f32, shift=shift, axis=1)
                         * mask_ref[t:t + 1, :])
            pbuf_ref[base_row + t * _GROUP:base_row + (t + 1) * _GROUP, :] = (
                chunk.astype(bf16))

    def conv(w, b, row_start, n_rows, relu):
        """One MXU matmul over pbuf rows [row_start, row_start + n_rows)."""
        acc = jnp.dot(w, pbuf_ref[row_start:row_start + n_rows, :],
                      preferred_element_type=f32) + b
        return jnp.maximum(acc, 0.0) if relu else acc

    # ---- Conv1: 3 (zero-padded to 16) -> 32, ReLU.  Input im2col lives in
    #      rows [0, 144); each 16-channel output group is im2col'd into the
    #      slab immediately, so the full (32, lanes) f32 never stays live.
    fill_group(x_ref[0].astype(f32), 0)
    a1_lo = conv(w1_ref[0:_GROUP, :], b1_ref[0:_GROUP, :], 0, R, relu=True)
    fill_group(a1_lo, R)                               # rows [144, 288)
    a1_hi = conv(w1_ref[_GROUP:2 * _GROUP, :], b1_ref[_GROUP:2 * _GROUP, :],
                 0, R, relu=True)
    fill_group(a1_hi, 2 * R)                           # rows [288, 432)

    # ---- Conv_d: 32 -> 16, no activation (reads a1 rows [144, 432)) --------
    xd0 = conv(wd_ref[...], bd_ref[...], R, 2 * R, relu=False)
    o_ref[0, 0:16, :] = xd0.astype(o_ref.dtype)
    fill_group(xd0, 0)                                 # input rows now dead

    # ---- Dense block: DenseConv_k reads rows [0, k*144); each output goes
    #      straight into its channel slice and its own slab rows. ------------
    d1 = conv(wc1_ref[...], bc1_ref[...], 0, R, relu=True)
    o_ref[0, 16:32, :] = d1.astype(o_ref.dtype)
    fill_group(d1, R)                                  # a1_lo rows now dead

    d2 = conv(wc2_ref[...], bc2_ref[...], 0, 2 * R, relu=True)
    o_ref[0, 32:48, :] = d2.astype(o_ref.dtype)
    fill_group(d2, 2 * R)                              # a1_hi rows now dead

    d3 = conv(wc3_ref[...], bc3_ref[...], 0, 3 * R, relu=True)
    o_ref[0, 48:64, :] = d3.astype(o_ref.dtype)


# --------------------------------------------------------------------------
# Weight re-layout: PyTorch OIHW -> im2col-ordered (Cout, ng*9*16)
# Row order must match the kernel's slab: [group][tap][channel-in-group].
# --------------------------------------------------------------------------
def _reorder_weight(w_oihw, group_size=_GROUP):
    cout, cin, kh, kw = w_oihw.shape
    ng = cin // group_size
    w = w_oihw.reshape(cout, ng, group_size, kh * kw)   # [o, g, c, t]
    w = jnp.transpose(w, (0, 1, 3, 2))                  # [o, g, t, c]
    return w.reshape(cout, ng * kh * kw * group_size)


# --------------------------------------------------------------------------
# Public forward (NCHW in / NCHW out, like the PyTorch module)
# --------------------------------------------------------------------------
def encoder1_forward(params, x_nchw, *, b_tile=None):
    N, C, H, W = x_nchw.shape
    assert C == 3, "Encoder1 expects 3 input channels"
    HW = H * W
    assert HW % 128 == 0, "H*W must be lane-aligned (multiple of 128)"

    f32, bf16 = jnp.float32, jnp.bfloat16

    # ---- batch packing into the lane axis ----------------------------------
    if b_tile is None:
        b_tile = max(1, min(N, _TARGET_LANES // HW))
    n_pad = ((N + b_tile - 1) // b_tile) * b_tile
    num_tiles = n_pad // b_tile
    lanes = b_tile * HW

    # VMEM footprint (slab + 2x in-block + 2x out-block + masks + weights)
    vmem_need = (3 * _GROUP_ROWS * lanes * 2     # im2col slab (bf16)
                 + 2 * _GROUP * lanes * 2        # input blocks (bf16)
                 + 2 * 64 * lanes * 4            # output blocks (f32)
                 + 2 * 9 * lanes * 4             # masks (f32)
                 + (1 << 20))                    # weights/biases + slack
    # TODO(synk): for large images (HW >= ~64K) add a spatial grid axis with a
    # 1-row halo instead of keeping whole frames resident (v7x has 64 MiB VMEM).
    assert vmem_need < (96 << 20), "image too large; needs spatial tiling"
    vmem_limit = int(min(100 << 20, max(2 * vmem_need, 16 << 20)))

    # ---- operand prep (all heavy work is in-kernel) -------------------------
    # Input: pad channels 3->16 and batch N->n_pad, pack b_tile images into the
    # lane axis, DMA as bf16 (it is cast to bf16 in-kernel anyway).
    x_flat = x_nchw.reshape(N, C, HW)
    x_p = jnp.pad(x_flat, ((0, n_pad - N), (0, _GROUP - C), (0, 0)))
    x_p = x_p.reshape(num_tiles, b_tile, _GROUP, HW)
    x_p = jnp.transpose(x_p, (0, 2, 1, 3)).reshape(num_tiles, _GROUP, lanes)
    x_p = x_p.astype(bf16)

    # Per-tap boundary masks, hoisted out of the kernel and tiled once per
    # packed image (also zeroes roll wrap across packed-batch boundaries).
    col = jnp.arange(HW, dtype=jnp.int32)
    wi, hi = col % W, col // W
    rows = []
    for dy, dx in _TAPS:
        ok = ((wi + dx >= 0) & (wi + dx < W) & (hi + dy >= 0) & (hi + dy < H))
        rows.append(ok)
    mask = jnp.tile(jnp.stack(rows, axis=0).astype(f32), (1, b_tile))  # (9,lanes)

    w1 = jnp.pad(params["Conv1"]["w"],
                 ((0, 0), (0, _GROUP - C), (0, 0), (0, 0)))      # pad Cin 3->16
    w1 = _reorder_weight(w1).astype(bf16)                        # (32, 144)
    wd = _reorder_weight(params["Conv_d"]["w"]).astype(bf16)     # (16, 288)
    wc1 = _reorder_weight(params["DenseConv1"]["w"]).astype(bf16)  # (16, 144)
    wc2 = _reorder_weight(params["DenseConv2"]["w"]).astype(bf16)  # (16, 288)
    wc3 = _reorder_weight(params["DenseConv3"]["w"]).astype(bf16)  # (16, 432)

    def bias(name):
        return params[name]["b"].astype(f32).reshape(-1, 1)
    b1, bd = bias("Conv1"), bias("Conv_d")
    bc1, bc2, bc3 = bias("DenseConv1"), bias("DenseConv2"), bias("DenseConv3")

    def _const_spec(shape):
        return pl.BlockSpec(shape, lambda n: tuple(0 for _ in shape))

    kernel = functools.partial(_encoder1_kernel, W=W, lanes=lanes)

    out = pl.pallas_call(
        kernel,
        out_shape=jax.ShapeDtypeStruct((num_tiles, 64, lanes), f32),
        grid_spec=pltpu.PrefetchScalarGridSpec(
            num_scalar_prefetch=0,
            grid=(num_tiles,),
            in_specs=[
                _const_spec(mask.shape),
                pl.BlockSpec((1, _GROUP, lanes), lambda n: (n, 0, 0)),
                _const_spec(w1.shape), _const_spec(b1.shape),
                _const_spec(wd.shape), _const_spec(bd.shape),
                _const_spec(wc1.shape), _const_spec(bc1.shape),
                _const_spec(wc2.shape), _const_spec(bc2.shape),
                _const_spec(wc3.shape), _const_spec(bc3.shape),
            ],
            out_specs=pl.BlockSpec((1, 64, lanes), lambda n: (n, 0, 0)),
            scratch_shapes=[pltpu.VMEM((3 * _GROUP_ROWS, lanes), bf16)],
        ),
        compiler_params=pltpu.CompilerParams(
            dimension_semantics=("parallel",),
            vmem_limit_bytes=vmem_limit),
    )(mask, x_p, w1, b1, wd, bd, wc1, bc1, wc2, bc2, wc3, bc3)

    # unpack the lane axis back to (batch, channel, H, W) and drop batch pad
    out = out.reshape(num_tiles, 64, b_tile, HW)
    out = jnp.transpose(out, (0, 2, 1, 3)).reshape(n_pad, 64, H, W)
    return out[:N]


# --------------------------------------------------------------------------
# Deterministic synthetic parameters (PyTorch OIHW layout, Conv2d-style init)
# --------------------------------------------------------------------------
def init_encoder1_params(key, dtype=jnp.float32):
    shapes = {
        "Conv1":      (32, 3, 3, 3),
        "Conv_d":     (16, 32, 3, 3),
        "DenseConv1": (16, 16, 3, 3),
        "DenseConv2": (16, 32, 3, 3),
        "DenseConv3": (16, 48, 3, 3),
    }
    params = {}
    for i, (name, shp) in enumerate(shapes.items()):
        kw, kb = jax.random.split(jax.random.fold_in(key, i))
        fan_in = shp[1] * shp[2] * shp[3]
        bound = float(fan_in) ** -0.5
        params[name] = {
            "w": jax.random.uniform(kw, shp, dtype, -bound, bound),
            "b": jax.random.uniform(kb, (shp[0],), dtype, -bound, bound),
        }
    return params


# --------------------------------------------------------------------------
# Pure-JAX reference (mirrors the PyTorch forward) for a numerical self-check
# --------------------------------------------------------------------------
def _conv3x3_ref(x, w, b):
    y = jax.lax.conv_general_dilated(
        x, w, window_strides=(1, 1), padding=((1, 1), (1, 1)),
        dimension_numbers=("NCHW", "OIHW", "NCHW"))
    return y + b[None, :, None, None]


def encoder1_reference(params, x):
    a = jax.nn.relu(_conv3x3_ref(x, params["Conv1"]["w"], params["Conv1"]["b"]))
    xd = _conv3x3_ref(a, params["Conv_d"]["w"], params["Conv_d"]["b"])
    for i in range(3):
        p = params["DenseConv" + str(i + 1)]
        xd = jnp.concatenate(
            [xd, jax.nn.relu(_conv3x3_ref(xd, p["w"], p["b"]))], axis=1)
    return xd


if __name__ == "__main__":
    key = jax.random.PRNGKey(0)
    pkey, xkey = jax.random.split(key)

    params = init_encoder1_params(pkey)
    x = jax.random.normal(xkey, (2, 3, 16, 16), jnp.float32)

    fwd = jax.jit(encoder1_forward)
    y = jax.block_until_ready(fwd(params, x))

    assert y.shape == (2, 64, 16, 16), y.shape
    assert bool(jnp.isfinite(y).all())

    # Self-check against the pure-JAX reference (bf16 MXU inputs -> loose tol).
    y_ref = encoder1_reference(params, x)
    max_err = float(jnp.max(jnp.abs(y - y_ref)))
    assert max_err < 0.15, f"mismatch vs reference: max|err|={max_err}"

    print("KERNEL_OK")
</pallas_src>

<mosaic_0001>
module attributes {stable_mosaic.version = 11 : i64} {
  func.func @_encoder1_kernel(%arg0: i32, %arg1: memref<9x512xf32, #tpu.memory_space<vmem>>, %arg2: memref<1x16x512xbf16, #tpu.memory_space<vmem>>, %arg3: memref<32x144xbf16, #tpu.memory_space<vmem>>, %arg4: memref<32x1xf32, #tpu.memory_space<vmem>>, %arg5: memref<16x288xbf16, #tpu.memory_space<vmem>>, %arg6: memref<16x1xf32, #tpu.memory_space<vmem>>, %arg7: memref<16x144xbf16, #tpu.memory_space<vmem>>, %arg8: memref<16x1xf32, #tpu.memory_space<vmem>>, %arg9: memref<16x288xbf16, #tpu.memory_space<vmem>>, %arg10: memref<16x1xf32, #tpu.memory_space<vmem>>, %arg11: memref<16x432xbf16, #tpu.memory_space<vmem>>, %arg12: memref<16x1xf32, #tpu.memory_space<vmem>>, %arg13: memref<1x64x512xf32, #tpu.memory_space<vmem>>, %arg14: memref<432x512xbf16, #tpu.memory_space<vmem>>) attributes {dimension_semantics = [#tpu.dimension_semantics<parallel>], iteration_bounds = array<i64: 1>, scalar_prefetch = 0 : i64, scratch_operands = 1 : i64, tpu.core_type = #tpu.core_type<tc>, window_params = [{pipeline_mode = #tpu.pipeline_mode<synchronous>, transform_indices = @transform_0, window_bounds = array<i64: 9, 512>}, {transform_indices = @transform_1, window_bounds = array<i64: 1, 16, 512>}, {pipeline_mode = #tpu.pipeline_mode<synchronous>, transform_indices = @transform_2, window_bounds = array<i64: 32, 144>}, {pipeline_mode = #tpu.pipeline_mode<synchronous>, transform_indices = @transform_3, window_bounds = array<i64: 32, 1>}, {pipeline_mode = #tpu.pipeline_mode<synchronous>, transform_indices = @transform_4, window_bounds = array<i64: 16, 288>}, {pipeline_mode = #tpu.pipeline_mode<synchronous>, transform_indices = @transform_5, window_bounds = array<i64: 16, 1>}, {pipeline_mode = #tpu.pipeline_mode<synchronous>, transform_indices = @transform_6, window_bounds = array<i64: 16, 144>}, {pipeline_mode = #tpu.pipeline_mode<synchronous>, transform_indices = @transform_7, window_bounds = array<i64: 16, 1>}, {pipeline_mode = #tpu.pipeline_mode<synchronous>, transform_indices = @transform_8, window_bounds = array<i64: 16, 288>}, {pipeline_mode = #tpu.pipeline_mode<synchronous>, transform_indices = @transform_9, window_bounds = array<i64: 16, 1>}, {pipeline_mode = #tpu.pipeline_mode<synchronous>, transform_indices = @transform_10, window_bounds = array<i64: 16, 432>}, {pipeline_mode = #tpu.pipeline_mode<synchronous>, transform_indices = @transform_11, window_bounds = array<i64: 16, 1>}, {transform_indices = @transform_12, window_bounds = array<i64: 1, 64, 512>}]} {
    %c0 = arith.constant 0 : index
    %c0_0 = arith.constant 0 : index
    %c0_1 = arith.constant 0 : index
    %0 = vector.load %arg2[%c0, %c0_0, %c0_1] : memref<1x16x512xbf16, #tpu.memory_space<vmem>>, vector<1x16x512xbf16>
    %1 = vector.shape_cast %0 : vector<1x16x512xbf16> to vector<16x512xbf16>
    %2 = arith.extf %1 : vector<16x512xbf16> to vector<16x512xf32>
    %c17_i32 = arith.constant 17 : i32
    %3 = tpu.dynamic_rotate %2 by %c17_i32 dim 1 : vector<16x512xf32>, i32 -> vector<16x512xf32>
    %c0_2 = arith.constant 0 : index
    %c0_3 = arith.constant 0 : index
    %4 = vector.load %arg1[%c0_2, %c0_3] : memref<9x512xf32, #tpu.memory_space<vmem>>, vector<1x512xf32>
    %5 = vector.broadcast %4 : vector<1x512xf32> to vector<16x512xf32>
    %6 = arith.mulf %3, %5 : vector<16x512xf32>
    %7 = arith.truncf %6 : vector<16x512xf32> to vector<16x512xbf16>
    %c0_4 = arith.constant 0 : index
    %c0_5 = arith.constant 0 : index
    %8 = vector.load %arg14[%c0_4, %c0_5] : memref<432x512xbf16, #tpu.memory_space<vmem>>, vector<16x512xbf16>
    tpu.vector_store %arg14[%c0_4, %c0_5], %7 {strides = array<i32>} : memref<432x512xbf16, #tpu.memory_space<vmem>>, vector<16x512xbf16>,
    %c16_i32 = arith.constant 16 : i32
    %9 = tpu.dynamic_rotate %2 by %c16_i32 dim 1 : vector<16x512xf32>, i32 -> vector<16x512xf32>
    %c1 = arith.constant 1 : index
    %c0_6 = arith.constant 0 : index
    %10 = vector.load %arg1[%c1, %c0_6] : memref<9x512xf32, #tpu.memory_space<vmem>>, vector<1x512xf32>
    %11 = vector.broadcast %10 : vector<1x512xf32> to vector<16x512xf32>
    %12 = arith.mulf %9, %11 : vector<16x512xf32>
    %13 = arith.truncf %12 : vector<16x512xf32> to vector<16x512xbf16>
    %c16 = arith.constant 16 : index
    %c0_7 = arith.constant 0 : index
    %14 = vector.load %arg14[%c16, %c0_7] : memref<432x512xbf16, #tpu.memory_space<vmem>>, vector<16x512xbf16>
    tpu.vector_store %arg14[%c16, %c0_7], %13 {strides = array<i32>} : memref<432x512xbf16, #tpu.memory_space<vmem>>, vector<16x512xbf16>,
    %c15_i32 = arith.constant 15 : i32
    %15 = tpu.dynamic_rotate %2 by %c15_i32 dim 1 : vector<16x512xf32>, i32 -> vector<16x512xf32>
    %c2 = arith.constant 2 : index
    %c0_8 = arith.constant 0 : index
    %16 = vector.load %arg1[%c2, %c0_8] : memref<9x512xf32, #tpu.memory_space<vmem>>, vector<1x512xf32>
    %17 = vector.broadcast %16 : vector<1x512xf32> to vector<16x512xf32>
    %18 = arith.mulf %15, %17 : vector<16x512xf32>
    %19 = arith.truncf %18 : vector<16x512xf32> to vector<16x512xbf16>
    %c32 = arith.constant 32 : index
    %c0_9 = arith.constant 0 : index
    %20 = vector.load %arg14[%c32, %c0_9] : memref<432x512xbf16, #tpu.memory_space<vmem>>, vector<16x512xbf16>
    tpu.vector_store %arg14[%c32, %c0_9], %19 {strides = array<i32>} : memref<432x512xbf16, #tpu.memory_space<vmem>>, vector<16x512xbf16>,
    %c1_i32 = arith.constant 1 : i32
    %21 = tpu.dynamic_rotate %2 by %c1_i32 dim 1 : vector<16x512xf32>, i32 -> vector<16x512xf32>
    %c3 = arith.constant 3 : index
    %c0_10 = arith.constant 0 : index
    %22 = vector.load %arg1[%c3, %c0_10] : memref<9x512xf32, #tpu.memory_space<vmem>>, vector<1x512xf32>
    %23 = vector.broadcast %22 : vector<1x512xf32> to vector<16x512xf32>
    %24 = arith.mulf %21, %23 : vector<16x512xf32>
    %25 = arith.truncf %24 : vector<16x512xf32> to vector<16x512xbf16>
    %c48 = arith.constant 48 : index
    %c0_11 = arith.constant 0 : index
    %26 = vector.load %arg14[%c48, %c0_11] : memref<432x512xbf16, #tpu.memory_space<vmem>>, vector<16x512xbf16>
    tpu.vector_store %arg14[%c48, %c0_11], %25 {strides = array<i32>} : memref<432x512xbf16, #tpu.memory_space<vmem>>, vector<16x512xbf16>,
    %27 = arith.truncf %2 : vector<16x512xf32> to vector<16x512xbf16>
    %c64 = arith.constant 64 : index
    %c0_12 = arith.constant 0 : index
    %28 = vector.load %arg14[%c64, %c0_12] : memref<432x512xbf16, #tpu.memory_space<vmem>>, vector<16x512xbf16>
    tpu.vector_store %arg14[%c64, %c0_12], %27 {strides = array<i32>} : memref<432x512xbf16, #tpu.memory_space<vmem>>, vector<16x512xbf16>,
    %c511_i32 = arith.constant 511 : i32
    %29 = tpu.dynamic_rotate %2 by %c511_i32 dim 1 : vector<16x512xf32>, i32 -> vector<16x512xf32>
    %c5 = arith.constant 5 : index
    %c0_13 = arith.constant 0 : index
    %30 = vector.load %arg1[%c5, %c0_13] : memref<9x512xf32, #tpu.memory_space<vmem>>, vector<1x512xf32>
    %31 = vector.broadcast %30 : vector<1x512xf32> to vector<16x512xf32>
    %32 = arith.mulf %29, %31 : vector<16x512xf32>
    %33 = arith.truncf %32 : vector<16x512xf32> to vector<16x512xbf16>
    %c80 = arith.constant 80 : index
    %c0_14 = arith.constant 0 : index
    %34 = vector.load %arg14[%c80, %c0_14] : memref<432x512xbf16, #tpu.memory_space<vmem>>, vector<16x512xbf16>
    tpu.vector_store %arg14[%c80, %c0_14], %33 {strides = array<i32>} : memref<432x512xbf16, #tpu.memory_space<vmem>>, vector<16x512xbf16>,
    %c497_i32 = arith.constant 497 : i32
    %35 = tpu.dynamic_rotate %2 by %c497_i32 dim 1 : vector<16x512xf32>, i32 -> vector<16x512xf32>
    %c6 = arith.constant 6 : index
    %c0_15 = arith.constant 0 : index
    %36 = vector.load %arg1[%c6, %c0_15] : memref<9x512xf32, #tpu.memory_space<vmem>>, vector<1x512xf32>
    %37 = vector.broadcast %36 : vector<1x512xf32> to vector<16x512xf32>
    %38 = arith.mulf %35, %37 : vector<16x512xf32>
    %39 = arith.truncf %38 : vector<16x512xf32> to vector<16x512xbf16>
    %c96 = arith.constant 96 : index
    %c0_16 = arith.constant 0 : index
    %40 = vector.load %arg14[%c96, %c0_16] : memref<432x512xbf16, #tpu.memory_space<vmem>>, vector<16x512xbf16>
    tpu.vector_store %arg14[%c96, %c0_16], %39 {strides = array<i32>} : memref<432x512xbf16, #tpu.memory_space<vmem>>, vector<16x512xbf16>,
    %c496_i32 = arith.constant 496 : i32
    %41 = tpu.dynamic_rotate %2 by %c496_i32 dim 1 : vector<16x512xf32>, i32 -> vector<16x512xf32>
    %c7 = arith.constant 7 : index
    %c0_17 = arith.constant 0 : index
    %42 = vector.load %arg1[%c7, %c0_17] : memref<9x512xf32, #tpu.memory_space<vmem>>, vector<1x512xf32>
    %43 = vector.broadcast %42 : vector<1x512xf32> to vector<16x512xf32>
    %44 = arith.mulf %41, %43 : vector<16x512xf32>
    %45 = arith.truncf %44 : vector<16x512xf32> to vector<16x512xbf16>
    %c112 = arith.constant 112 : index
    %c0_18 = arith.constant 0 : index
    %46 = vector.load %arg14[%c112, %c0_18] : memref<432x512xbf16, #tpu.memory_space<vmem>>, vector<16x512xbf16>
    tpu.vector_store %arg14[%c112, %c0_18], %45 {strides = array<i32>} : memref<432x512xbf16, #tpu.memory_space<vmem>>, vector<16x512xbf16>,
    %c495_i32 = arith.constant 495 : i32
    %47 = tpu.dynamic_rotate %2 by %c495_i32 dim 1 : vector<16x512xf32>, i32 -> vector<16x512xf32>
    %c8 = arith.constant 8 : index
    %c0_19 = arith.constant 0 : index
    %48 = vector.load %arg1[%c8, %c0_19] : memref<9x512xf32, #tpu.memory_space<vmem>>, vector<1x512xf32>
    %49 = vector.broadcast %48 : vector<1x512xf32> to vector<16x512xf32>
    %50 = arith.mulf %47, %49 : vector<16x512xf32>
    %51 = arith.truncf %50 : vector<16x512xf32> to vector<16x512xbf16>
    %c128 = arith.constant 128 : index
    %c0_20 = arith.constant 0 : index
    %52 = vector.load %arg14[%c128, %c0_20] : memref<432x512xbf16, #tpu.memory_space<vmem>>, vector<16x512xbf16>
    tpu.vector_store %arg14[%c128, %c0_20], %51 {strides = array<i32>} : memref<432x512xbf16, #tpu.memory_space<vmem>>, vector<16x512xbf16>,
    %c0_21 = arith.constant 0 : index
    %c0_22 = arith.constant 0 : index
    %53 = vector.load %arg3[%c0_21, %c0_22] : memref<32x144xbf16, #tpu.memory_space<vmem>>, vector<16x144xbf16>
    %c0_23 = arith.constant 0 : index
    %c0_24 = arith.constant 0 : index
    %54 = vector.load %arg4[%c0_23, %c0_24] : memref<32x1xf32, #tpu.memory_space<vmem>>, vector<16x1xf32>
    %c0_25 = arith.constant 0 : index
    %c0_26 = arith.constant 0 : index
    %55 = vector.load %arg14[%c0_25, %c0_26] : memref<432x512xbf16, #tpu.memory_space<vmem>>, vector<144x512xbf16>
    %cst = arith.constant dense<0.000000e+00> : vector<16x512xf32>
    %56 = tpu.matmul %53, %55, %cst {dimension_numbers = #tpu.dot_dimension_numbers<[1], [0], [0], [1], [0, 0, 1, 1], [], []>} : vector<16x144xbf16>, vector<144x512xbf16>, vector<16x512xf32> -> vector<16x512xf32>
    %57 = vector.broadcast %54 : vector<16x1xf32> to vector<16x512xf32>
    %58 = arith.addf %56, %57 : vector<16x512xf32>
    %cst_27 = arith.constant 0.000000e+00 : f32
    %59 = vector.broadcast %cst_27 : f32 to vector<16x512xf32>
    %60 = arith.maximumf %58, %59 : vector<16x512xf32>
    %c17_i32_28 = arith.constant 17 : i32
    %61 = tpu.dynamic_rotate %60 by %c17_i32_28 dim 1 : vector<16x512xf32>, i32 -> vector<16x512xf32>
    %c0_29 = arith.constant 0 : index
    %c0_30 = arith.constant 0 : index
    %62 = vector.load %arg1[%c0_29, %c0_30] : memref<9x512xf32, #tpu.memory_space<vmem>>, vector<1x512xf32>
    %63 = vector.broadcast %62 : vector<1x512xf32> to vector<16x512xf32>
    %64 = arith.mulf %61, %63 : vector<16x512xf32>
    %65 = arith.truncf %64 : vector<16x512xf32> to vector<16x512xbf16>
    %c144 = arith.constant 144 : index
    %c0_31 = arith.constant 0 : index
    %66 = vector.load %arg14[%c144, %c0_31] : memref<432x512xbf16, #tpu.memory_space<vmem>>, vector<16x512xbf16>
    tpu.vector_store %arg14[%c144, %c0_31], %65 {strides = array<i32>} : memref<432x512xbf16, #tpu.memory_space<vmem>>, vector<16x512xbf16>,
    %c16_i32_32 = arith.constant 16 : i32
    %67 = tpu.dynamic_rotate %60 by %c16_i32_32 dim 1 : vector<16x512xf32>, i32 -> vector<16x512xf32>
    %c1_33 = arith.constant 1 : index
    %c0_34 = arith.constant 0 : index
    %68 = vector.load %arg1[%c1_33, %c0_34] : memref<9x512xf32, #tpu.memory_space<vmem>>, vector<1x512xf32>
    %69 = vector.broadcast %68 : vector<1x512xf32> to vector<16x512xf32>
    %70 = arith.mulf %67, %69 : vector<16x512xf32>
    %71 = arith.truncf %70 : vector<16x512xf32> to vector<16x512xbf16>
    %c160 = arith.constant 160 : index
    %c0_35 = arith.constant 0 : index
    %72 = vector.load %arg14[%c160, %c0_35] : memref<432x512xbf16, #tpu.memory_space<vmem>>, vector<16x512xbf16>
    tpu.vector_store %arg14[%c160, %c0_35], %71 {strides = array<i32>} : memref<432x512xbf16, #tpu.memory_space<vmem>>, vector<16x512xbf16>,
    %c15_i32_36 = arith.constant 15 : i32
    %73 = tpu.dynamic_rotate %60 by %c15_i32_36 dim 1 : vector<16x512xf32>, i32 -> vector<16x512xf32>
    %c2_37 = arith.constant 2 : index
    %c0_38 = arith.constant 0 : index
    %74 = vector.load %arg1[%c2_37, %c0_38] : memref<9x512xf32, #tpu.memory_space<vmem>>, vector<1x512xf32>
    %75 = vector.broadcast %74 : vector<1x512xf32> to vector<16x512xf32>
    %76 = arith.mulf %73, %75 : vector<16x512xf32>
    %77 = arith.truncf %76 : vector<16x512xf32> to vector<16x512xbf16>
    %c176 = arith.constant 176 : index
    %c0_39 = arith.constant 0 : index
    %78 = vector.load %arg14[%c176, %c0_39] : memref<432x512xbf16, #tpu.memory_space<vmem>>, vector<16x512xbf16>
    tpu.vector_store %arg14[%c176, %c0_39], %77 {strides = array<i32>} : memref<432x512xbf16, #tpu.memory_space<vmem>>, vector<16x512xbf16>,
    %c1_i32_40 = arith.constant 1 : i32
    %79 = tpu.dynamic_rotate %60 by %c1_i32_40 dim 1 : vector<16x512xf32>, i32 -> vector<16x512xf32>
    %c3_41 = arith.constant 3 : index
    %c0_42 = arith.constant 0 : index
    %80 = vector.load %arg1[%c3_41, %c0_42] : memref<9x512xf32, #tpu.memory_space<vmem>>, vector<1x512xf32>
    %81 = vector.broadcast %80 : vector<1x512xf32> to vector<16x512xf32>
    %82 = arith.mulf %79, %81 : vector<16x512xf32>
    %83 = arith.truncf %82 : vector<16x512xf32> to vector<16x512xbf16>
    %c192 = arith.constant 192 : index
    %c0_43 = arith.constant 0 : index
    %84 = vector.load %arg14[%c192, %c0_43] : memref<432x512xbf16, #tpu.memory_space<vmem>>, vector<16x512xbf16>
    tpu.vector_store %arg14[%c192, %c0_43], %83 {strides = array<i32>} : memref<432x512xbf16, #tpu.memory_space<vmem>>, vector<16x512xbf16>,
    %85 = arith.truncf %60 : vector<16x512xf32> to vector<16x512xbf16>
    %c208 = arith.constant 208 : index
    %c0_44 = arith.constant 0 : index
    %86 = vector.load %arg14[%c208, %c0_44] : memref<432x512xbf16, #tpu.memory_space<vmem>>, vector<16x512xbf16>
    tpu.vector_store %arg14[%c208, %c0_44], %85 {strides = array<i32>} : memref<432x512xbf16, #tpu.memory_space<vmem>>, vector<16x512xbf16>,
    %c511_i32_45 = arith.constant 511 : i32
    %87 = tpu.dynamic_rotate %60 by %c511_i32_45 dim 1 : vector<16x512xf32>, i32 -> vector<16x512xf32>
    %c5_46 = arith.constant 5 : index
    %c0_47 = arith.constant 0 : index
    %88 = vector.load %arg1[%c5_46, %c0_47] : memref<9x512xf32, #tpu.memory_space<vmem>>, vector<1x512xf32>
    %89 = vector.broadcast %88 : vector<1x512xf32> to vector<16x512xf32>
    %90 = arith.mulf %87, %89 : vector<16x512xf32>
    %91 = arith.truncf %90 : vector<16x512xf32> to vector<16x512xbf16>
    %c224 = arith.constant 224 : index
    %c0_48 = arith.constant 0 : index
    %92 = vector.load %arg14[%c224, %c0_48] : memref<432x512xbf16, #tpu.memory_space<vmem>>, vector<16x512xbf16>
    tpu.vector_store %arg14[%c224, %c0_48], %91 {strides = array<i32>} : memref<432x512xbf16, #tpu.memory_space<vmem>>, vector<16x512xbf16>,
    %c497_i32_49 = arith.constant 497 : i32
    %93 = tpu.dynamic_rotate %60 by %c497_i32_49 dim 1 : vector<16x512xf32>, i32 -> vector<16x512xf32>
    %c6_50 = arith.constant 6 : index
    %c0_51 = arith.constant 0 : index
    %94 = vector.load %arg1[%c6_50, %c0_51] : memref<9x512xf32, #tpu.memory_space<vmem>>, vector<1x512xf32>
    %95 = vector.broadcast %94 : vector<1x512xf32> to vector<16x512xf32>
    %96 = arith.mulf %93, %95 : vector<16x512xf32>
    %97 = arith.truncf %96 : vector<16x512xf32> to vector<16x512xbf16>
    %c240 = arith.constant 240 : index
    %c0_52 = arith.constant 0 : index
    %98 = vector.load %arg14[%c240, %c0_52] : memref<432x512xbf16, #tpu.memory_space<vmem>>, vector<16x512xbf16>
    tpu.vector_store %arg14[%c240, %c0_52], %97 {strides = array<i32>} : memref<432x512xbf16, #tpu.memory_space<vmem>>, vector<16x512xbf16>,
    %c496_i32_53 = arith.constant 496 : i32
    %99 = tpu.dynamic_rotate %60 by %c496_i32_53 dim 1 : vector<16x512xf32>, i32 -> vector<16x512xf32>
    %c7_54 = arith.constant 7 : index
    %c0_55 = arith.constant 0 : index
    %100 = vector.load %arg1[%c7_54, %c0_55] : memref<9x512xf32, #tpu.memory_space<vmem>>, vector<1x512xf32>
    %101 = vector.broadcast %100 : vector<1x512xf32> to vector<16x512xf32>
    %102 = arith.mulf %99, %101 : vector<16x512xf32>
    %103 = arith.truncf %102 : vector<16x512xf32> to vector<16x512xbf16>
    %c256 = arith.constant 256 : index
    %c0_56 = arith.constant 0 : index
    %104 = vector.load %arg14[%c256, %c0_56] : memref<432x512xbf16, #tpu.memory_space<vmem>>, vector<16x512xbf16>
    tpu.vector_store %arg14[%c256, %c0_56], %103 {strides = array<i32>} : memref<432x512xbf16, #tpu.memory_space<vmem>>, vector<16x512xbf16>,
    %c495_i32_57 = arith.constant 495 : i32
    %105 = tpu.dynamic_rotate %60 by %c495_i32_57 dim 1 : vector<16x512xf32>, i32 -> vector<16x512xf32>
    %c8_58 = arith.constant 8 : index
    %c0_59 = arith.constant 0 : index
    %106 = vector.load %arg1[%c8_58, %c0_59] : memref<9x512xf32, #tpu.memory_space<vmem>>, vector<1x512xf32>
    %107 = vector.broadcast %106 : vector<1x512xf32> to vector<16x512xf32>
    %108 = arith.mulf %105, %107 : vector<16x512xf32>
    %109 = arith.truncf %108 : vector<16x512xf32> to vector<16x512xbf16>
    %c272 = arith.constant 272 : index
    %c0_60 = arith.constant 0 : index
    %110 = vector.load %arg14[%c272, %c0_60] : memref<432x512xbf16, #tpu.memory_space<vmem>>, vector<16x512xbf16>
    tpu.vector_store %arg14[%c272, %c0_60], %109 {strides = array<i32>} : memref<432x512xbf16, #tpu.memory_space<vmem>>, vector<16x512xbf16>,
    %c16_61 = arith.constant 16 : index
    %c0_62 = arith.constant 0 : index
    %111 = vector.load %arg3[%c16_61, %c0_62] : memref<32x144xbf16, #tpu.memory_space<vmem>>, vector<16x144xbf16>
    %c16_63 = arith.constant 16 : index
    %c0_64 = arith.constant 0 : index
    %112 = vector.load %arg4[%c16_63, %c0_64] : memref<32x1xf32, #tpu.memory_space<vmem>>, vector<16x1xf32>
    %c0_65 = arith.constant 0 : index
    %c0_66 = arith.constant 0 : index
    %113 = vector.load %arg14[%c0_65, %c0_66] : memref<432x512xbf16, #tpu.memory_space<vmem>>, vector<144x512xbf16>
    %cst_67 = arith.constant dense<0.000000e+00> : vector<16x512xf32>
    %114 = tpu.matmul %111, %113, %cst_67 {dimension_numbers = #tpu.dot_dimension_numbers<[1], [0], [0], [1], [0, 0, 1, 1], [], []>} : vector<16x144xbf16>, vector<144x512xbf16>, vector<16x512xf32> -> vector<16x512xf32>
    %115 = vector.broadcast %112 : vector<16x1xf32> to vector<16x512xf32>
    %116 = arith.addf %114, %115 : vector<16x512xf32>
    %cst_68 = arith.constant 0.000000e+00 : f32
    %117 = vector.broadcast %cst_68 : f32 to vector<16x512xf32>
    %118 = arith.maximumf %116, %117 : vector<16x512xf32>
    %c17_i32_69 = arith.constant 17 : i32
    %119 = tpu.dynamic_rotate %118 by %c17_i32_69 dim 1 : vector<16x512xf32>, i32 -> vector<16x512xf32>
    %c0_70 = arith.constant 0 : index
    %c0_71 = arith.constant 0 : index
    %120 = vector.load %arg1[%c0_70, %c0_71] : memref<9x512xf32, #tpu.memory_space<vmem>>, vector<1x512xf32>
    %121 = vector.broadcast %120 : vector<1x512xf32> to vector<16x512xf32>
    %122 = arith.mulf %119, %121 : vector<16x512xf32>
    %123 = arith.truncf %122 : vector<16x512xf32> to vector<16x512xbf16>
    %c288 = arith.constant 288 : index
    %c0_72 = arith.constant 0 : index
    %124 = vector.load %arg14[%c288, %c0_72] : memref<432x512xbf16, #tpu.memory_space<vmem>>, vector<16x512xbf16>
    tpu.vector_store %arg14[%c288, %c0_72], %123 {strides = array<i32>} : memref<432x512xbf16, #tpu.memory_space<vmem>>, vector<16x512xbf16>,
    %c16_i32_73 = arith.constant 16 : i32
    %125 = tpu.dynamic_rotate %118 by %c16_i32_73 dim 1 : vector<16x512xf32>, i32 -> vector<16x512xf32>
    %c1_74 = arith.constant 1 : index
    %c0_75 = arith.constant 0 : index
    %126 = vector.load %arg1[%c1_74, %c0_75] : memref<9x512xf32, #tpu.memory_space<vmem>>, vector<1x512xf32>
    %127 = vector.broadcast %126 : vector<1x512xf32> to vector<16x512xf32>
    %128 = arith.mulf %125, %127 : vector<16x512xf32>
    %129 = arith.truncf %128 : vector<16x512xf32> to vector<16x512xbf16>
    %c304 = arith.constant 304 : index
    %c0_76 = arith.constant 0 : index
    %130 = vector.load %arg14[%c304, %c0_76] : memref<432x512xbf16, #tpu.memory_space<vmem>>, vector<16x512xbf16>
    tpu.vector_store %arg14[%c304, %c0_76], %129 {strides = array<i32>} : memref<432x512xbf16, #tpu.memory_space<vmem>>, vector<16x512xbf16>,
    %c15_i32_77 = arith.constant 15 : i32
    %131 = tpu.dynamic_rotate %118 by %c15_i32_77 dim 1 : vector<16x512xf32>, i32 -> vector<16x512xf32>
    %c2_78 = arith.constant 2 : index
    %c0_79 = arith.constant 0 : index
    %132 = vector.load %arg1[%c2_78, %c0_79] : memref<9x512xf32, #tpu.memory_space<vmem>>, vector<1x512xf32>
    %133 = vector.broadcast %132 : vector<1x512xf32> to vector<16x512xf32>
    %134 = arith.mulf %131, %133 : vector<16x512xf32>
    %135 = arith.truncf %134 : vector<16x512xf32> to vector<16x512xbf16>
    %c320 = arith.constant 320 : index
    %c0_80 = arith.constant 0 : index
    %136 = vector.load %arg14[%c320, %c0_80] : memref<432x512xbf16, #tpu.memory_space<vmem>>, vector<16x512xbf16>
    tpu.vector_store %arg14[%c320, %c0_80], %135 {strides = array<i32>} : memref<432x512xbf16, #tpu.memory_space<vmem>>, vector<16x512xbf16>,
    %c1_i32_81 = arith.constant 1 : i32
    %137 = tpu.dynamic_rotate %118 by %c1_i32_81 dim 1 : vector<16x512xf32>, i32 -> vector<16x512xf32>
    %c3_82 = arith.constant 3 : index
    %c0_83 = arith.constant 0 : index
    %138 = vector.load %arg1[%c3_82, %c0_83] : memref<9x512xf32, #tpu.memory_space<vmem>>, vector<1x512xf32>
    %139 = vector.broadcast %138 : vector<1x512xf32> to vector<16x512xf32>
    %140 = arith.mulf %137, %139 : vector<16x512xf32>
    %141 = arith.truncf %140 : vector<16x512xf32> to vector<16x512xbf16>
    %c336 = arith.constant 336 : index
    %c0_84 = arith.constant 0 : index
    %142 = vector.load %arg14[%c336, %c0_84] : memref<432x512xbf16, #tpu.memory_space<vmem>>, vector<16x512xbf16>
    tpu.vector_store %arg14[%c336, %c0_84], %141 {strides = array<i32>} : memref<432x512xbf16, #tpu.memory_space<vmem>>, vector<16x512xbf16>,
    %143 = arith.truncf %118 : vector<16x512xf32> to vector<16x512xbf16>
    %c352 = arith.constant 352 : index
    %c0_85 = arith.constant 0 : index
    %144 = vector.load %arg14[%c352, %c0_85] : memref<432x512xbf16, #tpu.memory_space<vmem>>, vector<16x512xbf16>
    tpu.vector_store %arg14[%c352, %c0_85], %143 {strides = array<i32>} : memref<432x512xbf16, #tpu.memory_space<vmem>>, vector<16x512xbf16>,
    %c511_i32_86 = arith.constant 511 : i32
    %145 = tpu.dynamic_rotate %118 by %c511_i32_86 dim 1 : vector<16x512xf32>, i32 -> vector<16x512xf32>
    %c5_87 = arith.constant 5 : index
    %c0_88 = arith.constant 0 : index
    %146 = vector.load %arg1[%c5_87, %c0_88] : memref<9x512xf32, #tpu.memory_space<vmem>>, vector<1x512xf32>
    %147 = vector.broadcast %146 : vector<1x512xf32> to vector<16x512xf32>
    %148 = arith.mulf %145, %147 : vector<16x512xf32>
    %149 = arith.truncf %148 : vector<16x512xf32> to vector<16x512xbf16>
    %c368 = arith.constant 368 : index
    %c0_89 = arith.constant 0 : index
    %150 = vector.load %arg14[%c368, %c0_89] : memref<432x512xbf16, #tpu.memory_space<vmem>>, vector<16x512xbf16>
    tpu.vector_store %arg14[%c368, %c0_89], %149 {strides = array<i32>} : memref<432x512xbf16, #tpu.memory_space<vmem>>, vector<16x512xbf16>,
    %c497_i32_90 = arith.constant 497 : i32
    %151 = tpu.dynamic_rotate %118 by %c497_i32_90 dim 1 : vector<16x512xf32>, i32 -> vector<16x512xf32>
    %c6_91 = arith.constant 6 : index
    %c0_92 = arith.constant 0 : index
    %152 = vector.load %arg1[%c6_91, %c0_92] : memref<9x512xf32, #tpu.memory_space<vmem>>, vector<1x512xf32>
    %153 = vector.broadcast %152 : vector<1x512xf32> to vector<16x512xf32>
    %154 = arith.mulf %151, %153 : vector<16x512xf32>
    %155 = arith.truncf %154 : vector<16x512xf32> to vector<16x512xbf16>
    %c384 = arith.constant 384 : index
    %c0_93 = arith.constant 0 : index
    %156 = vector.load %arg14[%c384, %c0_93] : memref<432x512xbf16, #tpu.memory_space<vmem>>, vector<16x512xbf16>
    tpu.vector_store %arg14[%c384, %c0_93], %155 {strides = array<i32>} : memref<432x512xbf16, #tpu.memory_space<vmem>>, vector<16x512xbf16>,
    %c496_i32_94 = arith.constant 496 : i32
    %157 = tpu.dynamic_rotate %118 by %c496_i32_94 dim 1 : vector<16x512xf32>, i32 -> vector<16x512xf32>
    %c7_95 = arith.constant 7 : index
    %c0_96 = arith.constant 0 : index
    %158 = vector.load %arg1[%c7_95, %c0_96] : memref<9x512xf32, #tpu.memory_space<vmem>>, vector<1x512xf32>
    %159 = vector.broadcast %158 : vector<1x512xf32> to vector<16x512xf32>
    %160 = arith.mulf %157, %159 : vector<16x512xf32>
    %161 = arith.truncf %160 : vector<16x512xf32> to vector<16x512xbf16>
    %c400 = arith.constant 400 : index
    %c0_97 = arith.constant 0 : index
    %162 = vector.load %arg14[%c400, %c0_97] : memref<432x512xbf16, #tpu.memory_space<vmem>>, vector<16x512xbf16>
    tpu.vector_store %arg14[%c400, %c0_97], %161 {strides = array<i32>} : memref<432x512xbf16, #tpu.memory_space<vmem>>, vector<16x512xbf16>,
    %c495_i32_98 = arith.constant 495 : i32
    %163 = tpu.dynamic_rotate %118 by %c495_i32_98 dim 1 : vector<16x512xf32>, i32 -> vector<16x512xf32>
    %c8_99 = arith.constant 8 : index
    %c0_100 = arith.constant 0 : index
    %164 = vector.load %arg1[%c8_99, %c0_100] : memref<9x512xf32, #tpu.memory_space<vmem>>, vector<1x512xf32>
    %165 = vector.broadcast %164 : vector<1x512xf32> to vector<16x512xf32>
    %166 = arith.mulf %163, %165 : vector<16x512xf32>
    %167 = arith.truncf %166 : vector<16x512xf32> to vector<16x512xbf16>
    %c416 = arith.constant 416 : index
    %c0_101 = arith.constant 0 : index
    %168 = vector.load %arg14[%c416, %c0_101] : memref<432x512xbf16, #tpu.memory_space<vmem>>, vector<16x512xbf16>
    tpu.vector_store %arg14[%c416, %c0_101], %167 {strides = array<i32>} : memref<432x512xbf16, #tpu.memory_space<vmem>>, vector<16x512xbf16>,
    %c0_102 = arith.constant 0 : index
    %c0_103 = arith.constant 0 : index
    %169 = vector.load %arg5[%c0_102, %c0_103] : memref<16x288xbf16, #tpu.memory_space<vmem>>, vector<16x288xbf16>
    %c0_104 = arith.constant 0 : index
    %c0_105 = arith.constant 0 : index
    %170 = vector.load %arg6[%c0_104, %c0_105] : memref<16x1xf32, #tpu.memory_space<vmem>>, vector<16x1xf32>
    %c144_106 = arith.constant 144 : index
    %c0_107 = arith.constant 0 : index
    %171 = vector.load %arg14[%c144_106, %c0_107] : memref<432x512xbf16, #tpu.memory_space<vmem>>, vector<288x512xbf16>
    %cst_108 = arith.constant dense<0.000000e+00> : vector<16x512xf32>
    %172 = tpu.matmul %169, %171, %cst_108 {dimension_numbers = #tpu.dot_dimension_numbers<[1], [0], [0], [1], [0, 0, 1, 1], [], []>} : vector<16x288xbf16>, vector<288x512xbf16>, vector<16x512xf32> -> vector<16x512xf32>
    %173 = vector.broadcast %170 : vector<16x1xf32> to vector<16x512xf32>
    %174 = arith.addf %172, %173 : vector<16x512xf32>
    %c0_109 = arith.constant 0 : index
    %c0_110 = arith.constant 0 : index
    %c0_111 = arith.constant 0 : index
    %175 = vector.load %arg13[%c0_109, %c0_110, %c0_111] : memref<1x64x512xf32, #tpu.memory_space<vmem>>, vector<1x16x512xf32>
    %176 = vector.shape_cast %175 : vector<1x16x512xf32> to vector<16x512xf32>
    %177 = vector.shape_cast %174 : vector<16x512xf32> to vector<1x16x512xf32>
    tpu.vector_store %arg13[%c0_109, %c0_110, %c0_111], %177 {strides = array<i32>} : memref<1x64x512xf32, #tpu.memory_space<vmem>>, vector<1x16x512xf32>,
    %c17_i32_112 = arith.constant 17 : i32
    %178 = tpu.dynamic_rotate %174 by %c17_i32_112 dim 1 : vector<16x512xf32>, i32 -> vector<16x512xf32>
    %c0_113 = arith.constant 0 : index
    %c0_114 = arith.constant 0 : index
    %179 = vector.load %arg1[%c0_113, %c0_114] : memref<9x512xf32, #tpu.memory_space<vmem>>, vector<1x512xf32>
    %180 = vector.broadcast %179 : vector<1x512xf32> to vector<16x512xf32>
    %181 = arith.mulf %178, %180 : vector<16x512xf32>
    %182 = arith.truncf %181 : vector<16x512xf32> to vector<16x512xbf16>
    %c0_115 = arith.constant 0 : index
    %c0_116 = arith.constant 0 : index
    %183 = vector.load %arg14[%c0_115, %c0_116] : memref<432x512xbf16, #tpu.memory_space<vmem>>, vector<16x512xbf16>
    tpu.vector_store %arg14[%c0_115, %c0_116], %182 {strides = array<i32>} : memref<432x512xbf16, #tpu.memory_space<vmem>>, vector<16x512xbf16>,
    %c16_i32_117 = arith.constant 16 : i32
    %184 = tpu.dynamic_rotate %174 by %c16_i32_117 dim 1 : vector<16x512xf32>, i32 -> vector<16x512xf32>
    %c1_118 = arith.constant 1 : index
    %c0_119 = arith.constant 0 : index
    %185 = vector.load %arg1[%c1_118, %c0_119] : memref<9x512xf32, #tpu.memory_space<vmem>>, vector<1x512xf32>
    %186 = vector.broadcast %185 : vector<1x512xf32> to vector<16x512xf32>
    %187 = arith.mulf %184, %186 : vector<16x512xf32>
    %188 = arith.truncf %187 : vector<16x512xf32> to vector<16x512xbf16>
    %c16_120 = arith.constant 16 : index
    %c0_121 = arith.constant 0 : index
    %189 = vector.load %arg14[%c16_120, %c0_121] : memref<432x512xbf16, #tpu.memory_space<vmem>>, vector<16x512xbf16>
    tpu.vector_store %arg14[%c16_120, %c0_121], %188 {strides = array<i32>} : memref<432x512xbf16, #tpu.memory_space<vmem>>, vector<16x512xbf16>,
    %c15_i32_122 = arith.constant 15 : i32
    %190 = tpu.dynamic_rotate %174 by %c15_i32_122 dim 1 : vector<16x512xf32>, i32 -> vector<16x512xf32>
    %c2_123 = arith.constant 2 : index
    %c0_124 = arith.constant 0 : index
    %191 = vector.load %arg1[%c2_123, %c0_124] : memref<9x512xf32, #tpu.memory_space<vmem>>, vector<1x512xf32>
    %192 = vector.broadcast %191 : vector<1x512xf32> to vector<16x512xf32>
    %193 = arith.mulf %190, %192 : vector<16x512xf32>
    %194 = arith.truncf %193 : vector<16x512xf32> to vector<16x512xbf16>
    %c32_125 = arith.constant 32 : index
    %c0_126 = arith.constant 0 : index
    %195 = vector.load %arg14[%c32_125, %c0_126] : memref<432x512xbf16, #tpu.memory_space<vmem>>, vector<16x512xbf16>
    tpu.vector_store %arg14[%c32_125, %c0_126], %194 {strides = array<i32>} : memref<432x512xbf16, #tpu.memory_space<vmem>>, vector<16x512xbf16>,
    %c1_i32_127 = arith.constant 1 : i32
    %196 = tpu.dynamic_rotate %174 by %c1_i32_127 dim 1 : vector<16x512xf32>, i32 -> vector<16x512xf32>
    %c3_128 = arith.constant 3 : index
    %c0_129 = arith.constant 0 : index
    %197 = vector.load %arg1[%c3_128, %c0_129] : memref<9x512xf32, #tpu.memory_space<vmem>>, vector<1x512xf32>
    %198 = vector.broadcast %197 : vector<1x512xf32> to vector<16x512xf32>
    %199 = arith.mulf %196, %198 : vector<16x512xf32>
    %200 = arith.truncf %199 : vector<16x512xf32> to vector<16x512xbf16>
    %c48_130 = arith.constant 48 : index
    %c0_131 = arith.constant 0 : index
    %201 = vector.load %arg14[%c48_130, %c0_131] : memref<432x512xbf16, #tpu.memory_space<vmem>>, vector<16x512xbf16>
    tpu.vector_store %arg14[%c48_130, %c0_131], %200 {strides = array<i32>} : memref<432x512xbf16, #tpu.memory_space<vmem>>, vector<16x512xbf16>,
    %202 = arith.truncf %174 : vector<16x512xf32> to vector<16x512xbf16>
    %c64_132 = arith.constant 64 : index
    %c0_133 = arith.constant 0 : index
    %203 = vector.load %arg14[%c64_132, %c0_133] : memref<432x512xbf16, #tpu.memory_space<vmem>>, vector<16x512xbf16>
    tpu.vector_store %arg14[%c64_132, %c0_133], %202 {strides = array<i32>} : memref<432x512xbf16, #tpu.memory_space<vmem>>, vector<16x512xbf16>,
    %c511_i32_134 = arith.constant 511 : i32
    %204 = tpu.dynamic_rotate %174 by %c511_i32_134 dim 1 : vector<16x512xf32>, i32 -> vector<16x512xf32>
    %c5_135 = arith.constant 5 : index
    %c0_136 = arith.constant 0 : index
    %205 = vector.load %arg1[%c5_135, %c0_136] : memref<9x512xf32, #tpu.memory_space<vmem>>, vector<1x512xf32>
    %206 = vector.broadcast %205 : vector<1x512xf32> to vector<16x512xf32>
    %207 = arith.mulf %204, %206 : vector<16x512xf32>
    %208 = arith.truncf %207 : vector<16x512xf32> to vector<16x512xbf16>
    %c80_137 = arith.constant 80 : index
    %c0_138 = arith.constant 0 : index
    %209 = vector.load %arg14[%c80_137, %c0_138] : memref<432x512xbf16, #tpu.memory_space<vmem>>, vector<16x512xbf16>
    tpu.vector_store %arg14[%c80_137, %c0_138], %208 {strides = array<i32>} : memref<432x512xbf16, #tpu.memory_space<vmem>>, vector<16x512xbf16>,
    %c497_i32_139 = arith.constant 497 : i32
    %210 = tpu.dynamic_rotate %174 by %c497_i32_139 dim 1 : vector<16x512xf32>, i32 -> vector<16x512xf32>
    %c6_140 = arith.constant 6 : index
    %c0_141 = arith.constant 0 : index
    %211 = vector.load %arg1[%c6_140, %c0_141] : memref<9x512xf32, #tpu.memory_space<vmem>>, vector<1x512xf32>
    %212 = vector.broadcast %211 : vector<1x512xf32> to vector<16x512xf32>
    %213 = arith.mulf %210, %212 : vector<16x512xf32>
    %214 = arith.truncf %213 : vector<16x512xf32> to vector<16x512xbf16>
    %c96_142 = arith.constant 96 : index
    %c0_143 = arith.constant 0 : index
    %215 = vector.load %arg14[%c96_142, %c0_143] : memref<432x512xbf16, #tpu.memory_space<vmem>>, vector<16x512xbf16>
    tpu.vector_store %arg14[%c96_142, %c0_143], %214 {strides = array<i32>} : memref<432x512xbf16, #tpu.memory_space<vmem>>, vector<16x512xbf16>,
    %c496_i32_144 = arith.constant 496 : i32
    %216 = tpu.dynamic_rotate %174 by %c496_i32_144 dim 1 : vector<16x512xf32>, i32 -> vector<16x512xf32>
    %c7_145 = arith.constant 7 : index
    %c0_146 = arith.constant 0 : index
    %217 = vector.load %arg1[%c7_145, %c0_146] : memref<9x512xf32, #tpu.memory_space<vmem>>, vector<1x512xf32>
    %218 = vector.broadcast %217 : vector<1x512xf32> to vector<16x512xf32>
    %219 = arith.mulf %216, %218 : vector<16x512xf32>
    %220 = arith.truncf %219 : vector<16x512xf32> to vector<16x512xbf16>
    %c112_147 = arith.constant 112 : index
    %c0_148 = arith.constant 0 : index
    %221 = vector.load %arg14[%c112_147, %c0_148] : memref<432x512xbf16, #tpu.memory_space<vmem>>, vector<16x512xbf16>
    tpu.vector_store %arg14[%c112_147, %c0_148], %220 {strides = array<i32>} : memref<432x512xbf16, #tpu.memory_space<vmem>>, vector<16x512xbf16>,
    %c495_i32_149 = arith.constant 495 : i32
    %222 = tpu.dynamic_rotate %174 by %c495_i32_149 dim 1 : vector<16x512xf32>, i32 -> vector<16x512xf32>
    %c8_150 = arith.constant 8 : index
    %c0_151 = arith.constant 0 : index
    %223 = vector.load %arg1[%c8_150, %c0_151] : memref<9x512xf32, #tpu.memory_space<vmem>>, vector<1x512xf32>
    %224 = vector.broadcast %223 : vector<1x512xf32> to vector<16x512xf32>
    %225 = arith.mulf %222, %224 : vector<16x512xf32>
    %226 = arith.truncf %225 : vector<16x512xf32> to vector<16x512xbf16>
    %c128_152 = arith.constant 128 : index
    %c0_153 = arith.constant 0 : index
    %227 = vector.load %arg14[%c128_152, %c0_153] : memref<432x512xbf16, #tpu.memory_space<vmem>>, vector<16x512xbf16>
    tpu.vector_store %arg14[%c128_152, %c0_153], %226 {strides = array<i32>} : memref<432x512xbf16, #tpu.memory_space<vmem>>, vector<16x512xbf16>,
    %c0_154 = arith.constant 0 : index
    %c0_155 = arith.constant 0 : index
    %228 = vector.load %arg7[%c0_154, %c0_155] : memref<16x144xbf16, #tpu.memory_space<vmem>>, vector<16x144xbf16>
    %c0_156 = arith.constant 0 : index
    %c0_157 = arith.constant 0 : index
    %229 = vector.load %arg8[%c0_156, %c0_157] : memref<16x1xf32, #tpu.memory_space<vmem>>, vector<16x1xf32>
    %c0_158 = arith.constant 0 : index
    %c0_159 = arith.constant 0 : index
    %230 = vector.load %arg14[%c0_158, %c0_159] : memref<432x512xbf16, #tpu.memory_space<vmem>>, vector<144x512xbf16>
    %cst_160 = arith.constant dense<0.000000e+00> : vector<16x512xf32>
    %231 = tpu.matmul %228, %230, %cst_160 {dimension_numbers = #tpu.dot_dimension_numbers<[1], [0], [0], [1], [0, 0, 1, 1], [], []>} : vector<16x144xbf16>, vector<144x512xbf16>, vector<16x512xf32> -> vector<16x512xf32>
    %232 = vector.broadcast %229 : vector<16x1xf32> to vector<16x512xf32>
    %233 = arith.addf %231, %232 : vector<16x512xf32>
    %cst_161 = arith.constant 0.000000e+00 : f32
    %234 = vector.broadcast %cst_161 : f32 to vector<16x512xf32>
    %235 = arith.maximumf %233, %234 : vector<16x512xf32>
    %c0_162 = arith.constant 0 : index
    %c16_163 = arith.constant 16 : index
    %c0_164 = arith.constant 0 : index
    %236 = vector.load %arg13[%c0_162, %c16_163, %c0_164] : memref<1x64x512xf32, #tpu.memory_space<vmem>>, vector<1x16x512xf32>
    %237 = vector.shape_cast %236 : vector<1x16x512xf32> to vector<16x512xf32>
    %238 = vector.shape_cast %235 : vector<16x512xf32> to vector<1x16x512xf32>
    tpu.vector_store %arg13[%c0_162, %c16_163, %c0_164], %238 {strides = array<i32>} : memref<1x64x512xf32, #tpu.memory_space<vmem>>, vector<1x16x512xf32>,
    %c17_i32_165 = arith.constant 17 : i32
    %239 = tpu.dynamic_rotate %235 by %c17_i32_165 dim 1 : vector<16x512xf32>, i32 -> vector<16x512xf32>
    %c0_166 = arith.constant 0 : index
    %c0_167 = arith.constant 0 : index
    %240 = vector.load %arg1[%c0_166, %c0_167] : memref<9x512xf32, #tpu.memory_space<vmem>>, vector<1x512xf32>
    %241 = vector.broadcast %240 : vector<1x512xf32> to vector<16x512xf32>
    %242 = arith.mulf %239, %241 : vector<16x512xf32>
    %243 = arith.truncf %242 : vector<16x512xf32> to vector<16x512xbf16>
    %c144_168 = arith.constant 144 : index
    %c0_169 = arith.constant 0 : index
    %244 = vector.load %arg14[%c144_168, %c0_169] : memref<432x512xbf16, #tpu.memory_space<vmem>>, vector<16x512xbf16>
    tpu.vector_store %arg14[%c144_168, %c0_169], %243 {strides = array<i32>} : memref<432x512xbf16, #tpu.memory_space<vmem>>, vector<16x512xbf16>,
    %c16_i32_170 = arith.constant 16 : i32
    %245 = tpu.dynamic_rotate %235 by %c16_i32_170 dim 1 : vector<16x512xf32>, i32 -> vector<16x512xf32>
    %c1_171 = arith.constant 1 : index
    %c0_172 = arith.constant 0 : index
    %246 = vector.load %arg1[%c1_171, %c0_172] : memref<9x512xf32, #tpu.memory_space<vmem>>, vector<1x512xf32>
    %247 = vector.broadcast %246 : vector<1x512xf32> to vector<16x512xf32>
    %248 = arith.mulf %245, %247 : vector<16x512xf32>
    %249 = arith.truncf %248 : vector<16x512xf32> to vector<16x512xbf16>
    %c160_173 = arith.constant 160 : index
    %c0_174 = arith.constant 0 : index
    %250 = vector.load %arg14[%c160_173, %c0_174] : memref<432x512xbf16, #tpu.memory_space<vmem>>, vector<16x512xbf16>
    tpu.vector_store %arg14[%c160_173, %c0_174], %249 {strides = array<i32>} : memref<432x512xbf16, #tpu.memory_space<vmem>>, vector<16x512xbf16>,
    %c15_i32_175 = arith.constant 15 : i32
    %251 = tpu.dynamic_rotate %235 by %c15_i32_175 dim 1 : vector<16x512xf32>, i32 -> vector<16x512xf32>
    %c2_176 = arith.constant 2 : index
    %c0_177 = arith.constant 0 : index
    %252 = vector.load %arg1[%c2_176, %c0_177] : memref<9x512xf32, #tpu.memory_space<vmem>>, vector<1x512xf32>
    %253 = vector.broadcast %252 : vector<1x512xf32> to vector<16x512xf32>
    %254 = arith.mulf %251, %253 : vector<16x512xf32>
    %255 = arith.truncf %254 : vector<16x512xf32> to vector<16x512xbf16>
    %c176_178 = arith.constant 176 : index
    %c0_179 = arith.constant 0 : index
    %256 = vector.load %arg14[%c176_178, %c0_179] : memref<432x512xbf16, #tpu.memory_space<vmem>>, vector<16x512xbf16>
    tpu.vector_store %arg14[%c176_178, %c0_179], %255 {strides = array<i32>} : memref<432x512xbf16, #tpu.memory_space<vmem>>, vector<16x512xbf16>,
    %c1_i32_180 = arith.constant 1 : i32
    %257 = tpu.dynamic_rotate %235 by %c1_i32_180 dim 1 : vector<16x512xf32>, i32 -> vector<16x512xf32>
    %c3_181 = arith.constant 3 : index
    %c0_182 = arith.constant 0 : index
    %258 = vector.load %arg1[%c3_181, %c0_182] : memref<9x512xf32, #tpu.memory_space<vmem>>, vector<1x512xf32>
    %259 = vector.broadcast %258 : vector<1x512xf32> to vector<16x512xf32>
    %260 = arith.mulf %257, %259 : vector<16x512xf32>
    %261 = arith.truncf %260 : vector<16x512xf32> to vector<16x512xbf16>
    %c192_183 = arith.constant 192 : index
    %c0_184 = arith.constant 0 : index
    %262 = vector.load %arg14[%c192_183, %c0_184] : memref<432x512xbf16, #tpu.memory_space<vmem>>, vector<16x512xbf16>
    tpu.vector_store %arg14[%c192_183, %c0_184], %261 {strides = array<i32>} : memref<432x512xbf16, #tpu.memory_space<vmem>>, vector<16x512xbf16>,
    %263 = arith.truncf %235 : vector<16x512xf32> to vector<16x512xbf16>
    %c208_185 = arith.constant 208 : index
    %c0_186 = arith.constant 0 : index
    %264 = vector.load %arg14[%c208_185, %c0_186] : memref<432x512xbf16, #tpu.memory_space<vmem>>, vector<16x512xbf16>
    tpu.vector_store %arg14[%c208_185, %c0_186], %263 {strides = array<i32>} : memref<432x512xbf16, #tpu.memory_space<vmem>>, vector<16x512xbf16>,
    %c511_i32_187 = arith.constant 511 : i32
    %265 = tpu.dynamic_rotate %235 by %c511_i32_187 dim 1 : vector<16x512xf32>, i32 -> vector<16x512xf32>
    %c5_188 = arith.constant 5 : index
    %c0_189 = arith.constant 0 : index
    %266 = vector.load %arg1[%c5_188, %c0_189] : memref<9x512xf32, #tpu.memory_space<vmem>>, vector<1x512xf32>
    %267 = vector.broadcast %266 : vector<1x512xf32> to vector<16x512xf32>
    %268 = arith.mulf %265, %267 : vector<16x512xf32>
    %269 = arith.truncf %268 : vector<16x512xf32> to vector<16x512xbf16>
    %c224_190 = arith.constant 224 : index
    %c0_191 = arith.constant 0 : index
    %270 = vector.load %arg14[%c224_190, %c0_191] : memref<432x512xbf16, #tpu.memory_space<vmem>>, vector<16x512xbf16>
    tpu.vector_store %arg14[%c224_190, %c0_191], %269 {strides = array<i32>} : memref<432x512xbf16, #tpu.memory_space<vmem>>, vector<16x512xbf16>,
    %c497_i32_192 = arith.constant 497 : i32
    %271 = tpu.dynamic_rotate %235 by %c497_i32_192 dim 1 : vector<16x512xf32>, i32 -> vector<16x512xf32>
    %c6_193 = arith.constant 6 : index
    %c0_194 = arith.constant 0 : index
    %272 = vector.load %arg1[%c6_193, %c0_194] : memref<9x512xf32, #tpu.memory_space<vmem>>, vector<1x512xf32>
    %273 = vector.broadcast %272 : vector<1x512xf32> to vector<16x512xf32>
    %274 = arith.mulf %271, %273 : vector<16x512xf32>
    %275 = arith.truncf %274 : vector<16x512xf32> to vector<16x512xbf16>
    %c240_195 = arith.constant 240 : index
    %c0_196 = arith.constant 0 : index
    %276 = vector.load %arg14[%c240_195, %c0_196] : memref<432x512xbf16, #tpu.memory_space<vmem>>, vector<16x512xbf16>
    tpu.vector_store %arg14[%c240_195, %c0_196], %275 {strides = array<i32>} : memref<432x512xbf16, #tpu.memory_space<vmem>>, vector<16x512xbf16>,
    %c496_i32_197 = arith.constant 496 : i32
    %277 = tpu.dynamic_rotate %235 by %c496_i32_197 dim 1 : vector<16x512xf32>, i32 -> vector<16x512xf32>
    %c7_198 = arith.constant 7 : index
    %c0_199 = arith.constant 0 : index
    %278 = vector.load %arg1[%c7_198, %c0_199] : memref<9x512xf32, #tpu.memory_space<vmem>>, vector<1x512xf32>
    %279 = vector.broadcast %278 : vector<1x512xf32> to vector<16x512xf32>
    %280 = arith.mulf %277, %279 : vector<16x512xf32>
    %281 = arith.truncf %280 : vector<16x512xf32> to vector<16x512xbf16>
    %c256_200 = arith.constant 256 : index
    %c0_201 = arith.constant 0 : index
    %282 = vector.load %arg14[%c256_200, %c0_201] : memref<432x512xbf16, #tpu.memory_space<vmem>>, vector<16x512xbf16>
    tpu.vector_store %arg14[%c256_200, %c0_201], %281 {strides = array<i32>} : memref<432x512xbf16, #tpu.memory_space<vmem>>, vector<16x512xbf16>,
    %c495_i32_202 = arith.constant 495 : i32
    %283 = tpu.dynamic_rotate %235 by %c495_i32_202 dim 1 : vector<16x512xf32>, i32 -> vector<16x512xf32>
    %c8_203 = arith.constant 8 : index
    %c0_204 = arith.constant 0 : index
    %284 = vector.load %arg1[%c8_203, %c0_204] : memref<9x512xf32, #tpu.memory_space<vmem>>, vector<1x512xf32>
    %285 = vector.broadcast %284 : vector<1x512xf32> to vector<16x512xf32>
    %286 = arith.mulf %283, %285 : vector<16x512xf32>
    %287 = arith.truncf %286 : vector<16x512xf32> to vector<16x512xbf16>
    %c272_205 = arith.constant 272 : index
    %c0_206 = arith.constant 0 : index
    %288 = vector.load %arg14[%c272_205, %c0_206] : memref<432x512xbf16, #tpu.memory_space<vmem>>, vector<16x512xbf16>
    tpu.vector_store %arg14[%c272_205, %c0_206], %287 {strides = array<i32>} : memref<432x512xbf16, #tpu.memory_space<vmem>>, vector<16x512xbf16>,
    %c0_207 = arith.constant 0 : index
    %c0_208 = arith.constant 0 : index
    %289 = vector.load %arg9[%c0_207, %c0_208] : memref<16x288xbf16, #tpu.memory_space<vmem>>, vector<16x288xbf16>
    %c0_209 = arith.constant 0 : index
    %c0_210 = arith.constant 0 : index
    %290 = vector.load %arg10[%c0_209, %c0_210] : memref<16x1xf32, #tpu.memory_space<vmem>>, vector<16x1xf32>
    %c0_211 = arith.constant 0 : index
    %c0_212 = arith.constant 0 : index
    %291 = vector.load %arg14[%c0_211, %c0_212] : memref<432x512xbf16, #tpu.memory_space<vmem>>, vector<288x512xbf16>
    %cst_213 = arith.constant dense<0.000000e+00> : vector<16x512xf32>
    %292 = tpu.matmul %289, %291, %cst_213 {dimension_numbers = #tpu.dot_dimension_numbers<[1], [0], [0], [1], [0, 0, 1, 1], [], []>} : vector<16x288xbf16>, vector<288x512xbf16>, vector<16x512xf32> -> vector<16x512xf32>
    %293 = vector.broadcast %290 : vector<16x1xf32> to vector<16x512xf32>
    %294 = arith.addf %292, %293 : vector<16x512xf32>
    %cst_214 = arith.constant 0.000000e+00 : f32
    %295 = vector.broadcast %cst_214 : f32 to vector<16x512xf32>
    %296 = arith.maximumf %294, %295 : vector<16x512xf32>
    %c0_215 = arith.constant 0 : index
    %c32_216 = arith.constant 32 : index
    %c0_217 = arith.constant 0 : index
    %297 = vector.load %arg13[%c0_215, %c32_216, %c0_217] : memref<1x64x512xf32, #tpu.memory_space<vmem>>, vector<1x16x512xf32>
    %298 = vector.shape_cast %297 : vector<1x16x512xf32> to vector<16x512xf32>
    %299 = vector.shape_cast %296 : vector<16x512xf32> to vector<1x16x512xf32>
    tpu.vector_store %arg13[%c0_215, %c32_216, %c0_217], %299 {strides = array<i32>} : memref<1x64x512xf32, #tpu.memory_space<vmem>>, vector<1x16x512xf32>,
    %c17_i32_218 = arith.constant 17 : i32
    %300 = tpu.dynamic_rotate %296 by %c17_i32_218 dim 1 : vector<16x512xf32>, i32 -> vector<16x512xf32>
    %c0_219 = arith.constant 0 : index
    %c0_220 = arith.constant 0 : index
    %301 = vector.load %arg1[%c0_219, %c0_220] : memref<9x512xf32, #tpu.memory_space<vmem>>, vector<1x512xf32>
    %302 = vector.broadcast %301 : vector<1x512xf32> to vector<16x512xf32>
    %303 = arith.mulf %300, %302 : vector<16x512xf32>
    %304 = arith.truncf %303 : vector<16x512xf32> to vector<16x512xbf16>
    %c288_221 = arith.constant 288 : index
    %c0_222 = arith.constant 0 : index
    %305 = vector.load %arg14[%c288_221, %c0_222] : memref<432x512xbf16, #tpu.memory_space<vmem>>, vector<16x512xbf16>
    tpu.vector_store %arg14[%c288_221, %c0_222], %304 {strides = array<i32>} : memref<432x512xbf16, #tpu.memory_space<vmem>>, vector<16x512xbf16>,
    %c16_i32_223 = arith.constant 16 : i32
    %306 = tpu.dynamic_rotate %296 by %c16_i32_223 dim 1 : vector<16x512xf32>, i32 -> vector<16x512xf32>
    %c1_224 = arith.constant 1 : index
    %c0_225 = arith.constant 0 : index
    %307 = vector.load %arg1[%c1_224, %c0_225] : memref<9x512xf32, #tpu.memory_space<vmem>>, vector<1x512xf32>
    %308 = vector.broadcast %307 : vector<1x512xf32> to vector<16x512xf32>
    %309 = arith.mulf %306, %308 : vector<16x512xf32>
    %310 = arith.truncf %309 : vector<16x512xf32> to vector<16x512xbf16>
    %c304_226 = arith.constant 304 : index
    %c0_227 = arith.constant 0 : index
    %311 = vector.load %arg14[%c304_226, %c0_227] : memref<432x512xbf16, #tpu.memory_space<vmem>>, vector<16x512xbf16>
    tpu.vector_store %arg14[%c304_226, %c0_227], %310 {strides = array<i32>} : memref<432x512xbf16, #tpu.memory_space<vmem>>, vector<16x512xbf16>,
    %c15_i32_228 = arith.constant 15 : i32
    %312 = tpu.dynamic_rotate %296 by %c15_i32_228 dim 1 : vector<16x512xf32>, i32 -> vector<16x512xf32>
    %c2_229 = arith.constant 2 : index
    %c0_230 = arith.constant 0 : index
    %313 = vector.load %arg1[%c2_229, %c0_230] : memref<9x512xf32, #tpu.memory_space<vmem>>, vector<1x512xf32>
    %314 = vector.broadcast %313 : vector<1x512xf32> to vector<16x512xf32>
    %315 = arith.mulf %312, %314 : vector<16x512xf32>
    %316 = arith.truncf %315 : vector<16x512xf32> to vector<16x512xbf16>
    %c320_231 = arith.constant 320 : index
    %c0_232 = arith.constant 0 : index
    %317 = vector.load %arg14[%c320_231, %c0_232] : memref<432x512xbf16, #tpu.memory_space<vmem>>, vector<16x512xbf16>
    tpu.vector_store %arg14[%c320_231, %c0_232], %316 {strides = array<i32>} : memref<432x512xbf16, #tpu.memory_space<vmem>>, vector<16x512xbf16>,
    %c1_i32_233 = arith.constant 1 : i32
    %318 = tpu.dynamic_rotate %296 by %c1_i32_233 dim 1 : vector<16x512xf32>, i32 -> vector<16x512xf32>
    %c3_234 = arith.constant 3 : index
    %c0_235 = arith.constant 0 : index
    %319 = vector.load %arg1[%c3_234, %c0_235] : memref<9x512xf32, #tpu.memory_space<vmem>>, vector<1x512xf32>
    %320 = vector.broadcast %319 : vector<1x512xf32> to vector<16x512xf32>
    %321 = arith.mulf %318, %320 : vector<16x512xf32>
    %322 = arith.truncf %321 : vector<16x512xf32> to vector<16x512xbf16>
    %c336_236 = arith.constant 336 : index
    %c0_237 = arith.constant 0 : index
    %323 = vector.load %arg14[%c336_236, %c0_237] : memref<432x512xbf16, #tpu.memory_space<vmem>>, vector<16x512xbf16>
    tpu.vector_store %arg14[%c336_236, %c0_237], %322 {strides = array<i32>} : memref<432x512xbf16, #tpu.memory_space<vmem>>, vector<16x512xbf16>,
    %324 = arith.truncf %296 : vector<16x512xf32> to vector<16x512xbf16>
    %c352_238 = arith.constant 352 : index
    %c0_239 = arith.constant 0 : index
    %325 = vector.load %arg14[%c352_238, %c0_239] : memref<432x512xbf16, #tpu.memory_space<vmem>>, vector<16x512xbf16>
    tpu.vector_store %arg14[%c352_238, %c0_239], %324 {strides = array<i32>} : memref<432x512xbf16, #tpu.memory_space<vmem>>, vector<16x512xbf16>,
    %c511_i32_240 = arith.constant 511 : i32
    %326 = tpu.dynamic_rotate %296 by %c511_i32_240 dim 1 : vector<16x512xf32>, i32 -> vector<16x512xf32>
    %c5_241 = arith.constant 5 : index
    %c0_242 = arith.constant 0 : index
    %327 = vector.load %arg1[%c5_241, %c0_242] : memref<9x512xf32, #tpu.memory_space<vmem>>, vector<1x512xf32>
    %328 = vector.broadcast %327 : vector<1x512xf32> to vector<16x512xf32>
    %329 = arith.mulf %326, %328 : vector<16x512xf32>
    %330 = arith.truncf %329 : vector<16x512xf32> to vector<16x512xbf16>
    %c368_243 = arith.constant 368 : index
    %c0_244 = arith.constant 0 : index
    %331 = vector.load %arg14[%c368_243, %c0_244] : memref<432x512xbf16, #tpu.memory_space<vmem>>, vector<16x512xbf16>
    tpu.vector_store %arg14[%c368_243, %c0_244], %330 {strides = array<i32>} : memref<432x512xbf16, #tpu.memory_space<vmem>>, vector<16x512xbf16>,
    %c497_i32_245 = arith.constant 497 : i32
    %332 = tpu.dynamic_rotate %296 by %c497_i32_245 dim 1 : vector<16x512xf32>, i32 -> vector<16x512xf32>
    %c6_246 = arith.constant 6 : index
    %c0_247 = arith.constant 0 : index
    %333 = vector.load %arg1[%c6_246, %c0_247] : memref<9x512xf32, #tpu.memory_space<vmem>>, vector<1x512xf32>
    %334 = vector.broadcast %333 : vector<1x512xf32> to vector<16x512xf32>
    %335 = arith.mulf %332, %334 : vector<16x512xf32>
    %336 = arith.truncf %335 : vector<16x512xf32> to vector<16x512xbf16>
    %c384_248 = arith.constant 384 : index
    %c0_249 = arith.constant 0 : index
    %337 = vector.load %arg14[%c384_248, %c0_249] : memref<432x512xbf16, #tpu.memory_space<vmem>>, vector<16x512xbf16>
    tpu.vector_store %arg14[%c384_248, %c0_249], %336 {strides = array<i32>} : memref<432x512xbf16, #tpu.memory_space<vmem>>, vector<16x512xbf16>,
    %c496_i32_250 = arith.constant 496 : i32
    %338 = tpu.dynamic_rotate %296 by %c496_i32_250 dim 1 : vector<16x512xf32>, i32 -> vector<16x512xf32>
    %c7_251 = arith.constant 7 : index
    %c0_252 = arith.constant 0 : index
    %339 = vector.load %arg1[%c7_251, %c0_252] : memref<9x512xf32, #tpu.memory_space<vmem>>, vector<1x512xf32>
    %340 = vector.broadcast %339 : vector<1x512xf32> to vector<16x512xf32>
    %341 = arith.mulf %338, %340 : vector<16x512xf32>
    %342 = arith.truncf %341 : vector<16x512xf32> to vector<16x512xbf16>
    %c400_253 = arith.constant 400 : index
    %c0_254 = arith.constant 0 : index
    %343 = vector.load %arg14[%c400_253, %c0_254] : memref<432x512xbf16, #tpu.memory_space<vmem>>, vector<16x512xbf16>
    tpu.vector_store %arg14[%c400_253, %c0_254], %342 {strides = array<i32>} : memref<432x512xbf16, #tpu.memory_space<vmem>>, vector<16x512xbf16>,
    %c495_i32_255 = arith.constant 495 : i32
    %344 = tpu.dynamic_rotate %296 by %c495_i32_255 dim 1 : vector<16x512xf32>, i32 -> vector<16x512xf32>
    %c8_256 = arith.constant 8 : index
    %c0_257 = arith.constant 0 : index
    %345 = vector.load %arg1[%c8_256, %c0_257] : memref<9x512xf32, #tpu.memory_space<vmem>>, vector<1x512xf32>
    %346 = vector.broadcast %345 : vector<1x512xf32> to vector<16x512xf32>
    %347 = arith.mulf %344, %346 : vector<16x512xf32>
    %348 = arith.truncf %347 : vector<16x512xf32> to vector<16x512xbf16>
    %c416_258 = arith.constant 416 : index
    %c0_259 = arith.constant 0 : index
    %349 = vector.load %arg14[%c416_258, %c0_259] : memref<432x512xbf16, #tpu.memory_space<vmem>>, vector<16x512xbf16>
    tpu.vector_store %arg14[%c416_258, %c0_259], %348 {strides = array<i32>} : memref<432x512xbf16, #tpu.memory_space<vmem>>, vector<16x512xbf16>,
    %c0_260 = arith.constant 0 : index
    %c0_261 = arith.constant 0 : index
    %350 = vector.load %arg11[%c0_260, %c0_261] : memref<16x432xbf16, #tpu.memory_space<vmem>>, vector<16x432xbf16>
    %c0_262 = arith.constant 0 : index
    %c0_263 = arith.constant 0 : index
    %351 = vector.load %arg12[%c0_262, %c0_263] : memref<16x1xf32, #tpu.memory_space<vmem>>, vector<16x1xf32>
    %c0_264 = arith.constant 0 : index
    %c0_265 = arith.constant 0 : index
    %352 = vector.load %arg14[%c0_264, %c0_265] : memref<432x512xbf16, #tpu.memory_space<vmem>>, vector<432x512xbf16>
    %cst_266 = arith.constant dense<0.000000e+00> : vector<16x512xf32>
    %353 = tpu.matmul %350, %352, %cst_266 {dimension_numbers = #tpu.dot_dimension_numbers<[1], [0], [0], [1], [0, 0, 1, 1], [], []>} : vector<16x432xbf16>, vector<432x512xbf16>, vector<16x512xf32> -> vector<16x512xf32>
    %354 = vector.broadcast %351 : vector<16x1xf32> to vector<16x512xf32>
    %355 = arith.addf %353, %354 : vector<16x512xf32>
    %cst_267 = arith.constant 0.000000e+00 : f32
    %356 = vector.broadcast %cst_267 : f32 to vector<16x512xf32>
    %357 = arith.maximumf %355, %356 : vector<16x512xf32>
    %c0_268 = arith.constant 0 : index
    %c48_269 = arith.constant 48 : index
    %c0_270 = arith.constant 0 : index
    %358 = vector.load %arg13[%c0_268, %c48_269, %c0_270] : memref<1x64x512xf32, #tpu.memory_space<vmem>>, vector<1x16x512xf32>
    %359 = vector.shape_cast %358 : vector<1x16x512xf32> to vector<16x512xf32>
    %360 = vector.shape_cast %357 : vector<16x512xf32> to vector<1x16x512xf32>
    tpu.vector_store %arg13[%c0_268, %c48_269, %c0_270], %360 {strides = array<i32>} : memref<1x64x512xf32, #tpu.memory_space<vmem>>, vector<1x16x512xf32>,
    return
  }
  func.func @transform_0(%arg0: i32) -> (i32, i32) {
    %c0_i32 = arith.constant 0 : i32
    %c0_i32_0 = arith.constant 0 : i32
    %c0_i32_1 = arith.constant 0 : i32
    return %c0_i32, %c0_i32_0 : i32, i32
  }
  func.func @transform_1(%arg0: i32) -> (i32, i32, i32) {
    %c0_i32 = arith.constant 0 : i32
    %c0_i32_0 = arith.constant 0 : i32
    %c0_i32_1 = arith.constant 0 : i32
    return %arg0, %c0_i32, %c0_i32_0 : i32, i32, i32
  }
  func.func @transform_2(%arg0: i32) -> (i32, i32) {
    %c0_i32 = arith.constant 0 : i32
    %c0_i32_0 = arith.constant 0 : i32
    %c0_i32_1 = arith.constant 0 : i32
    return %c0_i32, %c0_i32_0 : i32, i32
  }
  func.func @transform_3(%arg0: i32) -> (i32, i32) {
    %c0_i32 = arith.constant 0 : i32
    %c0_i32_0 = arith.constant 0 : i32
    %c0_i32_1 = arith.constant 0 : i32
    return %c0_i32, %c0_i32_0 : i32, i32
  }
  func.func @transform_4(%arg0: i32) -> (i32, i32) {
    %c0_i32 = arith.constant 0 : i32
    %c0_i32_0 = arith.constant 0 : i32
    %c0_i32_1 = arith.constant 0 : i32
    return %c0_i32, %c0_i32_0 : i32, i32
  }
  func.func @transform_5(%arg0: i32) -> (i32, i32) {
    %c0_i32 = arith.constant 0 : i32
    %c0_i32_0 = arith.constant 0 : i32
    %c0_i32_1 = arith.constant 0 : i32
    return %c0_i32, %c0_i32_0 : i32, i32
  }
  func.func @transform_6(%arg0: i32) -> (i32, i32) {
    %c0_i32 = arith.constant 0 : i32
    %c0_i32_0 = arith.constant 0 : i32
    %c0_i32_1 = arith.constant 0 : i32
    return %c0_i32, %c0_i32_0 : i32, i32
  }
  func.func @transform_7(%arg0: i32) -> (i32, i32) {
    %c0_i32 = arith.constant 0 : i32
    %c0_i32_0 = arith.constant 0 : i32
    %c0_i32_1 = arith.constant 0 : i32
    return %c0_i32, %c0_i32_0 : i32, i32
  }
  func.func @transform_8(%arg0: i32) -> (i32, i32) {
    %c0_i32 = arith.constant 0 : i32
    %c0_i32_0 = arith.constant 0 : i32
    %c0_i32_1 = arith.constant 0 : i32
    return %c0_i32, %c0_i32_0 : i32, i32
  }
  func.func @transform_9(%arg0: i32) -> (i32, i32) {
    %c0_i32 = arith.constant 0 : i32
    %c0_i32_0 = arith.constant 0 : i32
    %c0_i32_1 = arith.constant 0 : i32
    return %c0_i32, %c0_i32_0 : i32, i32
  }
  func.func @transform_10(%arg0: i32) -> (i32, i32) {
    %c0_i32 = arith.constant 0 : i32
    %c0_i32_0 = arith.constant 0 : i32
    %c0_i32_1 = arith.constant 0 : i32
    return %c0_i32, %c0_i32_0 : i32, i32
  }
  func.func @transform_11(%arg0: i32) -> (i32, i32) {
    %c0_i32 = arith.constant 0 : i32
    %c0_i32_0 = arith.constant 0 : i32
    %c0_i32_1 = arith.constant 0 : i32
    return %c0_i32, %c0_i32_0 : i32, i32
  }
  func.func @transform_12(%arg0: i32) -> (i32, i32, i32) {
    %c0_i32 = arith.constant 0 : i32
    %c0_i32_0 = arith.constant 0 : i32
    %c0_i32_1 = arith.constant 0 : i32
    return %arg0, %c0_i32, %c0_i32_0 : i32, i32, i32
  }
}

</mosaic_0001>

<llo_original>
// kernel: encoder1_forward.1
$region0: #{encoder1_forward.1}
  #allocation0 [shape = 'u32[]', space=smem, size = 0x4, offset = 0x4, fixed_abs, tag = 'smem constant byte address 0x4 - core index']
  #allocation1 [shape = 'u32[72,128]{1,0:T(1,128)}', space=vmem, size = 0x9000, scoped, tag = 'internal scratch']
  #allocation2 [shape = 'bf16[432,512]{1,0:T(8,128)(2,1)}', space=vmem, size = 0x6c000, scoped, tag = 'scratch operand']
  %s0 = inlined_call_operand.vmem [shape: f32[9,512], index: 0, kind: input, shape index: {}]
  %s1 = inlined_call_operand.vmem [shape: bf16[1,16,512], index: 1, kind: input, shape index: {}]
  %s2 = inlined_call_operand.vmem [shape: bf16[32,144], index: 2, kind: input, shape index: {}]
  %s3 = inlined_call_operand.vmem [shape: f32[32,1], index: 3, kind: input, shape index: {}]
  %s4 = inlined_call_operand.vmem [shape: bf16[16,288], index: 4, kind: input, shape index: {}]
  %s5 = inlined_call_operand.vmem [shape: f32[16,1], index: 5, kind: input, shape index: {}]
  %s6 = inlined_call_operand.vmem [shape: bf16[16,144], index: 6, kind: input, shape index: {}]
  %s7 = inlined_call_operand.vmem [shape: f32[16,1], index: 7, kind: input, shape index: {}]
  %s8 = inlined_call_operand.vmem [shape: bf16[16,288], index: 8, kind: input, shape index: {}]
  %s9 = inlined_call_operand.vmem [shape: f32[16,1], index: 9, kind: input, shape index: {}]
  %s10 = inlined_call_operand.vmem [shape: bf16[16,432], index: 10, kind: input, shape index: {}]
  %s11 = inlined_call_operand.vmem [shape: f32[16,1], index: 11, kind: input, shape index: {}]
  %s12 = inlined_call_operand.vmem [shape: f32[1,64,512], index: 12, kind: output, shape index: {}]
  %s13 = sld [smem:[#allocation0]]
  $region58: #{encoder1_forward.1} parent=0
    _
  %s15 = ssub.s32 1, %s13
  %s16 = scalar_select 0, %s15, %s13
  // Predicated region
  $region2: #{encoder1_forward.1} parent=0 // pred_check
    _
  $region3: #{encoder1_forward.1} parent=0 // pred_check_branch
    %18 = sbr.rel (0) target = $region5
  $region4: #{encoder1_forward.1} parent=0 // pred_region
    _
  $region5: #{encoder1_forward.1} parent=0 // pred_fallthru
    _
  // Predicated region
  $region6: #{encoder1_forward.1} parent=0 // pred_check
    _
  $region7: #{encoder1_forward.1} parent=0 // pred_check_branch
    %20 = sbr.rel (0) target = $region9
  $region8: #{encoder1_forward.1} parent=0 // pred_region
    _
  $region9: #{encoder1_forward.1} parent=0 // pred_fallthru
    _
  // Predicated region
  $region10: #{encoder1_forward.1} parent=0 // pred_check
    _
  $region11: #{encoder1_forward.1} parent=0 // pred_check_branch
    %22 = sbr.rel (0) target = $region13
  $region12: #{encoder1_forward.1} parent=0 // pred_region
    _
  $region13: #{encoder1_forward.1} parent=0 // pred_fallthru
    _
  // Predicated region
  $region14: #{encoder1_forward.1} parent=0 // pred_check
    _
  $region15: #{encoder1_forward.1} parent=0 // pred_check_branch
    %24 = sbr.rel (0) target = $region17
  $region16: #{encoder1_forward.1} parent=0 // pred_region
    _
  $region17: #{encoder1_forward.1} parent=0 // pred_fallthru
    _
  // Predicated region
  $region18: #{encoder1_forward.1} parent=0 // pred_check
    _
  $region19: #{encoder1_forward.1} parent=0 // pred_check_branch
    %26 = sbr.rel (0) target = $region21
  $region20: #{encoder1_forward.1} parent=0 // pred_region
    _
  $region21: #{encoder1_forward.1} parent=0 // pred_fallthru
    _
  // Predicated region
  $region22: #{encoder1_forward.1} parent=0 // pred_check
    _
  $region23: #{encoder1_forward.1} parent=0 // pred_check_branch
    %28 = sbr.rel (0) target = $region25
  $region24: #{encoder1_forward.1} parent=0 // pred_region
    _
  $region25: #{encoder1_forward.1} parent=0 // pred_fallthru
    _
  // Predicated region
  $region26: #{encoder1_forward.1} parent=0 // pred_check
    _
  $region27: #{encoder1_forward.1} parent=0 // pred_check_branch
    %30 = sbr.rel (0) target = $region29
  $region28: #{encoder1_forward.1} parent=0 // pred_region
    _
  $region29: #{encoder1_forward.1} parent=0 // pred_fallthru
    _
  // Predicated region
  $region30: #{encoder1_forward.1} parent=0 // pred_check
    _
  $region31: #{encoder1_forward.1} parent=0 // pred_check_branch
    %32 = sbr.rel (0) target = $region33
  $region32: #{encoder1_forward.1} parent=0 // pred_region
    _
  $region33: #{encoder1_forward.1} parent=0 // pred_fallthru
    _
  // Predicated region
  $region34: #{encoder1_forward.1} parent=0 // pred_check
    _
  $region35: #{encoder1_forward.1} parent=0 // pred_check_branch
    %34 = sbr.rel (0) target = $region37
  $region36: #{encoder1_forward.1} parent=0 // pred_region
    _
  $region37: #{encoder1_forward.1} parent=0 // pred_fallthru
    _
  // Predicated region
  $region38: #{encoder1_forward.1} parent=0 // pred_check
    _
  $region39: #{encoder1_forward.1} parent=0 // pred_check_branch
    %36 = sbr.rel (0) target = $region41
  $region40: #{encoder1_forward.1} parent=0 // pred_region
    _
  $region41: #{encoder1_forward.1} parent=0 // pred_fallthru
    _
  // Predicated region
  $region42: #{encoder1_forward.1} parent=0 // pred_check
    _
  $region43: #{encoder1_forward.1} parent=0 // pred_check_branch
    %38 = sbr.rel (0) target = $region45
  $region44: #{encoder1_forward.1} parent=0 // pred_region
    _
  $region45: #{encoder1_forward.1} parent=0 // pred_fallthru
    _
  // Predicated region
  $region46: #{encoder1_forward.1} parent=0 // pred_check
    _
  $region47: #{encoder1_forward.1} parent=0 // pred_check_branch
    %40 = sbr.rel (0) target = $region49
  $region48: #{encoder1_forward.1} parent=0 // pred_region
    _
  $region49: #{encoder1_forward.1} parent=0 // pred_fallthru
    _
  %v42 = vld [vmem:[%s1] sm:$0xff]
  %v43 = vld [vmem:[%s1 + $0x8] sm:$0xff]
  %v44 = vld [vmem:[%s1 + $0x10] sm:$0xff]
  %v45 = vld [vmem:[%s1 + $0x18] sm:$0xff]
  %v46 = vunpack.c.l.bf16 %v42
  %v47 = vunpack.c.h.bf16 %v42
  %v48 = vunpack.c.l.bf16 %v43
  %v49 = vunpack.c.h.bf16 %v43
  %v50 = vunpack.c.l.bf16 %v44
  %v51 = vunpack.c.h.bf16 %v44
  %v52 = vunpack.c.l.bf16 %v45
  %v53 = vunpack.c.h.bf16 %v45
  %54 = vrot.lane.b32.xlu0 %v46, 17
  %v55 = vpop.permute.xlu0 %54
  %56 = vrot.lane.b32.xlu0 %v50, 17
  %v57 = vpop.permute.xlu0 %56
  %58 = vrot.lane.b32.xlu0 %v47, 17
  %v59 = vpop.permute.xlu0 %58
  %60 = vrot.lane.b32.xlu0 %v51, 17
  %v61 = vpop.permute.xlu0 %60
  %62 = vrot.lane.b32.xlu0 %v48, 17
  %v63 = vpop.permute.xlu0 %62
  %64 = vrot.lane.b32.xlu0 %v52, 17
  %v65 = vpop.permute.xlu0 %64
  %66 = vrot.lane.b32.xlu0 %v49, 17
  %v67 = vpop.permute.xlu0 %66
  %68 = vrot.lane.b32.xlu0 %v53, 17
  %v69 = vpop.permute.xlu0 %68
  %v70 = vlaneseq
  %v71 = vand.u32 %v70, 127
  %vm72 = vcmp.lt.s32.totalorder %v71, 17
  %v73 = vsel %vm72, %v63, %v67
  %v74 = vsel %vm72, %v65, %v69
  %v75 = vsel %vm72, %v59, %v63
  %v76 = vsel %vm72, %v61, %v65
  %v77 = vsel %vm72, %v55, %v59
  %v78 = vsel %vm72, %v57, %v61
  %v79 = vsel %vm72, %v67, %v55
  %v80 = vsel %vm72, %v69, %v57
  %v81 = vld [vmem:[%s0] ss:$8 sm:$0xf]
  %v83 = vperm.slane %v81, 0
  %v84 = vperm.slane %v81, 1
  %v85 = vperm.slane %v81, 2
  %v86 = vperm.slane %v81, 3
  %v91 = vmul.f32 %v79, %v83
  %v92 = vmul.f32 %v77, %v84
  %v93 = vmul.f32 %v75, %v85
  %v94 = vmul.f32 %v73, %v86
  %v95 = vmul.f32 %v80, %v83
  %v96 = vmul.f32 %v78, %v84
  %v97 = vmul.f32 %v76, %v85
  %v98 = vmul.f32 %v74, %v86
  %v99 = vpack.c.bf16 %v92, %v91
  %v100 = vpack.c.bf16 %v94, %v93
  %v101 = vpack.c.bf16 %v96, %v95
  %v102 = vpack.c.bf16 %v98, %v97
  %103 = vst [vmem:[#allocation2] sm:$0xff] %v99
  %104 = vst [vmem:[#allocation2 + $0x8] sm:$0xff] %v100
  %105 = vst [vmem:[#allocation2 + $0x10] sm:$0xff] %v101
  %106 = vst [vmem:[#allocation2 + $0x18] sm:$0xff] %v102
  %107 = vrot.lane.b32.xlu0 %v46, 16
  %v108 = vpop.permute.xlu0 %107
  %109 = vrot.lane.b32.xlu0 %v50, 16
  %v110 = vpop.permute.xlu0 %109
  %111 = vrot.lane.b32.xlu0 %v47, 16
  %v112 = vpop.permute.xlu0 %111
  %113 = vrot.lane.b32.xlu0 %v51, 16
  %v114 = vpop.permute.xlu0 %113
  %115 = vrot.lane.b32.xlu0 %v48, 16
  %v116 = vpop.permute.xlu0 %115
  %117 = vrot.lane.b32.xlu0 %v52, 16
  %v118 = vpop.permute.xlu0 %117
  %119 = vrot.lane.b32.xlu0 %v49, 16
  %v120 = vpop.permute.xlu0 %119
  %121 = vrot.lane.b32.xlu0 %v53, 16
  %v122 = vpop.permute.xlu0 %121
  %vm123 = vcmp.lt.s32.totalorder %v71, 16
  %v124 = vsel %vm123, %v116, %v120
  %v125 = vsel %vm123, %v118, %v122
  %v126 = vsel %vm123, %v112, %v116
  %v127 = vsel %vm123, %v114, %v118
  %v128 = vsel %vm123, %v108, %v112
  %v129 = vsel %vm123, %v110, %v114
  %v130 = vsel %vm123, %v120, %v108
  %v131 = vsel %vm123, %v122, %v110
  %s132 = scalar_lea.vmem %s0, 1
  %v133 = vld [vmem:[%s132] ss:$8 sm:$0xf]
  %v135 = vperm.slane %v133, 0
  %v136 = vperm.slane %v133, 1
  %v137 = vperm.slane %v133, 2
  %v138 = vperm.slane %v133, 3
  %v143 = vmul.f32 %v130, %v135
  %v144 = vmul.f32 %v128, %v136
  %v145 = vmul.f32 %v126, %v137
  %v146 = vmul.f32 %v124, %v138
  %v147 = vmul.f32 %v131, %v135
  %v148 = vmul.f32 %v129, %v136
  %v149 = vmul.f32 %v127, %v137
  %v150 = vmul.f32 %v125, %v138
  %v151 = vpack.c.bf16 %v144, %v143
  %v152 = vpack.c.bf16 %v146, %v145
  %v153 = vpack.c.bf16 %v148, %v147
  %v154 = vpack.c.bf16 %v150, %v149
  %155 = vst [vmem:[#allocation2 + $0x20] sm:$0xff] %v151
  %156 = vst [vmem:[#allocation2 + $0x28] sm:$0xff] %v152
  %157 = vst [vmem:[#allocation2 + $0x30] sm:$0xff] %v153
  %158 = vst [vmem:[#allocation2 + $0x38] sm:$0xff] %v154
  %159 = vrot.lane.b32.xlu0 %v46, 15
  %v160 = vpop.permute.xlu0 %159
  %161 = vrot.lane.b32.xlu0 %v50, 15
  %v162 = vpop.permute.xlu0 %161
  %163 = vrot.lane.b32.xlu0 %v47, 15
  %v164 = vpop.permute.xlu0 %163
  %165 = vrot.lane.b32.xlu0 %v51, 15
  %v166 = vpop.permute.xlu0 %165
  %167 = vrot.lane.b32.xlu0 %v48, 15
  %v168 = vpop.permute.xlu0 %167
  %169 = vrot.lane.b32.xlu0 %v52, 15
  %v170 = vpop.permute.xlu0 %169
  %171 = vrot.lane.b32.xlu0 %v49, 15
  %v172 = vpop.permute.xlu0 %171
  %173 = vrot.lane.b32.xlu0 %v53, 15
  %v174 = vpop.permute.xlu0 %173
  %vm175 = vcmp.lt.s32.totalorder %v71, 15
  %v176 = vsel %vm175, %v168, %v172
  %v177 = vsel %vm175, %v170, %v174
  %v178 = vsel %vm175, %v164, %v168
  %v179 = vsel %vm175, %v166, %v170
  %v180 = vsel %vm175, %v160, %v164
  %v181 = vsel %vm175, %v162, %v166
  %v182 = vsel %vm175, %v172, %v160
  %v183 = vsel %vm175, %v174, %v162
  %s184 = scalar_lea.vmem %s0, 2
  %v185 = vld [vmem:[%s184] ss:$8 sm:$0xf]
  %v187 = vperm.slane %v185, 0
  %v188 = vperm.slane %v185, 1
  %v189 = vperm.slane %v185, 2
  %v190 = vperm.slane %v185, 3
  %v195 = vmul.f32 %v182, %v187
  %v196 = vmul.f32 %v180, %v188
  %v197 = vmul.f32 %v178, %v189
  %v198 = vmul.f32 %v176, %v190
  %v199 = vmul.f32 %v183, %v187
  %v200 = vmul.f32 %v181, %v188
  %v201 = vmul.f32 %v179, %v189
  %v202 = vmul.f32 %v177, %v190
  %v203 = vpack.c.bf16 %v196, %v195
  %v204 = vpack.c.bf16 %v198, %v197
  %v205 = vpack.c.bf16 %v200, %v199
  %v206 = vpack.c.bf16 %v202, %v201
  %207 = vst [vmem:[#allocation2 + $0x40] sm:$0xff] %v203
  %208 = vst [vmem:[#allocation2 + $0x48] sm:$0xff] %v204
  %209 = vst [vmem:[#allocation2 + $0x50] sm:$0xff] %v205
  %210 = vst [vmem:[#allocation2 + $0x58] sm:$0xff] %v206
  %211 = vrot.lane.b32.xlu0 %v46, 1
  %v212 = vpop.permute.xlu0 %211
  %213 = vrot.lane.b32.xlu0 %v50, 1
  %v214 = vpop.permute.xlu0 %213
  %215 = vrot.lane.b32.xlu0 %v47, 1
  %v216 = vpop.permute.xlu0 %215
  %217 = vrot.lane.b32.xlu0 %v51, 1
  %v218 = vpop.permute.xlu0 %217
  %219 = vrot.lane.b32.xlu0 %v48, 1
  %v220 = vpop.permute.xlu0 %219
  %221 = vrot.lane.b32.xlu0 %v52, 1
  %v222 = vpop.permute.xlu0 %221
  %223 = vrot.lane.b32.xlu0 %v49, 1
  %v224 = vpop.permute.xlu0 %223
  %225 = vrot.lane.b32.xlu0 %v53, 1
  %v226 = vpop.permute.xlu0 %225
  %vm227 = vcmp.lt.s32.totalorder %v71, 1
  %v228 = vsel %vm227, %v220, %v224
  %v229 = vsel %vm227, %v222, %v226
  %v230 = vsel %vm227, %v216, %v220
  %v231 = vsel %vm227, %v218, %v222
  %v232 = vsel %vm227, %v212, %v216
  %v233 = vsel %vm227, %v214, %v218
  %v234 = vsel %vm227, %v224, %v212
  %v235 = vsel %vm227, %v226, %v214
  %s236 = scalar_lea.vmem %s0, 3
  %v237 = vld [vmem:[%s236] ss:$8 sm:$0xf]
  %v239 = vperm.slane %v237, 0
  %v240 = vperm.slane %v237, 1
  %v241 = vperm.slane %v237, 2
  %v242 = vperm.slane %v237, 3
  %v247 = vmul.f32 %v234, %v239
  %v248 = vmul.f32 %v232, %v240
  %v249 = vmul.f32 %v230, %v241
  %v250 = vmul.f32 %v228, %v242
  %v251 = vmul.f32 %v235, %v239
  %v252 = vmul.f32 %v233, %v240
  %v253 = vmul.f32 %v231, %v241
  %v254 = vmul.f32 %v229, %v242
  %v255 = vpack.c.bf16 %v248, %v247
  %v256 = vpack.c.bf16 %v250, %v249
  %v257 = vpack.c.bf16 %v252, %v251
  %v258 = vpack.c.bf16 %v254, %v253
  %259 = vst [vmem:[#allocation2 + $0x60] sm:$0xff] %v255
  %260 = vst [vmem:[#allocation2 + $0x68] sm:$0xff] %v256
  %261 = vst [vmem:[#allocation2 + $0x70] sm:$0xff] %v257
  %262 = vst [vmem:[#allocation2 + $0x78] sm:$0xff] %v258
  %263 = vst [vmem:[#allocation2 + $0x80] sm:$0xff] %v42
  %264 = vst [vmem:[#allocation2 + $0x88] sm:$0xff] %v43
  %265 = vst [vmem:[#allocation2 + $0x90] sm:$0xff] %v44
  %266 = vst [vmem:[#allocation2 + $0x98] sm:$0xff] %v45
  %267 = vrot.lane.b32.xlu0 %v46, 127
  %v268 = vpop.permute.xlu0 %267
  %269 = vrot.lane.b32.xlu0 %v50, 127
  %v270 = vpop.permute.xlu0 %269
  %271 = vrot.lane.b32.xlu0 %v47, 127
  %v272 = vpop.permute.xlu0 %271
  %273 = vrot.lane.b32.xlu0 %v51, 127
  %v274 = vpop.permute.xlu0 %273
  %275 = vrot.lane.b32.xlu0 %v48, 127
  %v276 = vpop.permute.xlu0 %275
  %277 = vrot.lane.b32.xlu0 %v52, 127
  %v278 = vpop.permute.xlu0 %277
  %279 = vrot.lane.b32.xlu0 %v49, 127
  %v280 = vpop.permute.xlu0 %279
  %281 = vrot.lane.b32.xlu0 %v53, 127
  %v282 = vpop.permute.xlu0 %281
  %vm283 = vcmp.lt.s32.totalorder %v71, 127
  %v284 = vsel %vm283, %v276, %v280
  %v285 = vsel %vm283, %v278, %v282
  %v286 = vsel %vm283, %v272, %v276
  %v287 = vsel %vm283, %v274, %v278
  %v288 = vsel %vm283, %v268, %v272
  %v289 = vsel %vm283, %v270, %v274
  %v290 = vsel %vm283, %v280, %v268
  %v291 = vsel %vm283, %v282, %v270
  %s292 = scalar_lea.vmem %s0, 5
  %v293 = vld [vmem:[%s292] ss:$8 sm:$0xf]
  %v295 = vperm.slane %v293, 0
  %v296 = vperm.slane %v293, 1
  %v297 = vperm.slane %v293, 2
  %v298 = vperm.slane %v293, 3
  %v303 = vmul.f32 %v288, %v295
  %v304 = vmul.f32 %v286, %v296
  %v305 = vmul.f32 %v284, %v297
  %v306 = vmul.f32 %v290, %v298
  %v307 = vmul.f32 %v289, %v295
  %v308 = vmul.f32 %v287, %v296
  %v309 = vmul.f32 %v285, %v297
  %v310 = vmul.f32 %v291, %v298
  %v311 = vpack.c.bf16 %v304, %v303
  %v312 = vpack.c.bf16 %v306, %v305
  %v313 = vpack.c.bf16 %v308, %v307
  %v314 = vpack.c.bf16 %v310, %v309
  %315 = vst [vmem:[#allocation2 + $0xa0] sm:$0xff] %v311
  %316 = vst [vmem:[#allocation2 + $0xa8] sm:$0xff] %v312
  %317 = vst [vmem:[#allocation2 + $0xb0] sm:$0xff] %v313
  %318 = vst [vmem:[#allocation2 + $0xb8] sm:$0xff] %v314
  %319 = vrot.lane.b32.xlu0 %v46, 113
  %v320 = vpop.permute.xlu0 %319
  %321 = vrot.lane.b32.xlu0 %v50, 113
  %v322 = vpop.permute.xlu0 %321
  %323 = vrot.lane.b32.xlu0 %v47, 113
  %v324 = vpop.permute.xlu0 %323
  %325 = vrot.lane.b32.xlu0 %v51, 113
  %v326 = vpop.permute.xlu0 %325
  %327 = vrot.lane.b32.xlu0 %v48, 113
  %v328 = vpop.permute.xlu0 %327
  %329 = vrot.lane.b32.xlu0 %v52, 113
  %v330 = vpop.permute.xlu0 %329
  %331 = vrot.lane.b32.xlu0 %v49, 113
  %v332 = vpop.permute.xlu0 %331
  %333 = vrot.lane.b32.xlu0 %v53, 113
  %v334 = vpop.permute.xlu0 %333
  %vm335 = vcmp.lt.s32.totalorder %v71, 113
  %v336 = vsel %vm335, %v328, %v332
  %v337 = vsel %vm335, %v330, %v334
  %v338 = vsel %vm335, %v324, %v328
  %v339 = vsel %vm335, %v326, %v330
  %v340 = vsel %vm335, %v320, %v324
  %v341 = vsel %vm335, %v322, %v326
  %v342 = vsel %vm335, %v332, %v320
  %v343 = vsel %vm335, %v334, %v322
  %s344 = scalar_lea.vmem %s0, 6
  %v345 = vld [vmem:[%s344] ss:$8 sm:$0xf]
  %v347 = vperm.slane %v345, 0
  %v348 = vperm.slane %v345, 1
  %v349 = vperm.slane %v345, 2
  %v350 = vperm.slane %v345, 3
  %v355 = vmul.f32 %v340, %v347
  %v356 = vmul.f32 %v338, %v348
  %v357 = vmul.f32 %v336, %v349
  %v358 = vmul.f32 %v342, %v350
  %v359 = vmul.f32 %v341, %v347
  %v360 = vmul.f32 %v339, %v348
  %v361 = vmul.f32 %v337, %v349
  %v362 = vmul.f32 %v343, %v350
  %v363 = vpack.c.bf16 %v356, %v355
  %v364 = vpack.c.bf16 %v358, %v357
  %v365 = vpack.c.bf16 %v360, %v359
  %v366 = vpack.c.bf16 %v362, %v361
  %367 = vst [vmem:[#allocation2 + $0xc0] sm:$0xff] %v363
  %368 = vst [vmem:[#allocation2 + $0xc8] sm:$0xff] %v364
  %369 = vst [vmem:[#allocation2 + $0xd0] sm:$0xff] %v365
  %370 = vst [vmem:[#allocation2 + $0xd8] sm:$0xff] %v366
  %371 = vrot.lane.b32.xlu0 %v46, 112
  %v372 = vpop.permute.xlu0 %371
  %373 = vrot.lane.b32.xlu0 %v50, 112
  %v374 = vpop.permute.xlu0 %373
  %375 = vrot.lane.b32.xlu0 %v47, 112
  %v376 = vpop.permute.xlu0 %375
  %377 = vrot.lane.b32.xlu0 %v51, 112
  %v378 = vpop.permute.xlu0 %377
  %379 = vrot.lane.b32.xlu0 %v48, 112
  %v380 = vpop.permute.xlu0 %379
  %381 = vrot.lane.b32.xlu0 %v52, 112
  %v382 = vpop.permute.xlu0 %381
  %383 = vrot.lane.b32.xlu0 %v49, 112
  %v384 = vpop.permute.xlu0 %383
  %385 = vrot.lane.b32.xlu0 %v53, 112
  %v386 = vpop.permute.xlu0 %385
  %vm387 = vcmp.lt.s32.totalorder %v71, 112
  %v388 = vsel %vm387, %v380, %v384
  %v389 = vsel %vm387, %v382, %v386
  %v390 = vsel %vm387, %v376, %v380
  %v391 = vsel %vm387, %v378, %v382
  %v392 = vsel %vm387, %v372, %v376
  %v393 = vsel %vm387, %v374, %v378
  %v394 = vsel %vm387, %v384, %v372
  %v395 = vsel %vm387, %v386, %v374
  %s396 = scalar_lea.vmem %s0, 7
  %v397 = vld [vmem:[%s396] ss:$8 sm:$0xf]
  %v399 = vperm.slane %v397, 0
  %v400 = vperm.slane %v397, 1
  %v401 = vperm.slane %v397, 2
  %v402 = vperm.slane %v397, 3
  %v407 = vmul.f32 %v392, %v399
  %v408 = vmul.f32 %v390, %v400
  %v409 = vmul.f32 %v388, %v401
  %v410 = vmul.f32 %v394, %v402
  %v411 = vmul.f32 %v393, %v399
  %v412 = vmul.f32 %v391, %v400
  %v413 = vmul.f32 %v389, %v401
  %v414 = vmul.f32 %v395, %v402
  %v415 = vpack.c.bf16 %v408, %v407
  %v416 = vpack.c.bf16 %v410, %v409
  %v417 = vpack.c.bf16 %v412, %v411
  %v418 = vpack.c.bf16 %v414, %v413
  %419 = vst [vmem:[#allocation2 + $0xe0] sm:$0xff] %v415
  %420 = vst [vmem:[#allocation2 + $0xe8] sm:$0xff] %v416
  %421 = vst [vmem:[#allocation2 + $0xf0] sm:$0xff] %v417
  %422 = vst [vmem:[#allocation2 + $0xf8] sm:$0xff] %v418
  %423 = vrot.lane.b32.xlu0 %v46, 111
  %v424 = vpop.permute.xlu0 %423
  %425 = vrot.lane.b32.xlu0 %v50, 111
  %v426 = vpop.permute.xlu0 %425
  %427 = vrot.lane.b32.xlu0 %v47, 111
  %v428 = vpop.permute.xlu0 %427
  %429 = vrot.lane.b32.xlu0 %v51, 111
  %v430 = vpop.permute.xlu0 %429
  %431 = vrot.lane.b32.xlu0 %v48, 111
  %v432 = vpop.permute.xlu0 %431
  %433 = vrot.lane.b32.xlu0 %v52, 111
  %v434 = vpop.permute.xlu0 %433
  %435 = vrot.lane.b32.xlu0 %v49, 111
  %v436 = vpop.permute.xlu0 %435
  %437 = vrot.lane.b32.xlu0 %v53, 111
  %v438 = vpop.permute.xlu0 %437
  %vm439 = vcmp.lt.s32.totalorder %v71, 111
  %v440 = vsel %vm439, %v432, %v436
  %v441 = vsel %vm439, %v434, %v438
  %v442 = vsel %vm439, %v428, %v432
  %v443 = vsel %vm439, %v430, %v434
  %v444 = vsel %vm439, %v424, %v428
  %v445 = vsel %vm439, %v426, %v430
  %v446 = vsel %vm439, %v436, %v424
  %v447 = vsel %vm439, %v438, %v426
  %s448 = scalar_lea.vmem %s0, 32
  %v449 = vld [vmem:[%s448] ss:$8 sm:$0xf]
  %v451 = vperm.slane %v449, 0
  %v452 = vperm.slane %v449, 1
  %v453 = vperm.slane %v449, 2
  %v454 = vperm.slane %v449, 3
  %v459 = vmul.f32 %v444, %v451
  %v460 = vmul.f32 %v442, %v452
  %v461 = vmul.f32 %v440, %v453
  %v462 = vmul.f32 %v446, %v454
  %v463 = vmul.f32 %v445, %v451
  %v464 = vmul.f32 %v443, %v452
  %v465 = vmul.f32 %v441, %v453
  %v466 = vmul.f32 %v447, %v454
  %v467 = vpack.c.bf16 %v460, %v459
  %v468 = vpack.c.bf16 %v462, %v461
  %v469 = vpack.c.bf16 %v464, %v463
  %v470 = vpack.c.bf16 %v466, %v465
  %471 = vst [vmem:[#allocation2 + $0x100] sm:$0xff] %v467
  %472 = vst [vmem:[#allocation2 + $0x108] sm:$0xff] %v468
  %473 = vst [vmem:[#allocation2 + $0x110] sm:$0xff] %v469
  %474 = vst [vmem:[#allocation2 + $0x118] sm:$0xff] %v470
  %v475 = vld [vmem:[%s2] sm:$0xff]
  %v476 = vld [vmem:[%s2 + $0x8] sm:$0xff]
  %v477 = vld [vmem:[%s3] sm:$0xff]
  %v478 = vld [vmem:[%s3 + $0x8] sm:$0xff]
  %v479 = vld [vmem:[#allocation2] sm:$0xff]
  %v480 = vld [vmem:[#allocation2 + $0x8] sm:$0xff]
  %v481 = vld [vmem:[#allocation2 + $0x10] sm:$0xff]
  %v482 = vld [vmem:[#allocation2 + $0x18] sm:$0xff]
  %v483 = vld [vmem:[#allocation2 + $0x20] sm:$0xff]
  %v484 = vld [vmem:[#allocation2 + $0x28] sm:$0xff]
  %v485 = vld [vmem:[#allocation2 + $0x30] sm:$0xff]
  %v486 = vld [vmem:[#allocation2 + $0x38] sm:$0xff]
  %v487 = vld [vmem:[#allocation2 + $0x40] sm:$0xff]
  %v488 = vld [vmem:[#allocation2 + $0x48] sm:$0xff]
  %v489 = vld [vmem:[#allocation2 + $0x50] sm:$0xff]
  %v490 = vld [vmem:[#allocation2 + $0x58] sm:$0xff]
  %v491 = vld [vmem:[#allocation2 + $0x60] sm:$0xff]
  %v492 = vld [vmem:[#allocation2 + $0x68] sm:$0xff]
  %v493 = vld [vmem:[#allocation2 + $0x70] sm:$0xff]
  %v494 = vld [vmem:[#allocation2 + $0x78] sm:$0xff]
  %v495 = vld [vmem:[#allocation2 + $0x80] sm:$0xff]
  %v496 = vld [vmem:[#allocation2 + $0x88] sm:$0xff]
  %v497 = vld [vmem:[#allocation2 + $0x90] sm:$0xff]
  %v498 = vld [vmem:[#allocation2 + $0x98] sm:$0xff]
  %v499 = vld [vmem:[#allocation2 + $0xa0] sm:$0xff]
  %v500 = vld [vmem:[#allocation2 + $0xa8] sm:$0xff]
  %v501 = vld [vmem:[#allocation2 + $0xb0] sm:$0xff]
  %v502 = vld [vmem:[#allocation2 + $0xb8] sm:$0xff]
  %v503 = vld [vmem:[#allocation2 + $0xc0] sm:$0xff]
  %v504 = vld [vmem:[#allocation2 + $0xc8] sm:$0xff]
  %v505 = vld [vmem:[#allocation2 + $0xd0] sm:$0xff]
  %v506 = vld [vmem:[#allocation2 + $0xd8] sm:$0xff]
  %v507 = vld [vmem:[#allocation2 + $0xe0] sm:$0xff]
  %v508 = vld [vmem:[#allocation2 + $0xe8] sm:$0xff]
  %v509 = vld [vmem:[#allocation2 + $0xf0] sm:$0xff]
  %v510 = vld [vmem:[#allocation2 + $0xf8] sm:$0xff]
  %v511 = vld [vmem:[#allocation2 + $0x100] sm:$0xff]
  %v512 = vld [vmem:[#allocation2 + $0x108] sm:$0xff]
  %v513 = vld [vmem:[#allocation2 + $0x110] sm:$0xff]
  %v514 = vld [vmem:[#allocation2 + $0x118] sm:$0xff]
  %516 = vset.pattern.permute.xlu0 0
  %517 = vperm.xlu0 %516, %v477
  %v518 = vpop.permute.xlu0 %517
  %521 = vset.pattern.permute.xlu0 0
  %522 = vperm.xlu0 %521, %v478
  %v523 = vpop.permute.xlu0 %522
  %v527 = vunpack.c.l.b16 %v475
  %v528 = vunpack.c.h.b16 %v475
  %v529 = vunpack.c.l.b16 %v476
  %v530 = vunpack.c.h.b16 %v476
  %v531 = vpack.c.b16 %v529, %v527
  %v532 = vpack.c.b16 %v530, %v528
  %v570 = vunpack.c.l.b16 %v479
  %v571 = vunpack.c.h.b16 %v479
  %v572 = vunpack.c.l.b16 %v480
  %v573 = vunpack.c.h.b16 %v480
  %v574 = vunpack.c.l.b16 %v481
  %v575 = vunpack.c.h.b16 %v481
  %v576 = vunpack.c.l.b16 %v482
  %v577 = vunpack.c.h.b16 %v482
  %v578 = vunpack.c.l.b16 %v483
  %v579 = vunpack.c.h.b16 %v483
  %v580 = vunpack.c.l.b16 %v484
  %v581 = vunpack.c.h.b16 %v484
  %v582 = vunpack.c.l.b16 %v485
  %v583 = vunpack.c.h.b16 %v485
  %v584 = vunpack.c.l.b16 %v486
  %v585 = vunpack.c.h.b16 %v486
  %v586 = vunpack.c.l.b16 %v487
  %v587 = vunpack.c.h.b16 %v487
  %v588 = vunpack.c.l.b16 %v488
  %v589 = vunpack.c.h.b16 %v488
  %v590 = vunpack.c.l.b16 %v489
  %v591 = vunpack.c.h.b16 %v489
  %v592 = vunpack.c.l.b16 %v490
  %v593 = vunpack.c.h.b16 %v490
  %v594 = vunpack.c.l.b16 %v491
  %v595 = vunpack.c.h.b16 %v491
  %v596 = vunpack.c.l.b16 %v492
  %v597 = vunpack.c.h.b16 %v492
  %v598 = vunpack.c.l.b16 %v493
  %v599 = vunpack.c.h.b16 %v493
  %v600 = vunpack.c.l.b16 %v494
  %v601 = vunpack.c.h.b16 %v494
  %v602 = vunpack.c.l.b16 %v495
  %v603 = vunpack.c.h.b16 %v495
  %v604 = vunpack.c.l.b16 %v496
  %v605 = vunpack.c.h.b16 %v496
  %v606 = vunpack.c.l.b16 %v497
  %v607 = vunpack.c.h.b16 %v497
  %v608 = vunpack.c.l.b16 %v498
  %v609 = vunpack.c.h.b16 %v498
  %v610 = vunpack.c.l.b16 %v499
  %v611 = vunpack.c.h.b16 %v499
  %v612 = vunpack.c.l.b16 %v500
  %v613 = vunpack.c.h.b16 %v500
  %v614 = vunpack.c.l.b16 %v501
  %v615 = vunpack.c.h.b16 %v501
  %v616 = vunpack.c.l.b16 %v502
  %v617 = vunpack.c.h.b16 %v502
  %v618 = vunpack.c.l.b16 %v503
  %v619 = vunpack.c.h.b16 %v503
  %v620 = vunpack.c.l.b16 %v504
  %v621 = vunpack.c.h.b16 %v504
  %v622 = vunpack.c.l.b16 %v505
  %v623 = vunpack.c.h.b16 %v505
  %v624 = vunpack.c.l.b16 %v506
  %v625 = vunpack.c.h.b16 %v506
  %v626 = vunpack.c.l.b16 %v507
  %v627 = vunpack.c.h.b16 %v507
  %v628 = vunpack.c.l.b16 %v508
  %v629 = vunpack.c.h.b16 %v508
  %v630 = vunpack.c.l.b16 %v509
  %v631 = vunpack.c.h.b16 %v509
  %v632 = vunpack.c.l.b16 %v510
  %v633 = vunpack.c.h.b16 %v510
  %v634 = vunpack.c.l.b16 %v511
  %v635 = vunpack.c.h.b16 %v511
  %v636 = vunpack.c.l.b16 %v512
  %v637 = vunpack.c.h.b16 %v512
  %v638 = vunpack.c.l.b16 %v513
  %v639 = vunpack.c.h.b16 %v513
  %v640 = vunpack.c.l.b16 %v514
  %v641 = vunpack.c.h.b16 %v514
  %v642 = vpack.c.b16 %v574, %v570
  %v643 = vpack.c.b16 %v575, %v571
  %v644 = vpack.c.b16 %v576, %v572
  %v645 = vpack.c.b16 %v577, %v573
  %v646 = vpack.c.b16 %v582, %v578
  %v647 = vpack.c.b16 %v583, %v579
  %v648 = vpack.c.b16 %v584, %v580
  %v649 = vpack.c.b16 %v585, %v581
  %v650 = vpack.c.b16 %v590, %v586
  %v651 = vpack.c.b16 %v591, %v587
  %v652 = vpack.c.b16 %v592, %v588
  %v653 = vpack.c.b16 %v593, %v589
  %v654 = vpack.c.b16 %v598, %v594
  %v655 = vpack.c.b16 %v599, %v595
  %v656 = vpack.c.b16 %v600, %v596
  %v657 = vpack.c.b16 %v601, %v597
  %v658 = vpack.c.b16 %v606, %v602
  %v659 = vpack.c.b16 %v607, %v603
  %v660 = vpack.c.b16 %v608, %v604
  %v661 = vpack.c.b16 %v609, %v605
  %v662 = vpack.c.b16 %v614, %v610
  %v663 = vpack.c.b16 %v615, %v611
  %v664 = vpack.c.b16 %v616, %v612
  %v665 = vpack.c.b16 %v617, %v613
  %v666 = vpack.c.b16 %v622, %v618
  %v667 = vpack.c.b16 %v623, %v619
  %v668 = vpack.c.b16 %v624, %v620
  %v669 = vpack.c.b16 %v625, %v621
  %v670 = vpack.c.b16 %v630, %v626
  %v671 = vpack.c.b16 %v631, %v627
  %v672 = vpack.c.b16 %v632, %v628
  %v673 = vpack.c.b16 %v633, %v629
  %v674 = vpack.c.b16 %v638, %v634
  %v675 = vpack.c.b16 %v639, %v635
  %v676 = vpack.c.b16 %v640, %v636
  %v677 = vpack.c.b16 %v641, %v637
  %vm714 = vcmask 130048
  %v716 = vsel %vm714, %v532, 0
  %718 = vmatpush.bf16.msra.mxu0 %v670
  %719 = vmatpush.bf16.msra.mxu0 %v666
  %720 = vmatpush.bf16.msra.mxu0 %v662
  %721 = vmatpush.bf16.msra.mxu0 %v658
  %722 = vmatpush.bf16.msra.mxu0 %v654
  %723 = vmatpush.bf16.msra.mxu0 %v650
  %724 = vmatpush.bf16.msra.mxu0 %v646
  %725 = vmatpush.bf16.msra.mxu0 %v642
  %726 = vmatmul.bf16.gmra.mxu0 %v531
  %v727 = vpop.f32.mrf.mxu0
  %v728 = vadd.f32 %v518, %v727
  %v729 = vpop.f32.mrf.mxu0
  %v730 = vadd.f32 %v523, %v729
  %731 = vdwg.mxu0
  %732 = vmatpush.bf16.msra.mxu0 0
  %733 = vmatpush.bf16.msra.mxu0 0
  %734 = vmatpush.bf16.msra.mxu0 0
  %735 = vmatpush.bf16.msra.mxu0 0
  %736 = vmatpush.bf16.msra.mxu0 0
  %737 = vmatpush.bf16.msra.mxu0 0
  %738 = vmatpush.bf16.msra.mxu0 0
  %739 = vmatpush.bf16.msra.mxu0 %v674
  %740 = vmatmul.bf16.gmra.mxu0 %v716
  %v741 = vpop.f32.mrf.mxu0
  %v742 = vadd.f32 %v728, %v741
  %v743 = vpop.f32.mrf.mxu0
  %v744 = vadd.f32 %v730, %v743
  %745 = vdwg.mxu0
  %746 = vmatpush.bf16.msra.mxu0 %v671
  %747 = vmatpush.bf16.msra.mxu0 %v667
  %748 = vmatpush.bf16.msra.mxu0 %v663
  %749 = vmatpush.bf16.msra.mxu0 %v659
  %750 = vmatpush.bf16.msra.mxu0 %v655
  %751 = vmatpush.bf16.msra.mxu0 %v651
  %752 = vmatpush.bf16.msra.mxu0 %v647
  %753 = vmatpush.bf16.msra.mxu0 %v643
  %754 = vmatmul.bf16.gmra.mxu0 %v531
  %v755 = vpop.f32.mrf.mxu0
  %v756 = vadd.f32 %v518, %v755
  %v757 = vpop.f32.mrf.mxu0
  %v758 = vadd.f32 %v523, %v757
  %759 = vdwg.mxu0
  %760 = vmatpush.bf16.msra.mxu0 0
  %761 = vmatpush.bf16.msra.mxu0 0
  %762 = vmatpush.bf16.msra.mxu0 0
  %763 = vmatpush.bf16.msra.mxu0 0
  %764 = vmatpush.bf16.msra.mxu0 0
  %765 = vmatpush.bf16.msra.mxu0 0
  %766 = vmatpush.bf16.msra.mxu0 0
  %767 = vmatpush.bf16.msra.mxu0 %v675
  %768 = vmatmul.bf16.gmra.mxu0 %v716
  %v769 = vpop.f32.mrf.mxu0
  %v770 = vadd.f32 %v756, %v769
  %v771 = vpop.f32.mrf.mxu0
  %v772 = vadd.f32 %v758, %v771
  %773 = vdwg.mxu0
  %774 = vmatpush.bf16.msra.mxu0 %v672
  %775 = vmatpush.bf16.msra.mxu0 %v668
  %776 = vmatpush.bf16.msra.mxu0 %v664
  %777 = vmatpush.bf16.msra.mxu0 %v660
  %778 = vmatpush.bf16.msra.mxu0 %v656
  %779 = vmatpush.bf16.msra.mxu0 %v652
  %780 = vmatpush.bf16.msra.mxu0 %v648
  %781 = vmatpush.bf16.msra.mxu0 %v644
  %782 = vmatmul.bf16.gmra.mxu0 %v531
  %v783 = vpop.f32.mrf.mxu0
  %v784 = vadd.f32 %v518, %v783
  %v785 = vpop.f32.mrf.mxu0
  %v786 = vadd.f32 %v523, %v785
  %787 = vdwg.mxu0
  %788 = vmatpush.bf16.msra.mxu0 0
  %789 = vmatpush.bf16.msra.mxu0 0
  %790 = vmatpush.bf16.msra.mxu0 0
  %791 = vmatpush.bf16.msra.mxu0 0
  %792 = vmatpush.bf16.msra.mxu0 0
  %793 = vmatpush.bf16.msra.mxu0 0
  %794 = vmatpush.bf16.msra.mxu0 0
  %795 = vmatpush.bf16.msra.mxu0 %v676
  %796 = vmatmul.bf16.gmra.mxu0 %v716
  %v797 = vpop.f32.mrf.mxu0
  %v798 = vadd.f32 %v784, %v797
  %v799 = vpop.f32.mrf.mxu0
  %v800 = vadd.f32 %v786, %v799
  %801 = vdwg.mxu0
  %802 = vmatpush.bf16.msra.mxu0 %v673
  %803 = vmatpush.bf16.msra.mxu0 %v669
  %804 = vmatpush.bf16.msra.mxu0 %v665
  %805 = vmatpush.bf16.msra.mxu0 %v661
  %806 = vmatpush.bf16.msra.mxu0 %v657
  %807 = vmatpush.bf16.msra.mxu0 %v653
  %808 = vmatpush.bf16.msra.mxu0 %v649
  %809 = vmatpush.bf16.msra.mxu0 %v645
  %810 = vmatmul.bf16.gmra.mxu0 %v531
  %v811 = vpop.f32.mrf.mxu0
  %v812 = vadd.f32 %v518, %v811
  %v813 = vpop.f32.mrf.mxu0
  %v814 = vadd.f32 %v523, %v813
  %815 = vdwg.mxu0
  %816 = vmatpush.bf16.msra.mxu0 0
  %817 = vmatpush.bf16.msra.mxu0 0
  %818 = vmatpush.bf16.msra.mxu0 0
  %819 = vmatpush.bf16.msra.mxu0 0
  %820 = vmatpush.bf16.msra.mxu0 0
  %821 = vmatpush.bf16.msra.mxu0 0
  %822 = vmatpush.bf16.msra.mxu0 0
  %823 = vmatpush.bf16.msra.mxu0 %v677
  %824 = vmatmul.bf16.gmra.mxu0 %v716
  %v825 = vpop.f32.mrf.mxu0
  %v826 = vadd.f32 %v812, %v825
  %v827 = vpop.f32.mrf.mxu0
  %v828 = vadd.f32 %v814, %v827
  %829 = vdwg.mxu0
  %v830 = vmax.f32 %v742, 0.0
  %v831 = vmax.f32 %v770, 0.0
  %v832 = vmax.f32 %v798, 0.0
  %v833 = vmax.f32 %v826, 0.0
  %v834 = vmax.f32 %v744, 0.0
  %v835 = vmax.f32 %v772, 0.0
  %v836 = vmax.f32 %v800, 0.0
  %v837 = vmax.f32 %v828, 0.0
  %838 = vrot.lane.b32.xlu0 %v830, 17
  %v839 = vpop.permute.xlu0 %838
  %840 = vrot.lane.b32.xlu0 %v834, 17
  %v841 = vpop.permute.xlu0 %840
  %842 = vrot.lane.b32.xlu0 %v831, 17
  %v843 = vpop.permute.xlu0 %842
  %844 = vrot.lane.b32.xlu0 %v835, 17
  %v845 = vpop.permute.xlu0 %844
  %846 = vrot.lane.b32.xlu0 %v832, 17
  %v847 = vpop.permute.xlu0 %846
  %848 = vrot.lane.b32.xlu0 %v836, 17
  %v849 = vpop.permute.xlu0 %848
  %850 = vrot.lane.b32.xlu0 %v833, 17
  %v851 = vpop.permute.xlu0 %850
  %852 = vrot.lane.b32.xlu0 %v837, 17
  %v853 = vpop.permute.xlu0 %852
  %v854 = vsel %vm72, %v847, %v851
  %v855 = vsel %vm72, %v849, %v853
  %v856 = vsel %vm72, %v843, %v847
  %v857 = vsel %vm72, %v845, %v849
  %v858 = vsel %vm72, %v839, %v843
  %v859 = vsel %vm72, %v841, %v845
  %v860 = vsel %vm72, %v851, %v839
  %v861 = vsel %vm72, %v853, %v841
  %v862 = vld [vmem:[%s0] ss:$8 sm:$0xf]
  %v864 = vperm.slane %v862, 0
  %v865 = vperm.slane %v862, 1
  %v866 = vperm.slane %v862, 2
  %v867 = vperm.slane %v862, 3
  %v872 = vmul.f32 %v860, %v864
  %v873 = vmul.f32 %v858, %v865
  %v874 = vmul.f32 %v856, %v866
  %v875 = vmul.f32 %v854, %v867
  %v876 = vmul.f32 %v861, %v864
  %v877 = vmul.f32 %v859, %v865
  %v878 = vmul.f32 %v857, %v866
  %v879 = vmul.f32 %v855, %v867
  %v880 = vpack.c.bf16 %v873, %v872
  %v881 = vpack.c.bf16 %v875, %v874
  %v882 = vpack.c.bf16 %v877, %v876
  %v883 = vpack.c.bf16 %v879, %v878
  %884 = vst [vmem:[#allocation2 + $0x120] sm:$0xff] %v880
  %885 = vst [vmem:[#allocation2 + $0x128] sm:$0xff] %v881
  %886 = vst [vmem:[#allocation2 + $0x130] sm:$0xff] %v882
  %887 = vst [vmem:[#allocation2 + $0x138] sm:$0xff] %v883
  %888 = vrot.lane.b32.xlu0 %v830, 16
  %v889 = vpop.permute.xlu0 %888
  %890 = vrot.lane.b32.xlu0 %v834, 16
  %v891 = vpop.permute.xlu0 %890
  %892 = vrot.lane.b32.xlu0 %v831, 16
  %v893 = vpop.permute.xlu0 %892
  %894 = vrot.lane.b32.xlu0 %v835, 16
  %v895 = vpop.permute.xlu0 %894
  %896 = vrot.lane.b32.xlu0 %v832, 16
  %v897 = vpop.permute.xlu0 %896
  %898 = vrot.lane.b32.xlu0 %v836, 16
  %v899 = vpop.permute.xlu0 %898
  %900 = vrot.lane.b32.xlu0 %v833, 16
  %v901 = vpop.permute.xlu0 %900
  %902 = vrot.lane.b32.xlu0 %v837, 16
  %v903 = vpop.permute.xlu0 %902
  %v904 = vsel %vm123, %v897, %v901
  %v905 = vsel %vm123, %v899, %v903
  %v906 = vsel %vm123, %v893, %v897
  %v907 = vsel %vm123, %v895, %v899
  %v908 = vsel %vm123, %v889, %v893
  %v909 = vsel %vm123, %v891, %v895
  %v910 = vsel %vm123, %v901, %v889
  %v911 = vsel %vm123, %v903, %v891
  %v912 = vld [vmem:[%s132] ss:$8 sm:$0xf]
  %v914 = vperm.slane %v912, 0
  %v915 = vperm.slane %v912, 1
  %v916 = vperm.slane %v912, 2
  %v917 = vperm.slane %v912, 3
  %v922 = vmul.f32 %v910, %v914
  %v923 = vmul.f32 %v908, %v915
  %v924 = vmul.f32 %v906, %v916
  %v925 = vmul.f32 %v904, %v917
  %v926 = vmul.f32 %v911, %v914
  %v927 = vmul.f32 %v909, %v915
  %v928 = vmul.f32 %v907, %v916
  %v929 = vmul.f32 %v905, %v917
  %v930 = vpack.c.bf16 %v923, %v922
  %v931 = vpack.c.bf16 %v925, %v924
  %v932 = vpack.c.bf16 %v927, %v926
  %v933 = vpack.c.bf16 %v929, %v928
  %934 = vst [vmem:[#allocation2 + $0x140] sm:$0xff] %v930
  %935 = vst [vmem:[#allocation2 + $0x148] sm:$0xff] %v931
  %936 = vst [vmem:[#allocation2 + $0x150] sm:$0xff] %v932
  %937 = vst [vmem:[#allocation2 + $0x158] sm:$0xff] %v933
  %938 = vrot.lane.b32.xlu0 %v830, 15
  %v939 = vpop.permute.xlu0 %938
  %940 = vrot.lane.b32.xlu0 %v834, 15
  %v941 = vpop.permute.xlu0 %940
  %942 = vrot.lane.b32.xlu0 %v831, 15
  %v943 = vpop.permute.xlu0 %942
  %944 = vrot.lane.b32.xlu0 %v835, 15
  %v945 = vpop.permute.xlu0 %944
  %946 = vrot.lane.b32.xlu0 %v832, 15
  %v947 = vpop.permute.xlu0 %946
  %948 = vrot.lane.b32.xlu0 %v836, 15
  %v949 = vpop.permute.xlu0 %948
  %950 = vrot.lane.b32.xlu0 %v833, 15
  %v951 = vpop.permute.xlu0 %950
  %952 = vrot.lane.b32.xlu0 %v837, 15
  %v953 = vpop.permute.xlu0 %952
  %v954 = vsel %vm175, %v947, %v951
  %v955 = vsel %vm175, %v949, %v953
  %v956 = vsel %vm175, %v943, %v947
  %v957 = vsel %vm175, %v945, %v949
  %v958 = vsel %vm175, %v939, %v943
  %v959 = vsel %vm175, %v941, %v945
  %v960 = vsel %vm175, %v951, %v939
  %v961 = vsel %vm175, %v953, %v941
  %v962 = vld [vmem:[%s184] ss:$8 sm:$0xf]
  %v964 = vperm.slane %v962, 0
  %v965 = vperm.slane %v962, 1
  %v966 = vperm.slane %v962, 2
  %v967 = vperm.slane %v962, 3
  %v972 = vmul.f32 %v960, %v964
  %v973 = vmul.f32 %v958, %v965
  %v974 = vmul.f32 %v956, %v966
  %v975 = vmul.f32 %v954, %v967
  %v976 = vmul.f32 %v961, %v964
  %v977 = vmul.f32 %v959, %v965
  %v978 = vmul.f32 %v957, %v966
  %v979 = vmul.f32 %v955, %v967
  %v980 = vpack.c.bf16 %v973, %v972
  %v981 = vpack.c.bf16 %v975, %v974
  %v982 = vpack.c.bf16 %v977, %v976
  %v983 = vpack.c.bf16 %v979, %v978
  %984 = vst [vmem:[#allocation2 + $0x160] sm:$0xff] %v980
  %985 = vst [vmem:[#allocation2 + $0x168] sm:$0xff] %v981
  %986 = vst [vmem:[#allocation2 + $0x170] sm:$0xff] %v982
  %987 = vst [vmem:[#allocation2 + $0x178] sm:$0xff] %v983
  %988 = vrot.lane.b32.xlu0 %v830, 1
  %v989 = vpop.permute.xlu0 %988
  %990 = vrot.lane.b32.xlu0 %v834, 1
  %v991 = vpop.permute.xlu0 %990
  %992 = vrot.lane.b32.xlu0 %v831, 1
  %v993 = vpop.permute.xlu0 %992
  %994 = vrot.lane.b32.xlu0 %v835, 1
  %v995 = vpop.permute.xlu0 %994
  %996 = vrot.lane.b32.xlu0 %v832, 1
  %v997 = vpop.permute.xlu0 %996
  %998 = vrot.lane.b32.xlu0 %v836, 1
  %v999 = vpop.permute.xlu0 %998
  %1000 = vrot.lane.b32.xlu0 %v833, 1
  %v1001 = vpop.permute.xlu0 %1000
  %1002 = vrot.lane.b32.xlu0 %v837, 1
  %v1003 = vpop.permute.xlu0 %1002
  %v1004 = vsel %vm227, %v997, %v1001
  %v1005 = vsel %vm227, %v999, %v1003
  %v1006 = vsel %vm227, %v993, %v997
  %v1007 = vsel %vm227, %v995, %v999
  %v1008 = vsel %vm227, %v989, %v993
  %v1009 = vsel %vm227, %v991, %v995
  %v1010 = vsel %vm227, %v1001, %v989
  %v1011 = vsel %vm227, %v1003, %v991
  %v1012 = vld [vmem:[%s236] ss:$8 sm:$0xf]
  %v1014 = vperm.slane %v1012, 0
  %v1015 = vperm.slane %v1012, 1
  %v1016 = vperm.slane %v1012, 2
  %v1017 = vperm.slane %v1012, 3
  %v1022 = vmul.f32 %v1010, %v1014
  %v1023 = vmul.f32 %v1008, %v1015
  %v1024 = vmul.f32 %v1006, %v1016
  %v1025 = vmul.f32 %v1004, %v1017
  %v1026 = vmul.f32 %v1011, %v1014
  %v1027 = vmul.f32 %v1009, %v1015
  %v1028 = vmul.f32 %v1007, %v1016
  %v1029 = vmul.f32 %v1005, %v1017
  %v1030 = vpack.c.bf16 %v1023, %v1022
  %v1031 = vpack.c.bf16 %v1025, %v1024
  %v1032 = vpack.c.bf16 %v1027, %v1026
  %v1033 = vpack.c.bf16 %v1029, %v1028
  %1034 = vst [vmem:[#allocation2 + $0x180] sm:$0xff] %v1030
  %1035 = vst [vmem:[#allocation2 + $0x188] sm:$0xff] %v1031
  %1036 = vst [vmem:[#allocation2 + $0x190] sm:$0xff] %v1032
  %1037 = vst [vmem:[#allocation2 + $0x198] sm:$0xff] %v1033
  %v1038 = vpack.c.bf16 %v831, %v830
  %v1039 = vpack.c.bf16 %v833, %v832
  %v1040 = vpack.c.bf16 %v835, %v834
  %v1041 = vpack.c.bf16 %v837, %v836
  %1042 = vst [vmem:[#allocation2 + $0x1a0] sm:$0xff] %v1038
  %1043 = vst [vmem:[#allocation2 + $0x1a8] sm:$0xff] %v1039
  %1044 = vst [vmem:[#allocation2 + $0x1b0] sm:$0xff] %v1040
  %1045 = vst [vmem:[#allocation2 + $0x1b8] sm:$0xff] %v1041
  %1046 = vrot.lane.b32.xlu0 %v830, 127
  %v1047 = vpop.permute.xlu0 %1046
  %1048 = vrot.lane.b32.xlu0 %v834, 127
  %v1049 = vpop.permute.xlu0 %1048
  %1050 = vrot.lane.b32.xlu0 %v831, 127
  %v1051 = vpop.permute.xlu0 %1050
  %1052 = vrot.lane.b32.xlu0 %v835, 127
  %v1053 = vpop.permute.xlu0 %1052
  %1054 = vrot.lane.b32.xlu0 %v832, 127
  %v1055 = vpop.permute.xlu0 %1054
  %1056 = vrot.lane.b32.xlu0 %v836, 127
  %v1057 = vpop.permute.xlu0 %1056
  %1058 = vrot.lane.b32.xlu0 %v833, 127
  %v1059 = vpop.permute.xlu0 %1058
  %1060 = vrot.lane.b32.xlu0 %v837, 127
  %v1061 = vpop.permute.xlu0 %1060
  %v1062 = vsel %vm283, %v1055, %v1059
  %v1063 = vsel %vm283, %v1057, %v1061
  %v1064 = vsel %vm283, %v1051, %v1055
  %v1065 = vsel %vm283, %v1053, %v1057
  %v1066 = vsel %vm283, %v1047, %v1051
  %v1067 = vsel %vm283, %v1049, %v1053
  %v1068 = vsel %vm283, %v1059, %v1047
  %v1069 = vsel %vm283, %v1061, %v1049
  %v1070 = vld [vmem:[%s292] ss:$8 sm:$0xf]
  %v1072 = vperm.slane %v1070, 0
  %v1073 = vperm.slane %v1070, 1
  %v1074 = vperm.slane %v1070, 2
  %v1075 = vperm.slane %v1070, 3
  %v1080 = vmul.f32 %v1066, %v1072
  %v1081 = vmul.f32 %v1064, %v1073
  %v1082 = vmul.f32 %v1062, %v1074
  %v1083 = vmul.f32 %v1068, %v1075
  %v1084 = vmul.f32 %v1067, %v1072
  %v1085 = vmul.f32 %v1065, %v1073
  %v1086 = vmul.f32 %v1063, %v1074
  %v1087 = vmul.f32 %v1069, %v1075
  %v1088 = vpack.c.bf16 %v1081, %v1080
  %v1089 = vpack.c.bf16 %v1083, %v1082
  %v1090 = vpack.c.bf16 %v1085, %v1084
  %v1091 = vpack.c.bf16 %v1087, %v1086
  %1092 = vst [vmem:[#allocation2 + $0x1c0] sm:$0xff] %v1088
  %1093 = vst [vmem:[#allocation2 + $0x1c8] sm:$0xff] %v1089
  %1094 = vst [vmem:[#allocation2 + $0x1d0] sm:$0xff] %v1090
  %1095 = vst [vmem:[#allocation2 + $0x1d8] sm:$0xff] %v1091
  %1096 = vrot.lane.b32.xlu0 %v830, 113
  %v1097 = vpop.permute.xlu0 %1096
  %1098 = vrot.lane.b32.xlu0 %v834, 113
  %v1099 = vpop.permute.xlu0 %1098
  %1100 = vrot.lane.b32.xlu0 %v831, 113
  %v1101 = vpop.permute.xlu0 %1100
  %1102 = vrot.lane.b32.xlu0 %v835, 113
  %v1103 = vpop.permute.xlu0 %1102
  %1104 = vrot.lane.b32.xlu0 %v832, 113
  %v1105 = vpop.permute.xlu0 %1104
  %1106 = vrot.lane.b32.xlu0 %v836, 113
  %v1107 = vpop.permute.xlu0 %1106
  %1108 = vrot.lane.b32.xlu0 %v833, 113
  %v1109 = vpop.permute.xlu0 %1108
  %1110 = vrot.lane.b32.xlu0 %v837, 113
  %v1111 = vpop.permute.xlu0 %1110
  %v1112 = vsel %vm335, %v1105, %v1109
  %v1113 = vsel %vm335, %v1107, %v1111
  %v1114 = vsel %vm335, %v1101, %v1105
  %v1115 = vsel %vm335, %v1103, %v1107
  %v1116 = vsel %vm335, %v1097, %v1101
  %v1117 = vsel %vm335, %v1099, %v1103
  %v1118 = vsel %vm335, %v1109, %v1097
  %v1119 = vsel %vm335, %v1111, %v1099
  %v1120 = vld [vmem:[%s344] ss:$8 sm:$0xf]
  %v1122 = vperm.slane %v1120, 0
  %v1123 = vperm.slane %v1120, 1
  %v1124 = vperm.slane %v1120, 2
  %v1125 = vperm.slane %v1120, 3
  %v1130 = vmul.f32 %v1116, %v1122
  %v1131 = vmul.f32 %v1114, %v1123
  %v1132 = vmul.f32 %v1112, %v1124
  %v1133 = vmul.f32 %v1118, %v1125
  %v1134 = vmul.f32 %v1117, %v1122
  %v1135 = vmul.f32 %v1115, %v1123
  %v1136 = vmul.f32 %v1113, %v1124
  %v1137 = vmul.f32 %v1119, %v1125
  %v1138 = vpack.c.bf16 %v1131, %v1130
  %v1139 = vpack.c.bf16 %v1133, %v1132
  %v1140 = vpack.c.bf16 %v1135, %v1134
  %v1141 = vpack.c.bf16 %v1137, %v1136
  %1142 = vst [vmem:[#allocation2 + $0x1e0] sm:$0xff] %v1138
  %1143 = vst [vmem:[#allocation2 + $0x1e8] sm:$0xff] %v1139
  %1144 = vst [vmem:[#allocation2 + $0x1f0] sm:$0xff] %v1140
  %1145 = vst [vmem:[#allocation2 + $0x1f8] sm:$0xff] %v1141
  %1146 = vrot.lane.b32.xlu0 %v830, 112
  %v1147 = vpop.permute.xlu0 %1146
  %1148 = vrot.lane.b32.xlu0 %v834, 112
  %v1149 = vpop.permute.xlu0 %1148
  %1150 = vrot.lane.b32.xlu0 %v831, 112
  %v1151 = vpop.permute.xlu0 %1150
  %1152 = vrot.lane.b32.xlu0 %v835, 112
  %v1153 = vpop.permute.xlu0 %1152
  %1154 = vrot.lane.b32.xlu0 %v832, 112
  %v1155 = vpop.permute.xlu0 %1154
  %1156 = vrot.lane.b32.xlu0 %v836, 112
  %v1157 = vpop.permute.xlu0 %1156
  %1158 = vrot.lane.b32.xlu0 %v833, 112
  %v1159 = vpop.permute.xlu0 %1158
  %1160 = vrot.lane.b32.xlu0 %v837, 112
  %v1161 = vpop.permute.xlu0 %1160
  %v1162 = vsel %vm387, %v1155, %v1159
  %v1163 = vsel %vm387, %v1157, %v1161
  %v1164 = vsel %vm387, %v1151, %v1155
  %v1165 = vsel %vm387, %v1153, %v1157
  %v1166 = vsel %vm387, %v1147, %v1151
  %v1167 = vsel %vm387, %v1149, %v1153
  %v1168 = vsel %vm387, %v1159, %v1147
  %v1169 = vsel %vm387, %v1161, %v1149
  %v1170 = vld [vmem:[%s396] ss:$8 sm:$0xf]
  %v1172 = vperm.slane %v1170, 0
  %v1173 = vperm.slane %v1170, 1
  %v1174 = vperm.slane %v1170, 2
  %v1175 = vperm.slane %v1170, 3
  %v1180 = vmul.f32 %v1166, %v1172
  %v1181 = vmul.f32 %v1164, %v1173
  %v1182 = vmul.f32 %v1162, %v1174
  %v1183 = vmul.f32 %v1168, %v1175
  %v1184 = vmul.f32 %v1167, %v1172
  %v1185 = vmul.f32 %v1165, %v1173
  %v1186 = vmul.f32 %v1163, %v1174
  %v1187 = vmul.f32 %v1169, %v1175
  %v1188 = vpack.c.bf16 %v1181, %v1180
  %v1189 = vpack.c.bf16 %v1183, %v1182
  %v1190 = vpack.c.bf16 %v1185, %v1184
  %v1191 = vpack.c.bf16 %v1187, %v1186
  %1192 = vst [vmem:[#allocation2 + $0x200] sm:$0xff] %v1188
  %1193 = vst [vmem:[#allocation2 + $0x208] sm:$0xff] %v1189
  %1194 = vst [vmem:[#allocation2 + $0x210] sm:$0xff] %v1190
  %1195 = vst [vmem:[#allocation2 + $0x218] sm:$0xff] %v1191
  %1196 = vrot.lane.b32.xlu0 %v830, 111
  %v1197 = vpop.permute.xlu0 %1196
  %1198 = vrot.lane.b32.xlu0 %v834, 111
  %v1199 = vpop.permute.xlu0 %1198
  %1200 = vrot.lane.b32.xlu0 %v831, 111
  %v1201 = vpop.permute.xlu0 %1200
  %1202 = vrot.lane.b32.xlu0 %v835, 111
  %v1203 = vpop.permute.xlu0 %1202
  %1204 = vrot.lane.b32.xlu0 %v832, 111
  %v1205 = vpop.permute.xlu0 %1204
  %1206 = vrot.lane.b32.xlu0 %v836, 111
  %v1207 = vpop.permute.xlu0 %1206
  %1208 = vrot.lane.b32.xlu0 %v833, 111
  %v1209 = vpop.permute.xlu0 %1208
  %1210 = vrot.lane.b32.xlu0 %v837, 111
  %v1211 = vpop.permute.xlu0 %1210
  %v1212 = vsel %vm439, %v1205, %v1209
  %v1213 = vsel %vm439, %v1207, %v1211
  %v1214 = vsel %vm439, %v1201, %v1205
  %v1215 = vsel %vm439, %v1203, %v1207
  %v1216 = vsel %vm439, %v1197, %v1201
  %v1217 = vsel %vm439, %v1199, %v1203
  %v1218 = vsel %vm439, %v1209, %v1197
  %v1219 = vsel %vm439, %v1211, %v1199
  %v1220 = vld [vmem:[%s448] ss:$8 sm:$0xf]
  %v1222 = vperm.slane %v1220, 0
  %v1223 = vperm.slane %v1220, 1
  %v1224 = vperm.slane %v1220, 2
  %v1225 = vperm.slane %v1220, 3
  %v1230 = vmul.f32 %v1216, %v1222
  %v1231 = vmul.f32 %v1214, %v1223
  %v1232 = vmul.f32 %v1212, %v1224
  %v1233 = vmul.f32 %v1218, %v1225
  %v1234 = vmul.f32 %v1217, %v1222
  %v1235 = vmul.f32 %v1215, %v1223
  %v1236 = vmul.f32 %v1213, %v1224
  %v1237 = vmul.f32 %v1219, %v1225
  %v1238 = vpack.c.bf16 %v1231, %v1230
  %v1239 = vpack.c.bf16 %v1233, %v1232
  %v1240 = vpack.c.bf16 %v1235, %v1234
  %v1241 = vpack.c.bf16 %v1237, %v1236
  %1242 = vst [vmem:[#allocation2 + $0x220] sm:$0xff] %v1238
  %1243 = vst [vmem:[#allocation2 + $0x228] sm:$0xff] %v1239
  %1244 = vst [vmem:[#allocation2 + $0x230] sm:$0xff] %v1240
  %1245 = vst [vmem:[#allocation2 + $0x238] sm:$0xff] %v1241
  %v1246 = vld [vmem:[%s2 + $0x10] sm:$0xff]
  %v1247 = vld [vmem:[%s2 + $0x18] sm:$0xff]
  %v1248 = vld [vmem:[%s3 + $0x10] sm:$0xff]
  %v1249 = vld [vmem:[%s3 + $0x18] sm:$0xff]
  %v1250 = vld [vmem:[#allocation2] sm:$0xff]
  %v1251 = vld [vmem:[#allocation2 + $0x8] sm:$0xff]
  %v1252 = vld [vmem:[#allocation2 + $0x10] sm:$0xff]
  %v1253 = vld [vmem:[#allocation2 + $0x18] sm:$0xff]
  %v1254 = vld [vmem:[#allocation2 + $0x20] sm:$0xff]
  %v1255 = vld [vmem:[#allocation2 + $0x28] sm:$0xff]
  %v1256 = vld [vmem:[#allocation2 + $0x30] sm:$0xff]
  %v1257 = vld [vmem:[#allocation2 + $0x38] sm:$0xff]
  %v1258 = vld [vmem:[#allocation2 + $0x40] sm:$0xff]
  %v1259 = vld [vmem:[#allocation2 + $0x48] sm:$0xff]
  %v1260 = vld [vmem:[#allocation2 + $0x50] sm:$0xff]
  %v1261 = vld [vmem:[#allocation2 + $0x58] sm:$0xff]
  %v1262 = vld [vmem:[#allocation2 + $0x60] sm:$0xff]
  %v1263 = vld [vmem:[#allocation2 + $0x68] sm:$0xff]
  %v1264 = vld [vmem:[#allocation2 + $0x70] sm:$0xff]
  %v1265 = vld [vmem:[#allocation2 + $0x78] sm:$0xff]
  %v1266 = vld [vmem:[#allocation2 + $0x80] sm:$0xff]
  %v1267 = vld [vmem:[#allocation2 + $0x88] sm:$0xff]
  %v1268 = vld [vmem:[#allocation2 + $0x90] sm:$0xff]
  %v1269 = vld [vmem:[#allocation2 + $0x98] sm:$0xff]
  %v1270 = vld [vmem:[#allocation2 + $0xa0] sm:$0xff]
  %v1271 = vld [vmem:[#allocation2 + $0xa8] sm:$0xff]
  %v1272 = vld [vmem:[#allocation2 + $0xb0] sm:$0xff]
  %v1273 = vld [vmem:[#allocation2 + $0xb8] sm:$0xff]
  %v1274 = vld [vmem:[#allocation2 + $0xc0] sm:$0xff]
  %v1275 = vld [vmem:[#allocation2 + $0xc8] sm:$0xff]
  %v1276 = vld [vmem:[#allocation2 + $0xd0] sm:$0xff]
  %v1277 = vld [vmem:[#allocation2 + $0xd8] sm:$0xff]
  %v1278 = vld [vmem:[#allocation2 + $0xe0] sm:$0xff]
  %v1279 = vld [vmem:[#allocation2 + $0xe8] sm:$0xff]
  %v1280 = vld [vmem:[#allocation2 + $0xf0] sm:$0xff]
  %v1281 = vld [vmem:[#allocation2 + $0xf8] sm:$0xff]
  %v1282 = vld [vmem:[#allocation2 + $0x100] sm:$0xff]
  %v1283 = vld [vmem:[#allocation2 + $0x108] sm:$0xff]
  %v1284 = vld [vmem:[#allocation2 + $0x110] sm:$0xff]
  %v1285 = vld [vmem:[#allocation2 + $0x118] sm:$0xff]
  %1287 = vset.pattern.permute.xlu0 0
  %1288 = vperm.xlu0 %1287, %v1248
  %v1289 = vpop.permute.xlu0 %1288
  %1292 = vset.pattern.permute.xlu0 0
  %1293 = vperm.xlu0 %1292, %v1249
  %v1294 = vpop.permute.xlu0 %1293
  %v1298 = vunpack.c.l.b16 %v1246
  %v1299 = vunpack.c.h.b16 %v1246
  %v1300 = vunpack.c.l.b16 %v1247
  %v1301 = vunpack.c.h.b16 %v1247
  %v1302 = vpack.c.b16 %v1300, %v1298
  %v1303 = vpack.c.b16 %v1301, %v1299
  %v1341 = vunpack.c.l.b16 %v1250
  %v1342 = vunpack.c.h.b16 %v1250
  %v1343 = vunpack.c.l.b16 %v1251
  %v1344 = vunpack.c.h.b16 %v1251
  %v1345 = vunpack.c.l.b16 %v1252
  %v1346 = vunpack.c.h.b16 %v1252
  %v1347 = vunpack.c.l.b16 %v1253
  %v1348 = vunpack.c.h.b16 %v1253
  %v1349 = vunpack.c.l.b16 %v1254
  %v1350 = vunpack.c.h.b16 %v1254
  %v1351 = vunpack.c.l.b16 %v1255
  %v1352 = vunpack.c.h.b16 %v1255
  %v1353 = vunpack.c.l.b16 %v1256
  %v1354 = vunpack.c.h.b16 %v1256
  %v1355 = vunpack.c.l.b16 %v1257
  %v1356 = vunpack.c.h.b16 %v1257
  %v1357 = vunpack.c.l.b16 %v1258
  %v1358 = vunpack.c.h.b16 %v1258
  %v1359 = vunpack.c.l.b16 %v1259
  %v1360 = vunpack.c.h.b16 %v1259
  %v1361 = vunpack.c.l.b16 %v1260
  %v1362 = vunpack.c.h.b16 %v1260
  %v1363 = vunpack.c.l.b16 %v1261
  %v1364 = vunpack.c.h.b16 %v1261
  %v1365 = vunpack.c.l.b16 %v1262
  %v1366 = vunpack.c.h.b16 %v1262
  %v1367 = vunpack.c.l.b16 %v1263
  %v1368 = vunpack.c.h.b16 %v1263
  %v1369 = vunpack.c.l.b16 %v1264
  %v1370 = vunpack.c.h.b16 %v1264
  %v1371 = vunpack.c.l.b16 %v1265
  %v1372 = vunpack.c.h.b16 %v1265
  %v1373 = vunpack.c.l.b16 %v1266
  %v1374 = vunpack.c.h.b16 %v1266
  %v1375 = vunpack.c.l.b16 %v1267
  %v1376 = vunpack.c.h.b16 %v1267
  %v1377 = vunpack.c.l.b16 %v1268
  %v1378 = vunpack.c.h.b16 %v1268
  %v1379 = vunpack.c.l.b16 %v1269
  %v1380 = vunpack.c.h.b16 %v1269
  %v1381 = vunpack.c.l.b16 %v1270
  %v1382 = vunpack.c.h.b16 %v1270
  %v1383 = vunpack.c.l.b16 %v1271
  %v1384 = vunpack.c.h.b16 %v1271
  %v1385 = vunpack.c.l.b16 %v1272
  %v1386 = vunpack.c.h.b16 %v1272
  %v1387 = vunpack.c.l.b16 %v1273
  %v1388 = vunpack.c.h.b16 %v1273
  %v1389 = vunpack.c.l.b16 %v1274
  %v1390 = vunpack.c.h.b16 %v1274
  %v1391 = vunpack.c.l.b16 %v1275
  %v1392 = vunpack.c.h.b16 %v1275
  %v1393 = vunpack.c.l.b16 %v1276
  %v1394 = vunpack.c.h.b16 %v1276
  %v1395 = vunpack.c.l.b16 %v1277
  %v1396 = vunpack.c.h.b16 %v1277
  %v1397 = vunpack.c.l.b16 %v1278
  %v1398 = vunpack.c.h.b16 %v1278
  %v1399 = vunpack.c.l.b16 %v1279
  %v1400 = vunpack.c.h.b16 %v1279
  %v1401 = vunpack.c.l.b16 %v1280
  %v1402 = vunpack.c.h.b16 %v1280
  %v1403 = vunpack.c.l.b16 %v1281
  %v1404 = vunpack.c.h.b16 %v1281
  %v1405 = vunpack.c.l.b16 %v1282
  %v1406 = vunpack.c.h.b16 %v1282
  %v1407 = vunpack.c.l.b16 %v1283
  %v1408 = vunpack.c.h.b16 %v1283
  %v1409 = vunpack.c.l.b16 %v1284
  %v1410 = vunpack.c.h.b16 %v1284
  %v1411 = vunpack.c.l.b16 %v1285
  %v1412 = vunpack.c.h.b16 %v1285
  %v1413 = vpack.c.b16 %v1345, %v1341
  %v1414 = vpack.c.b16 %v1346, %v1342
  %v1415 = vpack.c.b16 %v1347, %v1343
  %v1416 = vpack.c.b16 %v1348, %v1344
  %v1417 = vpack.c.b16 %v1353, %v1349
  %v1418 = vpack.c.b16 %v1354, %v1350
  %v1419 = vpack.c.b16 %v1355, %v1351
  %v1420 = vpack.c.b16 %v1356, %v1352
  %v1421 = vpack.c.b16 %v1361, %v1357
  %v1422 = vpack.c.b16 %v1362, %v1358
  %v1423 = vpack.c.b16 %v1363, %v1359
  %v1424 = vpack.c.b16 %v1364, %v1360
  %v1425 = vpack.c.b16 %v1369, %v1365
  %v1426 = vpack.c.b16 %v1370, %v1366
  %v1427 = vpack.c.b16 %v1371, %v1367
  %v1428 = vpack.c.b16 %v1372, %v1368
  %v1429 = vpack.c.b16 %v1377, %v1373
  %v1430 = vpack.c.b16 %v1378, %v1374
  %v1431 = vpack.c.b16 %v1379, %v1375
  %v1432 = vpack.c.b16 %v1380, %v1376
  %v1433 = vpack.c.b16 %v1385, %v1381
  %v1434 = vpack.c.b16 %v1386, %v1382
  %v1435 = vpack.c.b16 %v1387, %v1383
  %v1436 = vpack.c.b16 %v1388, %v1384
  %v1437 = vpack.c.b16 %v1393, %v1389
  %v1438 = vpack.c.b16 %v1394, %v1390
  %v1439 = vpack.c.b16 %v1395, %v1391
  %v1440 = vpack.c.b16 %v1396, %v1392
  %v1441 = vpack.c.b16 %v1401, %v1397
  %v1442 = vpack.c.b16 %v1402, %v1398
  %v1443 = vpack.c.b16 %v1403, %v1399
  %v1444 = vpack.c.b16 %v1404, %v1400
  %v1445 = vpack.c.b16 %v1409, %v1405
  %v1446 = vpack.c.b16 %v1410, %v1406
  %v1447 = vpack.c.b16 %v1411, %v1407
  %v1448 = vpack.c.b16 %v1412, %v1408
  %v1486 = vsel %vm714, %v1303, 0
  %1488 = vmatpush.bf16.msra.mxu0 %v1441
  %1489 = vmatpush.bf16.msra.mxu0 %v1437
  %1490 = vmatpush.bf16.msra.mxu0 %v1433
  %1491 = vmatpush.bf16.msra.mxu0 %v1429
  %1492 = vmatpush.bf16.msra.mxu0 %v1425
  %1493 = vmatpush.bf16.msra.mxu0 %v1421
  %1494 = vmatpush.bf16.msra.mxu0 %v1417
  %1495 = vmatpush.bf16.msra.mxu0 %v1413
  %1496 = vmatmul.bf16.gmra.mxu0 %v1302
  %v1497 = vpop.f32.mrf.mxu0
  %v1498 = vadd.f32 %v1289, %v1497
  %v1499 = vpop.f32.mrf.mxu0
  %v1500 = vadd.f32 %v1294, %v1499
  %1501 = vdwg.mxu0
  %1502 = vmatpush.bf16.msra.mxu0 0
  %1503 = vmatpush.bf16.msra.mxu0 0
  %1504 = vmatpush.bf16.msra.mxu0 0
  %1505 = vmatpush.bf16.msra.mxu0 0
  %1506 = vmatpush.bf16.msra.mxu0 0
  %1507 = vmatpush.bf16.msra.mxu0 0
  %1508 = vmatpush.bf16.msra.mxu0 0
  %1509 = vmatpush.bf16.msra.mxu0 %v1445
  %1510 = vmatmul.bf16.gmra.mxu0 %v1486
  %v1511 = vpop.f32.mrf.mxu0
  %v1512 = vadd.f32 %v1498, %v1511
  %v1513 = vpop.f32.mrf.mxu0
  %v1514 = vadd.f32 %v1500, %v1513
  %1515 = vdwg.mxu0
  %1516 = vmatpush.bf16.msra.mxu0 %v1442
  %1517 = vmatpush.bf16.msra.mxu0 %v1438
  %1518 = vmatpush.bf16.msra.mxu0 %v1434
  %1519 = vmatpush.bf16.msra.mxu0 %v1430
  %1520 = vmatpush.bf16.msra.mxu0 %v1426
  %1521 = vmatpush.bf16.msra.mxu0 %v1422
  %1522 = vmatpush.bf16.msra.mxu0 %v1418
  %1523 = vmatpush.bf16.msra.mxu0 %v1414
  %1524 = vmatmul.bf16.gmra.mxu0 %v1302
  %v1525 = vpop.f32.mrf.mxu0
  %v1526 = vadd.f32 %v1289, %v1525
  %v1527 = vpop.f32.mrf.mxu0
  %v1528 = vadd.f32 %v1294, %v1527
  %1529 = vdwg.mxu0
  %1530 = vmatpush.bf16.msra.mxu0 0
  %1531 = vmatpush.bf16.msra.mxu0 0
  %1532 = vmatpush.bf16.msra.mxu0 0
  %1533 = vmatpush.bf16.msra.mxu0 0
  %1534 = vmatpush.bf16.msra.mxu0 0
  %1535 = vmatpush.bf16.msra.mxu0 0
  %1536 = vmatpush.bf16.msra.mxu0 0
  %1537 = vmatpush.bf16.msra.mxu0 %v1446
  %1538 = vmatmul.bf16.gmra.mxu0 %v1486
  %v1539 = vpop.f32.mrf.mxu0
  %v1540 = vadd.f32 %v1526, %v1539
  %v1541 = vpop.f32.mrf.mxu0
  %v1542 = vadd.f32 %v1528, %v1541
  %1543 = vdwg.mxu0
  %1544 = vmatpush.bf16.msra.mxu0 %v1443
  %1545 = vmatpush.bf16.msra.mxu0 %v1439
  %1546 = vmatpush.bf16.msra.mxu0 %v1435
  %1547 = vmatpush.bf16.msra.mxu0 %v1431
  %1548 = vmatpush.bf16.msra.mxu0 %v1427
  %1549 = vmatpush.bf16.msra.mxu0 %v1423
  %1550 = vmatpush.bf16.msra.mxu0 %v1419
  %1551 = vmatpush.bf16.msra.mxu0 %v1415
  %1552 = vmatmul.bf16.gmra.mxu0 %v1302
  %v1553 = vpop.f32.mrf.mxu0
  %v1554 = vadd.f32 %v1289, %v1553
  %v1555 = vpop.f32.mrf.mxu0
  %v1556 = vadd.f32 %v1294, %v1555
  %1557 = vdwg.mxu0
  %1558 = vmatpush.bf16.msra.mxu0 0
  %1559 = vmatpush.bf16.msra.mxu0 0
  %1560 = vmatpush.bf16.msra.mxu0 0
  %1561 = vmatpush.bf16.msra.mxu0 0
  %1562 = vmatpush.bf16.msra.mxu0 0
  %1563 = vmatpush.bf16.msra.mxu0 0
  %1564 = vmatpush.bf16.msra.mxu0 0
  %1565 = vmatpush.bf16.msra.mxu0 %v1447
  %1566 = vmatmul.bf16.gmra.mxu0 %v1486
  %v1567 = vpop.f32.mrf.mxu0
  %v1568 = vadd.f32 %v1554, %v1567
  %v1569 = vpop.f32.mrf.mxu0
  %v1570 = vadd.f32 %v1556, %v1569
  %1571 = vdwg.mxu0
  %1572 = vmatpush.bf16.msra.mxu0 %v1444
  %1573 = vmatpush.bf16.msra.mxu0 %v1440
  %1574 = vmatpush.bf16.msra.mxu0 %v1436
  %1575 = vmatpush.bf16.msra.mxu0 %v1432
  %1576 = vmatpush.bf16.msra.mxu0 %v1428
  %1577 = vmatpush.bf16.msra.mxu0 %v1424
  %1578 = vmatpush.bf16.msra.mxu0 %v1420
  %1579 = vmatpush.bf16.msra.mxu0 %v1416
  %1580 = vmatmul.bf16.gmra.mxu0 %v1302
  %v1581 = vpop.f32.mrf.mxu0
  %v1582 = vadd.f32 %v1289, %v1581
  %v1583 = vpop.f32.mrf.mxu0
  %v1584 = vadd.f32 %v1294, %v1583
  %1585 = vdwg.mxu0
  %1586 = vmatpush.bf16.msra.mxu0 0
  %1587 = vmatpush.bf16.msra.mxu0 0
  %1588 = vmatpush.bf16.msra.mxu0 0
  %1589 = vmatpush.bf16.msra.mxu0 0
  %1590 = vmatpush.bf16.msra.mxu0 0
  %1591 = vmatpush.bf16.msra.mxu0 0
  %1592 = vmatpush.bf16.msra.mxu0 0
  %1593 = vmatpush.bf16.msra.mxu0 %v1448
  %1594 = vmatmul.bf16.gmra.mxu0 %v1486
  %v1595 = vpop.f32.mrf.mxu0
  %v1596 = vadd.f32 %v1582, %v1595
  %v1597 = vpop.f32.mrf.mxu0
  %v1598 = vadd.f32 %v1584, %v1597
  %1599 = vdwg.mxu0
  %v1600 = vmax.f32 %v1512, 0.0
  %v1601 = vmax.f32 %v1540, 0.0
  %v1602 = vmax.f32 %v1568, 0.0
  %v1603 = vmax.f32 %v1596, 0.0
  %v1604 = vmax.f32 %v1514, 0.0
  %v1605 = vmax.f32 %v1542, 0.0
  %v1606 = vmax.f32 %v1570, 0.0
  %v1607 = vmax.f32 %v1598, 0.0
  %1608 = vrot.lane.b32.xlu0 %v1600, 17
  %v1609 = vpop.permute.xlu0 %1608
  %1610 = vrot.lane.b32.xlu0 %v1604, 17
  %v1611 = vpop.permute.xlu0 %1610
  %1612 = vrot.lane.b32.xlu0 %v1601, 17
  %v1613 = vpop.permute.xlu0 %1612
  %1614 = vrot.lane.b32.xlu0 %v1605, 17
  %v1615 = vpop.permute.xlu0 %1614
  %1616 = vrot.lane.b32.xlu0 %v1602, 17
  %v1617 = vpop.permute.xlu0 %1616
  %1618 = vrot.lane.b32.xlu0 %v1606, 17
  %v1619 = vpop.permute.xlu0 %1618
  %1620 = vrot.lane.b32.xlu0 %v1603, 17
  %v1621 = vpop.permute.xlu0 %1620
  %1622 = vrot.lane.b32.xlu0 %v1607, 17
  %v1623 = vpop.permute.xlu0 %1622
  %v1624 = vsel %vm72, %v1617, %v1621
  %v1625 = vsel %vm72, %v1619, %v1623
  %v1626 = vsel %vm72, %v1613, %v1617
  %v1627 = vsel %vm72, %v1615, %v1619
  %v1628 = vsel %vm72, %v1609, %v1613
  %v1629 = vsel %vm72, %v1611, %v1615
  %v1630 = vsel %vm72, %v1621, %v1609
  %v1631 = vsel %vm72, %v1623, %v1611
  %v1632 = vld [vmem:[%s0] ss:$8 sm:$0xf]
  %v1634 = vperm.slane %v1632, 0
  %v1635 = vperm.slane %v1632, 1
  %v1636 = vperm.slane %v1632, 2
  %v1637 = vperm.slane %v1632, 3
  %v1642 = vmul.f32 %v1630, %v1634
  %v1643 = vmul.f32 %v1628, %v1635
  %v1644 = vmul.f32 %v1626, %v1636
  %v1645 = vmul.f32 %v1624, %v1637
  %v1646 = vmul.f32 %v1631, %v1634
  %v1647 = vmul.f32 %v1629, %v1635
  %v1648 = vmul.f32 %v1627, %v1636
  %v1649 = vmul.f32 %v1625, %v1637
  %v1650 = vpack.c.bf16 %v1643, %v1642
  %v1651 = vpack.c.bf16 %v1645, %v1644
  %v1652 = vpack.c.bf16 %v1647, %v1646
  %v1653 = vpack.c.bf16 %v1649, %v1648
  %1654 = vst [vmem:[#allocation2 + $0x240] sm:$0xff] %v1650
  %1655 = vst [vmem:[#allocation2 + $0x248] sm:$0xff] %v1651
  %1656 = vst [vmem:[#allocation2 + $0x250] sm:$0xff] %v1652
  %1657 = vst [vmem:[#allocation2 + $0x258] sm:$0xff] %v1653
  %1658 = vrot.lane.b32.xlu0 %v1600, 16
  %v1659 = vpop.permute.xlu0 %1658
  %1660 = vrot.lane.b32.xlu0 %v1604, 16
  %v1661 = vpop.permute.xlu0 %1660
  %1662 = vrot.lane.b32.xlu0 %v1601, 16
  %v1663 = vpop.permute.xlu0 %1662
  %1664 = vrot.lane.b32.xlu0 %v1605, 16
  %v1665 = vpop.permute.xlu0 %1664
  %1666 = vrot.lane.b32.xlu0 %v1602, 16
  %v1667 = vpop.permute.xlu0 %1666
  %1668 = vrot.lane.b32.xlu0 %v1606, 16
  %v1669 = vpop.permute.xlu0 %1668
  %1670 = vrot.lane.b32.xlu0 %v1603, 16
  %v1671 = vpop.permute.xlu0 %1670
  %1672 = vrot.lane.b32.xlu0 %v1607, 16
  %v1673 = vpop.permute.xlu0 %1672
  %v1674 = vsel %vm123, %v1667, %v1671
  %v1675 = vsel %vm123, %v1669, %v1673
  %v1676 = vsel %vm123, %v1663, %v1667
  %v1677 = vsel %vm123, %v1665, %v1669
  %v1678 = vsel %vm123, %v1659, %v1663
  %v1679 = vsel %vm123, %v1661, %v1665
  %v1680 = vsel %vm123, %v1671, %v1659
  %v1681 = vsel %vm123, %v1673, %v1661
  %v1682 = vld [vmem:[%s132] ss:$8 sm:$0xf]
  %v1684 = vperm.slane %v1682, 0
  %v1685 = vperm.slane %v1682, 1
  %v1686 = vperm.slane %v1682, 2
  %v1687 = vperm.slane %v1682, 3
  %v1692 = vmul.f32 %v1680, %v1684
  %v1693 = vmul.f32 %v1678, %v1685
  %v1694 = vmul.f32 %v1676, %v1686
  %v1695 = vmul.f32 %v1674, %v1687
  %v1696 = vmul.f32 %v1681, %v1684
  %v1697 = vmul.f32 %v1679, %v1685
  %v1698 = vmul.f32 %v1677, %v1686
  %v1699 = vmul.f32 %v1675, %v1687
  %v1700 = vpack.c.bf16 %v1693, %v1692
  %v1701 = vpack.c.bf16 %v1695, %v1694
  %v1702 = vpack.c.bf16 %v1697, %v1696
  %v1703 = vpack.c.bf16 %v1699, %v1698
  %1704 = vst [vmem:[#allocation2 + $0x260] sm:$0xff] %v1700
  %1705 = vst [vmem:[#allocation2 + $0x268] sm:$0xff] %v1701
  %1706 = vst [vmem:[#allocation2 + $0x270] sm:$0xff] %v1702
  %1707 = vst [vmem:[#allocation2 + $0x278] sm:$0xff] %v1703
  %1708 = vrot.lane.b32.xlu0 %v1600, 15
  %v1709 = vpop.permute.xlu0 %1708
  %1710 = vrot.lane.b32.xlu0 %v1604, 15
  %v1711 = vpop.permute.xlu0 %1710
  %1712 = vrot.lane.b32.xlu0 %v1601, 15
  %v1713 = vpop.permute.xlu0 %1712
  %1714 = vrot.lane.b32.xlu0 %v1605, 15
  %v1715 = vpop.permute.xlu0 %1714
  %1716 = vrot.lane.b32.xlu0 %v1602, 15
  %v1717 = vpop.permute.xlu0 %1716
  %1718 = vrot.lane.b32.xlu0 %v1606, 15
  %v1719 = vpop.permute.xlu0 %1718
  %1720 = vrot.lane.b32.xlu0 %v1603, 15
  %v1721 = vpop.permute.xlu0 %1720
  %1722 = vrot.lane.b32.xlu0 %v1607, 15
  %v1723 = vpop.permute.xlu0 %1722
  %v1724 = vsel %vm175, %v1717, %v1721
  %v1725 = vsel %vm175, %v1719, %v1723
  %v1726 = vsel %vm175, %v1713, %v1717
  %v1727 = vsel %vm175, %v1715, %v1719
  %v1728 = vsel %vm175, %v1709, %v1713
  %v1729 = vsel %vm175, %v1711, %v1715
  %v1730 = vsel %vm175, %v1721, %v1709
  %v1731 = vsel %vm175, %v1723, %v1711
  %v1732 = vld [vmem:[%s184] ss:$8 sm:$0xf]
  %v1734 = vperm.slane %v1732, 0
  %v1735 = vperm.slane %v1732, 1
  %v1736 = vperm.slane %v1732, 2
  %v1737 = vperm.slane %v1732, 3
  %v1742 = vmul.f32 %v1730, %v1734
  %v1743 = vmul.f32 %v1728, %v1735
  %v1744 = vmul.f32 %v1726, %v1736
  %v1745 = vmul.f32 %v1724, %v1737
  %v1746 = vmul.f32 %v1731, %v1734
  %v1747 = vmul.f32 %v1729, %v1735
  %v1748 = vmul.f32 %v1727, %v1736
  %v1749 = vmul.f32 %v1725, %v1737
  %v1750 = vpack.c.bf16 %v1743, %v1742
  %v1751 = vpack.c.bf16 %v1745, %v1744
  %v1752 = vpack.c.bf16 %v1747, %v1746
  %v1753 = vpack.c.bf16 %v1749, %v1748
  %1754 = vst [vmem:[#allocation2 + $0x280] sm:$0xff] %v1750
  %1755 = vst [vmem:[#allocation2 + $0x288] sm:$0xff] %v1751
  %1756 = vst [vmem:[#allocation2 + $0x290] sm:$0xff] %v1752
  %1757 = vst [vmem:[#allocation2 + $0x298] sm:$0xff] %v1753
  %1758 = vrot.lane.b32.xlu0 %v1600, 1
  %v1759 = vpop.permute.xlu0 %1758
  %1760 = vrot.lane.b32.xlu0 %v1604, 1
  %v1761 = vpop.permute.xlu0 %1760
  %1762 = vrot.lane.b32.xlu0 %v1601, 1
  %v1763 = vpop.permute.xlu0 %1762
  %1764 = vrot.lane.b32.xlu0 %v1605, 1
  %v1765 = vpop.permute.xlu0 %1764
  %1766 = vrot.lane.b32.xlu0 %v1602, 1
  %v1767 = vpop.permute.xlu0 %1766
  %1768 = vrot.lane.b32.xlu0 %v1606, 1
  %v1769 = vpop.permute.xlu0 %1768
  %1770 = vrot.lane.b32.xlu0 %v1603, 1
  %v1771 = vpop.permute.xlu0 %1770
  %1772 = vrot.lane.b32.xlu0 %v1607, 1
  %v1773 = vpop.permute.xlu0 %1772
  %v1774 = vsel %vm227, %v1767, %v1771
  %v1775 = vsel %vm227, %v1769, %v1773
  %v1776 = vsel %vm227, %v1763, %v1767
  %v1777 = vsel %vm227, %v1765, %v1769
  %v1778 = vsel %vm227, %v1759, %v1763
  %v1779 = vsel %vm227, %v1761, %v1765
  %v1780 = vsel %vm227, %v1771, %v1759
  %v1781 = vsel %vm227, %v1773, %v1761
  %v1782 = vld [vmem:[%s236] ss:$8 sm:$0xf]
  %v1784 = vperm.slane %v1782, 0
  %v1785 = vperm.slane %v1782, 1
  %v1786 = vperm.slane %v1782, 2
  %v1787 = vperm.slane %v1782, 3
  %v1792 = vmul.f32 %v1780, %v1784
  %v1793 = vmul.f32 %v1778, %v1785
  %v1794 = vmul.f32 %v1776, %v1786
  %v1795 = vmul.f32 %v1774, %v1787
  %v1796 = vmul.f32 %v1781, %v1784
  %v1797 = vmul.f32 %v1779, %v1785
  %v1798 = vmul.f32 %v1777, %v1786
  %v1799 = vmul.f32 %v1775, %v1787
  %v1800 = vpack.c.bf16 %v1793, %v1792
  %v1801 = vpack.c.bf16 %v1795, %v1794
  %v1802 = vpack.c.bf16 %v1797, %v1796
  %v1803 = vpack.c.bf16 %v1799, %v1798
  %1804 = vst [vmem:[#allocation2 + $0x2a0] sm:$0xff] %v1800
  %1805 = vst [vmem:[#allocation2 + $0x2a8] sm:$0xff] %v1801
  %1806 = vst [vmem:[#allocation2 + $0x2b0] sm:$0xff] %v1802
  %1807 = vst [vmem:[#allocation2 + $0x2b8] sm:$0xff] %v1803
  %v1808 = vpack.c.bf16 %v1601, %v1600
  %v1809 = vpack.c.bf16 %v1603, %v1602
  %v1810 = vpack.c.bf16 %v1605, %v1604
  %v1811 = vpack.c.bf16 %v1607, %v1606
  %1812 = vst [vmem:[#allocation2 + $0x2c0] sm:$0xff] %v1808
  %1813 = vst [vmem:[#allocation2 + $0x2c8] sm:$0xff] %v1809
  %1814 = vst [vmem:[#allocation2 + $0x2d0] sm:$0xff] %v1810
  %1815 = vst [vmem:[#allocation2 + $0x2d8] sm:$0xff] %v1811
  %1816 = vrot.lane.b32.xlu0 %v1600, 127
  %v1817 = vpop.permute.xlu0 %1816
  %1818 = vrot.lane.b32.xlu0 %v1604, 127
  %v1819 = vpop.permute.xlu0 %1818
  %1820 = vrot.lane.b32.xlu0 %v1601, 127
  %v1821 = vpop.permute.xlu0 %1820
  %1822 = vrot.lane.b32.xlu0 %v1605, 127
  %v1823 = vpop.permute.xlu0 %1822
  %1824 = vrot.lane.b32.xlu0 %v1602, 127
  %v1825 = vpop.permute.xlu0 %1824
  %1826 = vrot.lane.b32.xlu0 %v1606, 127
  %v1827 = vpop.permute.xlu0 %1826
  %1828 = vrot.lane.b32.xlu0 %v1603, 127
  %v1829 = vpop.permute.xlu0 %1828
  %1830 = vrot.lane.b32.xlu0 %v1607, 127
  %v1831 = vpop.permute.xlu0 %1830
  %v1832 = vsel %vm283, %v1825, %v1829
  %v1833 = vsel %vm283, %v1827, %v1831
  %v1834 = vsel %vm283, %v1821, %v1825
  %v1835 = vsel %vm283, %v1823, %v1827
  %v1836 = vsel %vm283, %v1817, %v1821
  %v1837 = vsel %vm283, %v1819, %v1823
  %v1838 = vsel %vm283, %v1829, %v1817
  %v1839 = vsel %vm283, %v1831, %v1819
  %v1840 = vld [vmem:[%s292] ss:$8 sm:$0xf]
  %v1842 = vperm.slane %v1840, 0
  %v1843 = vperm.slane %v1840, 1
  %v1844 = vperm.slane %v1840, 2
  %v1845 = vperm.slane %v1840, 3
  %v1850 = vmul.f32 %v1836, %v1842
  %v1851 = vmul.f32 %v1834, %v1843
  %v1852 = vmul.f32 %v1832, %v1844
  %v1853 = vmul.f32 %v1838, %v1845
  %v1854 = vmul.f32 %v1837, %v1842
  %v1855 = vmul.f32 %v1835, %v1843
  %v1856 = vmul.f32 %v1833, %v1844
  %v1857 = vmul.f32 %v1839, %v1845
  %v1858 = vpack.c.bf16 %v1851, %v1850
  %v1859 = vpack.c.bf16 %v1853, %v1852
  %v1860 = vpack.c.bf16 %v1855, %v1854
  %v1861 = vpack.c.bf16 %v1857, %v1856
  %1862 = vst [vmem:[#allocation2 + $0x2e0] sm:$0xff] %v1858
  %1863 = vst [vmem:[#allocation2 + $0x2e8] sm:$0xff] %v1859
  %1864 = vst [vmem:[#allocation2 + $0x2f0] sm:$0xff] %v1860
  %1865 = vst [vmem:[#allocation2 + $0x2f8] sm:$0xff] %v1861
  %1866 = vrot.lane.b32.xlu0 %v1600, 113
  %v1867 = vpop.permute.xlu0 %1866
  %1868 = vrot.lane.b32.xlu0 %v1604, 113
  %v1869 = vpop.permute.xlu0 %1868
  %1870 = vrot.lane.b32.xlu0 %v1601, 113
  %v1871 = vpop.permute.xlu0 %1870
  %1872 = vrot.lane.b32.xlu0 %v1605, 113
  %v1873 = vpop.permute.xlu0 %1872
  %1874 = vrot.lane.b32.xlu0 %v1602, 113
  %v1875 = vpop.permute.xlu0 %1874
  %1876 = vrot.lane.b32.xlu0 %v1606, 113
  %v1877 = vpop.permute.xlu0 %1876
  %1878 = vrot.lane.b32.xlu0 %v1603, 113
  %v1879 = vpop.permute.xlu0 %1878
  %1880 = vrot.lane.b32.xlu0 %v1607, 113
  %v1881 = vpop.permute.xlu0 %1880
  %v1882 = vsel %vm335, %v1875, %v1879
  %v1883 = vsel %vm335, %v1877, %v1881
  %v1884 = vsel %vm335, %v1871, %v1875
  %v1885 = vsel %vm335, %v1873, %v1877
  %v1886 = vsel %vm335, %v1867, %v1871
  %v1887 = vsel %vm335, %v1869, %v1873
  %v1888 = vsel %vm335, %v1879, %v1867
  %v1889 = vsel %vm335, %v1881, %v1869
  %v1890 = vld [vmem:[%s344] ss:$8 sm:$0xf]
  %v1892 = vperm.slane %v1890, 0
  %v1893 = vperm.slane %v1890, 1
  %v1894 = vperm.slane %v1890, 2
  %v1895 = vperm.slane %v1890, 3
  %v1900 = vmul.f32 %v1886, %v1892
  %v1901 = vmul.f32 %v1884, %v1893
  %v1902 = vmul.f32 %v1882, %v1894
  %v1903 = vmul.f32 %v1888, %v1895
  %v1904 = vmul.f32 %v1887, %v1892
  %v1905 = vmul.f32 %v1885, %v1893
  %v1906 = vmul.f32 %v1883, %v1894
  %v1907 = vmul.f32 %v1889, %v1895
  %v1908 = vpack.c.bf16 %v1901, %v1900
  %v1909 = vpack.c.bf16 %v1903, %v1902
  %v1910 = vpack.c.bf16 %v1905, %v1904
  %v1911 = vpack.c.bf16 %v1907, %v1906
  %1912 = vst [vmem:[#allocation2 + $0x300] sm:$0xff] %v1908
  %1913 = vst [vmem:[#allocation2 + $0x308] sm:$0xff] %v1909
  %1914 = vst [vmem:[#allocation2 + $0x310] sm:$0xff] %v1910
  %1915 = vst [vmem:[#allocation2 + $0x318] sm:$0xff] %v1911
  %1916 = vrot.lane.b32.xlu0 %v1600, 112
  %v1917 = vpop.permute.xlu0 %1916
  %1918 = vrot.lane.b32.xlu0 %v1604, 112
  %v1919 = vpop.permute.xlu0 %1918
  %1920 = vrot.lane.b32.xlu0 %v1601, 112
  %v1921 = vpop.permute.xlu0 %1920
  %1922 = vrot.lane.b32.xlu0 %v1605, 112
  %v1923 = vpop.permute.xlu0 %1922
  %1924 = vrot.lane.b32.xlu0 %v1602, 112
  %v1925 = vpop.permute.xlu0 %1924
  %1926 = vrot.lane.b32.xlu0 %v1606, 112
  %v1927 = vpop.permute.xlu0 %1926
  %1928 = vrot.lane.b32.xlu0 %v1603, 112
  %v1929 = vpop.permute.xlu0 %1928
  %1930 = vrot.lane.b32.xlu0 %v1607, 112
  %v1931 = vpop.permute.xlu0 %1930
  %v1932 = vsel %vm387, %v1925, %v1929
  %v1933 = vsel %vm387, %v1927, %v1931
  %v1934 = vsel %vm387, %v1921, %v1925
  %v1935 = vsel %vm387, %v1923, %v1927
  %v1936 = vsel %vm387, %v1917, %v1921
  %v1937 = vsel %vm387, %v1919, %v1923
  %v1938 = vsel %vm387, %v1929, %v1917
  %v1939 = vsel %vm387, %v1931, %v1919
  %v1940 = vld [vmem:[%s396] ss:$8 sm:$0xf]
  %v1942 = vperm.slane %v1940, 0
  %v1943 = vperm.slane %v1940, 1
  %v1944 = vperm.slane %v1940, 2
  %v1945 = vperm.slane %v1940, 3
  %v1950 = vmul.f32 %v1936, %v1942
  %v1951 = vmul.f32 %v1934, %v1943
  %v1952 = vmul.f32 %v1932, %v1944
  %v1953 = vmul.f32 %v1938, %v1945
  %v1954 = vmul.f32 %v1937, %v1942
  %v1955 = vmul.f32 %v1935, %v1943
  %v1956 = vmul.f32 %v1933, %v1944
  %v1957 = vmul.f32 %v1939, %v1945
  %v1958 = vpack.c.bf16 %v1951, %v1950
  %v1959 = vpack.c.bf16 %v1953, %v1952
  %v1960 = vpack.c.bf16 %v1955, %v1954
  %v1961 = vpack.c.bf16 %v1957, %v1956
  %1962 = vst [vmem:[#allocation2 + $0x320] sm:$0xff] %v1958
  %1963 = vst [vmem:[#allocation2 + $0x328] sm:$0xff] %v1959
  %1964 = vst [vmem:[#allocation2 + $0x330] sm:$0xff] %v1960
  %1965 = vst [vmem:[#allocation2 + $0x338] sm:$0xff] %v1961
  %1966 = vrot.lane.b32.xlu0 %v1600, 111
  %v1967 = vpop.permute.xlu0 %1966
  %1968 = vrot.lane.b32.xlu0 %v1604, 111
  %v1969 = vpop.permute.xlu0 %1968
  %1970 = vrot.lane.b32.xlu0 %v1601, 111
  %v1971 = vpop.permute.xlu0 %1970
  %1972 = vrot.lane.b32.xlu0 %v1605, 111
  %v1973 = vpop.permute.xlu0 %1972
  %1974 = vrot.lane.b32.xlu0 %v1602, 111
  %v1975 = vpop.permute.xlu0 %1974
  %1976 = vrot.lane.b32.xlu0 %v1606, 111
  %v1977 = vpop.permute.xlu0 %1976
  %1978 = vrot.lane.b32.xlu0 %v1603, 111
  %v1979 = vpop.permute.xlu0 %1978
  %1980 = vrot.lane.b32.xlu0 %v1607, 111
  %v1981 = vpop.permute.xlu0 %1980
  %v1982 = vsel %vm439, %v1975, %v1979
  %v1983 = vsel %vm439, %v1977, %v1981
  %v1984 = vsel %vm439, %v1971, %v1975
  %v1985 = vsel %vm439, %v1973, %v1977
  %v1986 = vsel %vm439, %v1967, %v1971
  %v1987 = vsel %vm439, %v1969, %v1973
  %v1988 = vsel %vm439, %v1979, %v1967
  %v1989 = vsel %vm439, %v1981, %v1969
  %v1990 = vld [vmem:[%s448] ss:$8 sm:$0xf]
  %v1992 = vperm.slane %v1990, 0
  %v1993 = vperm.slane %v1990, 1
  %v1994 = vperm.slane %v1990, 2
  %v1995 = vperm.slane %v1990, 3
  %v2000 = vmul.f32 %v1986, %v1992
  %v2001 = vmul.f32 %v1984, %v1993
  %v2002 = vmul.f32 %v1982, %v1994
  %v2003 = vmul.f32 %v1988, %v1995
  %v2004 = vmul.f32 %v1987, %v1992
  %v2005 = vmul.f32 %v1985, %v1993
  %v2006 = vmul.f32 %v1983, %v1994
  %v2007 = vmul.f32 %v1989, %v1995
  %v2008 = vpack.c.bf16 %v2001, %v2000
  %v2009 = vpack.c.bf16 %v2003, %v2002
  %v2010 = vpack.c.bf16 %v2005, %v2004
  %v2011 = vpack.c.bf16 %v2007, %v2006
  %2012 = vst [vmem:[#allocation2 + $0x340] sm:$0xff] %v2008
  %2013 = vst [vmem:[#allocation2 + $0x348] sm:$0xff] %v2009
  %2014 = vst [vmem:[#allocation2 + $0x350] sm:$0xff] %v2010
  %2015 = vst [vmem:[#allocation2 + $0x358] sm:$0xff] %v2011
  %v2016 = vld [vmem:[%s4] sm:$0xff]
  %v2017 = vld [vmem:[%s4 + $0x8] sm:$0xf]
  %v2018 = vld [vmem:[%s4 + $0xc] sm:$0xff]
  %v2019 = vld [vmem:[%s4 + $0x14] sm:$0xf]
  %v2020 = vld [vmem:[%s5] sm:$0xff]
  %v2021 = vld [vmem:[%s5 + $0x8] sm:$0xff]
  %v2022 = vld [vmem:[#allocation2 + $0x120] sm:$0xff]
  %v2023 = vld [vmem:[#allocation2 + $0x128] sm:$0xff]
  %v2024 = vld [vmem:[#allocation2 + $0x130] sm:$0xff]
  %v2025 = vld [vmem:[#allocation2 + $0x138] sm:$0xff]
  %v2026 = vld [vmem:[#allocation2 + $0x140] sm:$0xff]
  %v2027 = vld [vmem:[#allocation2 + $0x148] sm:$0xff]
  %v2028 = vld [vmem:[#allocation2 + $0x150] sm:$0xff]
  %v2029 = vld [vmem:[#allocation2 + $0x158] sm:$0xff]
  %v2030 = vld [vmem:[#allocation2 + $0x160] sm:$0xff]
  %v2031 = vld [vmem:[#allocation2 + $0x168] sm:$0xff]
  %v2032 = vld [vmem:[#allocation2 + $0x170] sm:$0xff]
  %v2033 = vld [vmem:[#allocation2 + $0x178] sm:$0xff]
  %v2034 = vld [vmem:[#allocation2 + $0x180] sm:$0xff]
  %v2035 = vld [vmem:[#allocation2 + $0x188] sm:$0xff]
  %v2036 = vld [vmem:[#allocation2 + $0x190] sm:$0xff]
  %v2037 = vld [vmem:[#allocation2 + $0x198] sm:$0xff]
  %v2038 = vld [vmem:[#allocation2 + $0x1a0] sm:$0xff]
  %v2039 = vld [vmem:[#allocation2 + $0x1a8] sm:$0xff]
  %v2040 = vld [vmem:[#allocation2 + $0x1b0] sm:$0xff]
  %v2041 = vld [vmem:[#allocation2 + $0x1b8] sm:$0xff]
  %v2042 = vld [vmem:[#allocation2 + $0x1c0] sm:$0xff]
  %v2043 = vld [vmem:[#allocation2 + $0x1c8] sm:$0xff]
  %v2044 = vld [vmem:[#allocation2 + $0x1d0] sm:$0xff]
  %v2045 = vld [vmem:[#allocation2 + $0x1d8] sm:$0xff]
  %v2046 = vld [vmem:[#allocation2 + $0x1e0] sm:$0xff]
  %v2047 = vld [vmem:[#allocation2 + $0x1e8] sm:$0xff]
  %v2048 = vld [vmem:[#allocation2 + $0x1f0] sm:$0xff]
  %v2049 = vld [vmem:[#allocation2 + $0x1f8] sm:$0xff]
  %v2050 = vld [vmem:[#allocation2 + $0x200] sm:$0xff]
  %v2051 = vld [vmem:[#allocation2 + $0x208] sm:$0xff]
  %v2052 = vld [vmem:[#allocation2 + $0x210] sm:$0xff]
  %v2053 = vld [vmem:[#allocation2 + $0x218] sm:$0xff]
  %v2054 = vld [vmem:[#allocation2 + $0x220] sm:$0xff]
  %v2055 = vld [vmem:[#allocation2 + $0x228] sm:$0xff]
  %v2056 = vld [vmem:[#allocation2 + $0x230] sm:$0xff]
  %v2057 = vld [vmem:[#allocation2 + $0x238] sm:$0xff]
  %v2058 = vld [vmem:[#allocation2 + $0x240] sm:$0xff]
  %v2059 = vld [vmem:[#allocation2 + $0x248] sm:$0xff]
  %v2060 = vld [vmem:[#allocation2 + $0x250] sm:$0xff]
  %v2061 = vld [vmem:[#allocation2 + $0x258] sm:$0xff]
  %v2062 = vld [vmem:[#allocation2 + $0x260] sm:$0xff]
  %v2063 = vld [vmem:[#allocation2 + $0x268] sm:$0xff]
  %v2064 = vld [vmem:[#allocation2 + $0x270] sm:$0xff]
  %v2065 = vld [vmem:[#allocation2 + $0x278] sm:$0xff]
  %v2066 = vld [vmem:[#allocation2 + $0x280] sm:$0xff]
  %v2067 = vld [vmem:[#allocation2 + $0x288] sm:$0xff]
  %v2068 = vld [vmem:[#allocation2 + $0x290] sm:$0xff]
  %v2069 = vld [vmem:[#allocation2 + $0x298] sm:$0xff]
  %v2070 = vld [vmem:[#allocation2 + $0x2a0] sm:$0xff]
  %v2071 = vld [vmem:[#allocation2 + $0x2a8] sm:$0xff]
  %v2072 = vld [vmem:[#allocation2 + $0x2b0] sm:$0xff]
  %v2073 = vld [vmem:[#allocation2 + $0x2b8] sm:$0xff]
  %v2074 = vld [vmem:[#allocation2 + $0x2c0] sm:$0xff]
  %v2075 = vld [vmem:[#allocation2 + $0x2c8] sm:$0xff]
  %v2076 = vld [vmem:[#allocation2 + $0x2d0] sm:$0xff]
  %v2077 = vld [vmem:[#allocation2 + $0x2d8] sm:$0xff]
  %v2078 = vld [vmem:[#allocation2 + $0x2e0] sm:$0xff]
  %v2079 = vld [vmem:[#allocation2 + $0x2e8] sm:$0xff]
  %v2080 = vld [vmem:[#allocation2 + $0x2f0] sm:$0xff]
  %v2081 = vld [vmem:[#allocation2 + $0x2f8] sm:$0xff]
  %v2082 = vld [vmem:[#allocation2 + $0x300] sm:$0xff]
  %v2083 = vld [vmem:[#allocation2 + $0x308] sm:$0xff]
  %v2084 = vld [vmem:[#allocation2 + $0x310] sm:$0xff]
  %v2085 = vld [vmem:[#allocation2 + $0x318] sm:$0xff]
  %v2086 = vld [vmem:[#allocation2 + $0x320] sm:$0xff]
  %v2087 = vld [vmem:[#allocation2 + $0x328] sm:$0xff]
  %v2088 = vld [vmem:[#allocation2 + $0x330] sm:$0xff]
  %v2089 = vld [vmem:[#allocation2 + $0x338] sm:$0xff]
  %v2090 = vld [vmem:[#allocation2 + $0x340] sm:$0xff]
  %v2091 = vld [vmem:[#allocation2 + $0x348] sm:$0xff]
  %v2092 = vld [vmem:[#allocation2 + $0x350] sm:$0xff]
  %v2093 = vld [vmem:[#allocation2 + $0x358] sm:$0xff]
  %2095 = vset.pattern.permute.xlu0 0
  %2096 = vperm.xlu0 %2095, %v2020
  %v2097 = vpop.permute.xlu0 %2096
  %2100 = vset.pattern.permute.xlu0 0
  %2101 = vperm.xlu0 %2100, %v2021
  %v2102 = vpop.permute.xlu0 %2101
  %v2108 = vunpack.c.l.b16 %v2016
  %v2109 = vunpack.c.h.b16 %v2016
  %v2110 = vunpack.c.l.b16 %v2017
  %v2111 = vunpack.c.l.b16 %v2018
  %v2112 = vunpack.c.h.b16 %v2018
  %v2113 = vunpack.c.l.b16 %v2019
  %v2114 = vpack.c.b16 %v2111, %v2108
  %v2115 = vpack.c.b16 %v2112, %v2109
  %v2116 = vpack.c.b16 %v2113, %v2110
  %v2191 = vunpack.c.l.b16 %v2022
  %v2192 = vunpack.c.h.b16 %v2022
  %v2193 = vunpack.c.l.b16 %v2023
  %v2194 = vunpack.c.h.b16 %v2023
  %v2195 = vunpack.c.l.b16 %v2024
  %v2196 = vunpack.c.h.b16 %v2024
  %v2197 = vunpack.c.l.b16 %v2025
  %v2198 = vunpack.c.h.b16 %v2025
  %v2199 = vunpack.c.l.b16 %v2026
  %v2200 = vunpack.c.h.b16 %v2026
  %v2201 = vunpack.c.l.b16 %v2027
  %v2202 = vunpack.c.h.b16 %v2027
  %v2203 = vunpack.c.l.b16 %v2028
  %v2204 = vunpack.c.h.b16 %v2028
  %v2205 = vunpack.c.l.b16 %v2029
  %v2206 = vunpack.c.h.b16 %v2029
  %v2207 = vunpack.c.l.b16 %v2030
  %v2208 = vunpack.c.h.b16 %v2030
  %v2209 = vunpack.c.l.b16 %v2031
  %v2210 = vunpack.c.h.b16 %v2031
  %v2211 = vunpack.c.l.b16 %v2032
  %v2212 = vunpack.c.h.b16 %v2032
  %v2213 = vunpack.c.l.b16 %v2033
  %v2214 = vunpack.c.h.b16 %v2033
  %v2215 = vunpack.c.l.b16 %v2034
  %v2216 = vunpack.c.h.b16 %v2034
  %v2217 = vunpack.c.l.b16 %v2035
  %v2218 = vunpack.c.h.b16 %v2035
  %v2219 = vunpack.c.l.b16 %v2036
  %v2220 = vunpack.c.h.b16 %v2036
  %v2221 = vunpack.c.l.b16 %v2037
  %v2222 = vunpack.c.h.b16 %v2037
  %v2223 = vunpack.c.l.b16 %v2038
  %v2224 = vunpack.c.h.b16 %v2038
  %v2225 = vunpack.c.l.b16 %v2039
  %v2226 = vunpack.c.h.b16 %v2039
  %v2227 = vunpack.c.l.b16 %v2040
  %v2228 = vunpack.c.h.b16 %v2040
  %v2229 = vunpack.c.l.b16 %v2041
  %v2230 = vunpack.c.h.b16 %v2041
  %v2231 = vunpack.c.l.b16 %v2042
  %v2232 = vunpack.c.h.b16 %v2042
  %v2233 = vunpack.c.l.b16 %v2043
  %v2234 = vunpack.c.h.b16 %v2043
  %v2235 = vunpack.c.l.b16 %v2044
  %v2236 = vunpack.c.h.b16 %v2044
  %v2237 = vunpack.c.l.b16 %v2045
  %v2238 = vunpack.c.h.b16 %v2045
  %v2239 = vunpack.c.l.b16 %v2046
  %v2240 = vunpack.c.h.b16 %v2046
  %v2241 = vunpack.c.l.b16 %v2047
  %v2242 = vunpack.c.h.b16 %v2047
  %v2243 = vunpack.c.l.b16 %v2048
  %v2244 = vunpack.c.h.b16 %v2048
  %v2245 = vunpack.c.l.b16 %v2049
  %v2246 = vunpack.c.h.b16 %v2049
  %v2247 = vunpack.c.l.b16 %v2050
  %v2248 = vunpack.c.h.b16 %v2050
  %v2249 = vunpack.c.l.b16 %v2051
  %v2250 = vunpack.c.h.b16 %v2051
  %v2251 = vunpack.c.l.b16 %v2052
  %v2252 = vunpack.c.h.b16 %v2052
  %v2253 = vunpack.c.l.b16 %v2053
  %v2254 = vunpack.c.h.b16 %v2053
  %v2255 = vunpack.c.l.b16 %v2054
  %v2256 = vunpack.c.h.b16 %v2054
  %v2257 = vunpack.c.l.b16 %v2055
  %v2258 = vunpack.c.h.b16 %v2055
  %v2259 = vunpack.c.l.b16 %v2056
  %v2260 = vunpack.c.h.b16 %v2056
  %v2261 = vunpack.c.l.b16 %v2057
  %v2262 = vunpack.c.h.b16 %v2057
  %v2263 = vunpack.c.l.b16 %v2058
  %v2264 = vunpack.c.h.b16 %v2058
  %v2265 = vunpack.c.l.b16 %v2059
  %v2266 = vunpack.c.h.b16 %v2059
  %v2267 = vunpack.c.l.b16 %v2060
  %v2268 = vunpack.c.h.b16 %v2060
  %v2269 = vunpack.c.l.b16 %v2061
  %v2270 = vunpack.c.h.b16 %v2061
  %v2271 = vunpack.c.l.b16 %v2062
  %v2272 = vunpack.c.h.b16 %v2062
  %v2273 = vunpack.c.l.b16 %v2063
  %v2274 = vunpack.c.h.b16 %v2063
  %v2275 = vunpack.c.l.b16 %v2064
  %v2276 = vunpack.c.h.b16 %v2064
  %v2277 = vunpack.c.l.b16 %v2065
  %v2278 = vunpack.c.h.b16 %v2065
  %v2279 = vunpack.c.l.b16 %v2066
  %v2280 = vunpack.c.h.b16 %v2066
  %v2281 = vunpack.c.l.b16 %v2067
  %v2282 = vunpack.c.h.b16 %v2067
  %v2283 = vunpack.c.l.b16 %v2068
  %v2284 = vunpack.c.h.b16 %v2068
  %v2285 = vunpack.c.l.b16 %v2069
  %v2286 = vunpack.c.h.b16 %v2069
  %v2287 = vunpack.c.l.b16 %v2070
  %v2288 = vunpack.c.h.b16 %v2070
  %v2289 = vunpack.c.l.b16 %v2071
  %v2290 = vunpack.c.h.b16 %v2071
  %v2291 = vunpack.c.l.b16 %v2072
  %v2292 = vunpack.c.h.b16 %v2072
  %v2293 = vunpack.c.l.b16 %v2073
  %v2294 = vunpack.c.h.b16 %v2073
  %v2295 = vunpack.c.l.b16 %v2074
  %v2296 = vunpack.c.h.b16 %v2074
  %v2297 = vunpack.c.l.b16 %v2075
  %v2298 = vunpack.c.h.b16 %v2075
  %v2299 = vunpack.c.l.b16 %v2076
  %v2300 = vunpack.c.h.b16 %v2076
  %v2301 = vunpack.c.l.b16 %v2077
  %v2302 = vunpack.c.h.b16 %v2077
  %v2303 = vunpack.c.l.b16 %v2078
  %v2304 = vunpack.c.h.b16 %v2078
  %v2305 = vunpack.c.l.b16 %v2079
  %v2306 = vunpack.c.h.b16 %v2079
  %v2307 = vunpack.c.l.b16 %v2080
  %v2308 = vunpack.c.h.b16 %v2080
  %v2309 = vunpack.c.l.b16 %v2081
  %v2310 = vunpack.c.h.b16 %v2081
  %v2311 = vunpack.c.l.b16 %v2082
  %v2312 = vunpack.c.h.b16 %v2082
  %v2313 = vunpack.c.l.b16 %v2083
  %v2314 = vunpack.c.h.b16 %v2083
  %v2315 = vunpack.c.l.b16 %v2084
  %v2316 = vunpack.c.h.b16 %v2084
  %v2317 = vunpack.c.l.b16 %v2085
  %v2318 = vunpack.c.h.b16 %v2085
  %v2319 = vunpack.c.l.b16 %v2086
  %v2320 = vunpack.c.h.b16 %v2086
  %v2321 = vunpack.c.l.b16 %v2087
  %v2322 = vunpack.c.h.b16 %v2087
  %v2323 = vunpack.c.l.b16 %v2088
  %v2324 = vunpack.c.h.b16 %v2088
  %v2325 = vunpack.c.l.b16 %v2089
  %v2326 = vunpack.c.h.b16 %v2089
  %v2327 = vunpack.c.l.b16 %v2090
  %v2328 = vunpack.c.h.b16 %v2090
  %v2329 = vunpack.c.l.b16 %v2091
  %v2330 = vunpack.c.h.b16 %v2091
  %v2331 = vunpack.c.l.b16 %v2092
  %v2332 = vunpack.c.h.b16 %v2092
  %v2333 = vunpack.c.l.b16 %v2093
  %v2334 = vunpack.c.h.b16 %v2093
  %v2335 = vpack.c.b16 %v2195, %v2191
  %v2336 = vpack.c.b16 %v2196, %v2192
  %v2337 = vpack.c.b16 %v2197, %v2193
  %v2338 = vpack.c.b16 %v2198, %v2194
  %v2339 = vpack.c.b16 %v2203, %v2199
  %v2340 = vpack.c.b16 %v2204, %v2200
  %v2341 = vpack.c.b16 %v2205, %v2201
  %v2342 = vpack.c.b16 %v2206, %v2202
  %v2343 = vpack.c.b16 %v2211, %v2207
  %v2344 = vpack.c.b16 %v2212, %v2208
  %v2345 = vpack.c.b16 %v2213, %v2209
  %v2346 = vpack.c.b16 %v2214, %v2210
  %v2347 = vpack.c.b16 %v2219, %v2215
  %v2348 = vpack.c.b16 %v2220, %v2216
  %v2349 = vpack.c.b16 %v2221, %v2217
  %v2350 = vpack.c.b16 %v2222, %v2218
  %v2351 = vpack.c.b16 %v2227, %v2223
  %v2352 = vpack.c.b16 %v2228, %v2224
  %v2353 = vpack.c.b16 %v2229, %v2225
  %v2354 = vpack.c.b16 %v2230, %v2226
  %v2355 = vpack.c.b16 %v2235, %v2231
  %v2356 = vpack.c.b16 %v2236, %v2232
  %v2357 = vpack.c.b16 %v2237, %v2233
  %v2358 = vpack.c.b16 %v2238, %v2234
  %v2359 = vpack.c.b16 %v2243, %v2239
  %v2360 = vpack.c.b16 %v2244, %v2240
  %v2361 = vpack.c.b16 %v2245, %v2241
  %v2362 = vpack.c.b16 %v2246, %v2242
  %v2363 = vpack.c.b16 %v2251, %v2247
  %v2364 = vpack.c.b16 %v2252, %v2248
  %v2365 = vpack.c.b16 %v2253, %v2249
  %v2366 = vpack.c.b16 %v2254, %v2250
  %v2367 = vpack.c.b16 %v2259, %v2255
  %v2368 = vpack.c.b16 %v2260, %v2256
  %v2369 = vpack.c.b16 %v2261, %v2257
  %v2370 = vpack.c.b16 %v2262, %v2258
  %v2371 = vpack.c.b16 %v2267, %v2263
  %v2372 = vpack.c.b16 %v2268, %v2264
  %v2373 = vpack.c.b16 %v2269, %v2265
  %v2374 = vpack.c.b16 %v2270, %v2266
  %v2375 = vpack.c.b16 %v2275, %v2271
  %v2376 = vpack.c.b16 %v2276, %v2272
  %v2377 = vpack.c.b16 %v2277, %v2273
  %v2378 = vpack.c.b16 %v2278, %v2274
  %v2379 = vpack.c.b16 %v2283, %v2279
  %v2380 = vpack.c.b16 %v2284, %v2280
  %v2381 = vpack.c.b16 %v2285, %v2281
  %v2382 = vpack.c.b16 %v2286, %v2282
  %v2383 = vpack.c.b16 %v2291, %v2287
  %v2384 = vpack.c.b16 %v2292, %v2288
  %v2385 = vpack.c.b16 %v2293, %v2289
  %v2386 = vpack.c.b16 %v2294, %v2290
  %v2387 = vpack.c.b16 %v2299, %v2295
  %v2388 = vpack.c.b16 %v2300, %v2296
  %v2389 = vpack.c.b16 %v2301, %v2297
  %v2390 = vpack.c.b16 %v2302, %v2298
  %v2391 = vpack.c.b16 %v2307, %v2303
  %v2392 = vpack.c.b16 %v2308, %v2304
  %v2393 = vpack.c.b16 %v2309, %v2305
  %v2394 = vpack.c.b16 %v2310, %v2306
  %v2395 = vpack.c.b16 %v2315, %v2311
  %v2396 = vpack.c.b16 %v2316, %v2312
  %v2397 = vpack.c.b16 %v2317, %v2313
  %v2398 = vpack.c.b16 %v2318, %v2314
  %v2399 = vpack.c.b16 %v2323, %v2319
  %v2400 = vpack.c.b16 %v2324, %v2320
  %v2401 = vpack.c.b16 %v2325, %v2321
  %v2402 = vpack.c.b16 %v2326, %v2322
  %v2403 = vpack.c.b16 %v2331, %v2327
  %v2404 = vpack.c.b16 %v2332, %v2328
  %v2405 = vpack.c.b16 %v2333, %v2329
  %v2406 = vpack.c.b16 %v2334, %v2330
  %vm2479 = vcmask 261120
  %v2481 = vsel %vm2479, %v2116, 0
  %2483 = vmatpush.bf16.msra.mxu0 %v2363
  %2484 = vmatpush.bf16.msra.mxu0 %v2359
  %2485 = vmatpush.bf16.msra.mxu0 %v2355
  %2486 = vmatpush.bf16.msra.mxu0 %v2351
  %2487 = vmatpush.bf16.msra.mxu0 %v2347
  %2488 = vmatpush.bf16.msra.mxu0 %v2343
  %2489 = vmatpush.bf16.msra.mxu0 %v2339
  %2490 = vmatpush.bf16.msra.mxu0 %v2335
  %2491 = vmatmul.bf16.gmra.mxu0 %v2114
  %v2492 = vpop.f32.mrf.mxu0
  %v2493 = vadd.f32 %v2097, %v2492
  %v2494 = vpop.f32.mrf.mxu0
  %v2495 = vadd.f32 %v2102, %v2494
  %2496 = vdwg.mxu0
  %2497 = vmatpush.bf16.msra.mxu0 %v2395
  %2498 = vmatpush.bf16.msra.mxu0 %v2391
  %2499 = vmatpush.bf16.msra.mxu0 %v2387
  %2500 = vmatpush.bf16.msra.mxu0 %v2383
  %2501 = vmatpush.bf16.msra.mxu0 %v2379
  %2502 = vmatpush.bf16.msra.mxu0 %v2375
  %2503 = vmatpush.bf16.msra.mxu0 %v2371
  %2504 = vmatpush.bf16.msra.mxu0 %v2367
  %2505 = vmatmul.bf16.gmra.mxu0 %v2115
  %v2506 = vpop.f32.mrf.mxu0
  %v2507 = vadd.f32 %v2493, %v2506
  %v2508 = vpop.f32.mrf.mxu0
  %v2509 = vadd.f32 %v2495, %v2508
  %2510 = vdwg.mxu0
  %2511 = vmatpush.bf16.msra.mxu0 0
  %2512 = vmatpush.bf16.msra.mxu0 0
  %2513 = vmatpush.bf16.msra.mxu0 0
  %2514 = vmatpush.bf16.msra.mxu0 0
  %2515 = vmatpush.bf16.msra.mxu0 0
  %2516 = vmatpush.bf16.msra.mxu0 0
  %2517 = vmatpush.bf16.msra.mxu0 %v2403
  %2518 = vmatpush.bf16.msra.mxu0 %v2399
  %2519 = vmatmul.bf16.gmra.mxu0 %v2481
  %v2520 = vpop.f32.mrf.mxu0
  %v2521 = vadd.f32 %v2507, %v2520
  %v2522 = vpop.f32.mrf.mxu0
  %v2523 = vadd.f32 %v2509, %v2522
  %2524 = vdwg.mxu0
  %2525 = vmatpush.bf16.msra.mxu0 %v2364
  %2526 = vmatpush.bf16.msra.mxu0 %v2360
  %2527 = vmatpush.bf16.msra.mxu0 %v2356
  %2528 = vmatpush.bf16.msra.mxu0 %v2352
  %2529 = vmatpush.bf16.msra.mxu0 %v2348
  %2530 = vmatpush.bf16.msra.mxu0 %v2344
  %2531 = vmatpush.bf16.msra.mxu0 %v2340
  %2532 = vmatpush.bf16.msra.mxu0 %v2336
  %2533 = vmatmul.bf16.gmra.mxu0 %v2114
  %v2534 = vpop.f32.mrf.mxu0
  %v2535 = vadd.f32 %v2097, %v2534
  %v2536 = vpop.f32.mrf.mxu0
  %v2537 = vadd.f32 %v2102, %v2536
  %2538 = vdwg.mxu0
  %2539 = vmatpush.bf16.msra.mxu0 %v2396
  %2540 = vmatpush.bf16.msra.mxu0 %v2392
  %2541 = vmatpush.bf16.msra.mxu0 %v2388
  %2542 = vmatpush.bf16.msra.mxu0 %v2384
  %2543 = vmatpush.bf16.msra.mxu0 %v2380
  %2544 = vmatpush.bf16.msra.mxu0 %v2376
  %2545 = vmatpush.bf16.msra.mxu0 %v2372
  %2546 = vmatpush.bf16.msra.mxu0 %v2368
  %2547 = vmatmul.bf16.gmra.mxu0 %v2115
  %v2548 = vpop.f32.mrf.mxu0
  %v2549 = vadd.f32 %v2535, %v2548
  %v2550 = vpop.f32.mrf.mxu0
  %v2551 = vadd.f32 %v2537, %v2550
  %2552 = vdwg.mxu0
  %2553 = vmatpush.bf16.msra.mxu0 0
  %2554 = vmatpush.bf16.msra.mxu0 0
  %2555 = vmatpush.bf16.msra.mxu0 0
  %2556 = vmatpush.bf16.msra.mxu0 0
  %2557 = vmatpush.bf16.msra.mxu0 0
  %2558 = vmatpush.bf16.msra.mxu0 0
  %2559 = vmatpush.bf16.msra.mxu0 %v2404
  %2560 = vmatpush.bf16.msra.mxu0 %v2400
  %2561 = vmatmul.bf16.gmra.mxu0 %v2481
  %v2562 = vpop.f32.mrf.mxu0
  %v2563 = vadd.f32 %v2549, %v2562
  %v2564 = vpop.f32.mrf.mxu0
  %v2565 = vadd.f32 %v2551, %v2564
  %2566 = vdwg.mxu0
  %2567 = vmatpush.bf16.msra.mxu0 %v2365
  %2568 = vmatpush.bf16.msra.mxu0 %v2361
  %2569 = vmatpush.bf16.msra.mxu0 %v2357
  %2570 = vmatpush.bf16.msra.mxu0 %v2353
  %2571 = vmatpush.bf16.msra.mxu0 %v2349
  %2572 = vmatpush.bf16.msra.mxu0 %v2345
  %2573 = vmatpush.bf16.msra.mxu0 %v2341
  %2574 = vmatpush.bf16.msra.mxu0 %v2337
  %2575 = vmatmul.bf16.gmra.mxu0 %v2114
  %v2576 = vpop.f32.mrf.mxu0
  %v2577 = vadd.f32 %v2097, %v2576
  %v2578 = vpop.f32.mrf.mxu0
  %v2579 = vadd.f32 %v2102, %v2578
  %2580 = vdwg.mxu0
  %2581 = vmatpush.bf16.msra.mxu0 %v2397
  %2582 = vmatpush.bf16.msra.mxu0 %v2393
  %2583 = vmatpush.bf16.msra.mxu0 %v2389
  %2584 = vmatpush.bf16.msra.mxu0 %v2385
  %2585 = vmatpush.bf16.msra.mxu0 %v2381
  %2586 = vmatpush.bf16.msra.mxu0 %v2377
  %2587 = vmatpush.bf16.msra.mxu0 %v2373
  %2588 = vmatpush.bf16.msra.mxu0 %v2369
  %2589 = vmatmul.bf16.gmra.mxu0 %v2115
  %v2590 = vpop.f32.mrf.mxu0
  %v2591 = vadd.f32 %v2577, %v2590
  %v2592 = vpop.f32.mrf.mxu0
  %v2593 = vadd.f32 %v2579, %v2592
  %2594 = vdwg.mxu0
  %2595 = vmatpush.bf16.msra.mxu0 0
  %2596 = vmatpush.bf16.msra.mxu0 0
  %2597 = vmatpush.bf16.msra.mxu0 0
  %2598 = vmatpush.bf16.msra.mxu0 0
  %2599 = vmatpush.bf16.msra.mxu0 0
  %2600 = vmatpush.bf16.msra.mxu0 0
  %2601 = vmatpush.bf16.msra.mxu0 %v2405
  %2602 = vmatpush.bf16.msra.mxu0 %v2401
  %2603 = vmatmul.bf16.gmra.mxu0 %v2481
  %v2604 = vpop.f32.mrf.mxu0
  %v2605 = vadd.f32 %v2591, %v2604
  %v2606 = vpop.f32.mrf.mxu0
  %v2607 = vadd.f32 %v2593, %v2606
  %2608 = vdwg.mxu0
  %2609 = vmatpush.bf16.msra.mxu0 %v2366
  %2610 = vmatpush.bf16.msra.mxu0 %v2362
  %2611 = vmatpush.bf16.msra.mxu0 %v2358
  %2612 = vmatpush.bf16.msra.mxu0 %v2354
  %2613 = vmatpush.bf16.msra.mxu0 %v2350
  %2614 = vmatpush.bf16.msra.mxu0 %v2346
  %2615 = vmatpush.bf16.msra.mxu0 %v2342
  %2616 = vmatpush.bf16.msra.mxu0 %v2338
  %2617 = vmatmul.bf16.gmra.mxu0 %v2114
  %v2618 = vpop.f32.mrf.mxu0
  %v2619 = vadd.f32 %v2097, %v2618
  %v2620 = vpop.f32.mrf.mxu0
  %v2621 = vadd.f32 %v2102, %v2620
  %2622 = vdwg.mxu0
  %2623 = vmatpush.bf16.msra.mxu0 %v2398
  %2624 = vmatpush.bf16.msra.mxu0 %v2394
  %2625 = vmatpush.bf16.msra.mxu0 %v2390
  %2626 = vmatpush.bf16.msra.mxu0 %v2386
  %2627 = vmatpush.bf16.msra.mxu0 %v2382
  %2628 = vmatpush.bf16.msra.mxu0 %v2378
  %2629 = vmatpush.bf16.msra.mxu0 %v2374
  %2630 = vmatpush.bf16.msra.mxu0 %v2370
  %2631 = vmatmul.bf16.gmra.mxu0 %v2115
  %v2632 = vpop.f32.mrf.mxu0
  %v2633 = vadd.f32 %v2619, %v2632
  %v2634 = vpop.f32.mrf.mxu0
  %v2635 = vadd.f32 %v2621, %v2634
  %2636 = vdwg.mxu0
  %2637 = vmatpush.bf16.msra.mxu0 0
  %2638 = vmatpush.bf16.msra.mxu0 0
  %2639 = vmatpush.bf16.msra.mxu0 0
  %2640 = vmatpush.bf16.msra.mxu0 0
  %2641 = vmatpush.bf16.msra.mxu0 0
  %2642 = vmatpush.bf16.msra.mxu0 0
  %2643 = vmatpush.bf16.msra.mxu0 %v2406
  %2644 = vmatpush.bf16.msra.mxu0 %v2402
  %2645 = vmatmul.bf16.gmra.mxu0 %v2481
  %v2646 = vpop.f32.mrf.mxu0
  %v2647 = vadd.f32 %v2633, %v2646
  %v2648 = vpop.f32.mrf.mxu0
  %v2649 = vadd.f32 %v2635, %v2648
  %2650 = vdwg.mxu0
  %2651 = vst [vmem:[%s12] sm:$0xff] %v2521
  %2652 = vst [vmem:[%s12 + $0x8] sm:$0xff] %v2563
  %2653 = vst [vmem:[%s12 + $0x10] sm:$0xff] %v2605
  %2654 = vst [vmem:[%s12 + $0x18] sm:$0xff] %v2647
  %2655 = vst [vmem:[%s12 + $0x20] sm:$0xff] %v2523
  %2656 = vst [vmem:[%s12 + $0x28] sm:$0xff] %v2565
  %2657 = vst [vmem:[%s12 + $0x30] sm:$0xff] %v2607
  %2658 = vst [vmem:[%s12 + $0x38] sm:$0xff] %v2649
  %2659 = vrot.lane.b32.xlu0 %v2521, 17
  %v2660 = vpop.permute.xlu0 %2659
  %2661 = vrot.lane.b32.xlu0 %v2523, 17
  %v2662 = vpop.permute.xlu0 %2661
  %2663 = vrot.lane.b32.xlu0 %v2563, 17
  %v2664 = vpop.permute.xlu0 %2663
  %2665 = vrot.lane.b32.xlu0 %v2565, 17
  %v2666 = vpop.permute.xlu0 %2665
  %2667 = vrot.lane.b32.xlu0 %v2605, 17
  %v2668 = vpop.permute.xlu0 %2667
  %2669 = vrot.lane.b32.xlu0 %v2607, 17
  %v2670 = vpop.permute.xlu0 %2669
  %2671 = vrot.lane.b32.xlu0 %v2647, 17
  %v2672 = vpop.permute.xlu0 %2671
  %2673 = vrot.lane.b32.xlu0 %v2649, 17
  %v2674 = vpop.permute.xlu0 %2673
  %v2675 = vsel %vm72, %v2668, %v2672
  %v2676 = vsel %vm72, %v2670, %v2674
  %v2677 = vsel %vm72, %v2664, %v2668
  %v2678 = vsel %vm72, %v2666, %v2670
  %v2679 = vsel %vm72, %v2660, %v2664
  %v2680 = vsel %vm72, %v2662, %v2666
  %v2681 = vsel %vm72, %v2672, %v2660
  %v2682 = vsel %vm72, %v2674, %v2662
  %v2683 = vld [vmem:[%s0] ss:$8 sm:$0xf]
  %v2685 = vperm.slane %v2683, 0
  %v2686 = vperm.slane %v2683, 1
  %v2687 = vperm.slane %v2683, 2
  %v2688 = vperm.slane %v2683, 3
  %v2693 = vmul.f32 %v2681, %v2685
  %v2694 = vmul.f32 %v2679, %v2686
  %v2695 = vmul.f32 %v2677, %v2687
  %v2696 = vmul.f32 %v2675, %v2688
  %v2697 = vmul.f32 %v2682, %v2685
  %v2698 = vmul.f32 %v2680, %v2686
  %v2699 = vmul.f32 %v2678, %v2687
  %v2700 = vmul.f32 %v2676, %v2688
  %v2701 = vpack.c.bf16 %v2694, %v2693
  %v2702 = vpack.c.bf16 %v2696, %v2695
  %v2703 = vpack.c.bf16 %v2698, %v2697
  %v2704 = vpack.c.bf16 %v2700, %v2699
  %2705 = vst [vmem:[#allocation2] sm:$0xff] %v2701
  %2706 = vst [vmem:[#allocation2 + $0x8] sm:$0xff] %v2702
  %2707 = vst [vmem:[#allocation2 + $0x10] sm:$0xff] %v2703
  %2708 = vst [vmem:[#allocation2 + $0x18] sm:$0xff] %v2704
  %2709 = vrot.lane.b32.xlu0 %v2521, 16
  %v2710 = vpop.permute.xlu0 %2709
  %2711 = vrot.lane.b32.xlu0 %v2523, 16
  %v2712 = vpop.permute.xlu0 %2711
  %2713 = vrot.lane.b32.xlu0 %v2563, 16
  %v2714 = vpop.permute.xlu0 %2713
  %2715 = vrot.lane.b32.xlu0 %v2565, 16
  %v2716 = vpop.permute.xlu0 %2715
  %2717 = vrot.lane.b32.xlu0 %v2605, 16
  %v2718 = vpop.permute.xlu0 %2717
  %2719 = vrot.lane.b32.xlu0 %v2607, 16
  %v2720 = vpop.permute.xlu0 %2719
  %2721 = vrot.lane.b32.xlu0 %v2647, 16
  %v2722 = vpop.permute.xlu0 %2721
  %2723 = vrot.lane.b32.xlu0 %v2649, 16
  %v2724 = vpop.permute.xlu0 %2723
  %v2725 = vsel %vm123, %v2718, %v2722
  %v2726 = vsel %vm123, %v2720, %v2724
  %v2727 = vsel %vm123, %v2714, %v2718
  %v2728 = vsel %vm123, %v2716, %v2720
  %v2729 = vsel %vm123, %v2710, %v2714
  %v2730 = vsel %vm123, %v2712, %v2716
  %v2731 = vsel %vm123, %v2722, %v2710
  %v2732 = vsel %vm123, %v2724, %v2712
  %v2733 = vld [vmem:[%s132] ss:$8 sm:$0xf]
  %v2735 = vperm.slane %v2733, 0
  %v2736 = vperm.slane %v2733, 1
  %v2737 = vperm.slane %v2733, 2
  %v2738 = vperm.slane %v2733, 3
  %v2743 = vmul.f32 %v2731, %v2735
  %v2744 = vmul.f32 %v2729, %v2736
  %v2745 = vmul.f32 %v2727, %v2737
  %v2746 = vmul.f32 %v2725, %v2738
  %v2747 = vmul.f32 %v2732, %v2735
  %v2748 = vmul.f32 %v2730, %v2736
  %v2749 = vmul.f32 %v2728, %v2737
  %v2750 = vmul.f32 %v2726, %v2738
  %v2751 = vpack.c.bf16 %v2744, %v2743
  %v2752 = vpack.c.bf16 %v2746, %v2745
  %v2753 = vpack.c.bf16 %v2748, %v2747
  %v2754 = vpack.c.bf16 %v2750, %v2749
  %2755 = vst [vmem:[#allocation2 + $0x20] sm:$0xff] %v2751
  %2756 = vst [vmem:[#allocation2 + $0x28] sm:$0xff] %v2752
  %2757 = vst [vmem:[#allocation2 + $0x30] sm:$0xff] %v2753
  %2758 = vst [vmem:[#allocation2 + $0x38] sm:$0xff] %v2754
  %2759 = vrot.lane.b32.xlu0 %v2521, 15
  %v2760 = vpop.permute.xlu0 %2759
  %2761 = vrot.lane.b32.xlu0 %v2523, 15
  %v2762 = vpop.permute.xlu0 %2761
  %2763 = vrot.lane.b32.xlu0 %v2563, 15
  %v2764 = vpop.permute.xlu0 %2763
  %2765 = vrot.lane.b32.xlu0 %v2565, 15
  %v2766 = vpop.permute.xlu0 %2765
  %2767 = vrot.lane.b32.xlu0 %v2605, 15
  %v2768 = vpop.permute.xlu0 %2767
  %2769 = vrot.lane.b32.xlu0 %v2607, 15
  %v2770 = vpop.permute.xlu0 %2769
  %2771 = vrot.lane.b32.xlu0 %v2647, 15
  %v2772 = vpop.permute.xlu0 %2771
  %2773 = vrot.lane.b32.xlu0 %v2649, 15
  %v2774 = vpop.permute.xlu0 %2773
  %v2775 = vsel %vm175, %v2768, %v2772
  %v2776 = vsel %vm175, %v2770, %v2774
  %v2777 = vsel %vm175, %v2764, %v2768
  %v2778 = vsel %vm175, %v2766, %v2770
  %v2779 = vsel %vm175, %v2760, %v2764
  %v2780 = vsel %vm175, %v2762, %v2766
  %v2781 = vsel %vm175, %v2772, %v2760
  %v2782 = vsel %vm175, %v2774, %v2762
  %v2783 = vld [vmem:[%s184] ss:$8 sm:$0xf]
  %v2785 = vperm.slane %v2783, 0
  %v2786 = vperm.slane %v2783, 1
  %v2787 = vperm.slane %v2783, 2
  %v2788 = vperm.slane %v2783, 3
  %v2793 = vmul.f32 %v2781, %v2785
  %v2794 = vmul.f32 %v2779, %v2786
  %v2795 = vmul.f32 %v2777, %v2787
  %v2796 = vmul.f32 %v2775, %v2788
  %v2797 = vmul.f32 %v2782, %v2785
  %v2798 = vmul.f32 %v2780, %v2786
  %v2799 = vmul.f32 %v2778, %v2787
  %v2800 = vmul.f32 %v2776, %v2788
  %v2801 = vpack.c.bf16 %v2794, %v2793
  %v2802 = vpack.c.bf16 %v2796, %v2795
  %v2803 = vpack.c.bf16 %v2798, %v2797
  %v2804 = vpack.c.bf16 %v2800, %v2799
  %2805 = vst [vmem:[#allocation2 + $0x40] sm:$0xff] %v2801
  %2806 = vst [vmem:[#allocation2 + $0x48] sm:$0xff] %v2802
  %2807 = vst [vmem:[#allocation2 + $0x50] sm:$0xff] %v2803
  %2808 = vst [vmem:[#allocation2 + $0x58] sm:$0xff] %v2804
  %2809 = vrot.lane.b32.xlu0 %v2521, 1
  %v2810 = vpop.permute.xlu0 %2809
  %2811 = vrot.lane.b32.xlu0 %v2523, 1
  %v2812 = vpop.permute.xlu0 %2811
  %2813 = vrot.lane.b32.xlu0 %v2563, 1
  %v2814 = vpop.permute.xlu0 %2813
  %2815 = vrot.lane.b32.xlu0 %v2565, 1
  %v2816 = vpop.permute.xlu0 %2815
  %2817 = vrot.lane.b32.xlu0 %v2605, 1
  %v2818 = vpop.permute.xlu0 %2817
  %2819 = vrot.lane.b32.xlu0 %v2607, 1
  %v2820 = vpop.permute.xlu0 %2819
  %2821 = vrot.lane.b32.xlu0 %v2647, 1
  %v2822 = vpop.permute.xlu0 %2821
  %2823 = vrot.lane.b32.xlu0 %v2649, 1
  %v2824 = vpop.permute.xlu0 %2823
  %v2825 = vsel %vm227, %v2818, %v2822
  %v2826 = vsel %vm227, %v2820, %v2824
  %v2827 = vsel %vm227, %v2814, %v2818
  %v2828 = vsel %vm227, %v2816, %v2820
  %v2829 = vsel %vm227, %v2810, %v2814
  %v2830 = vsel %vm227, %v2812, %v2816
  %v2831 = vsel %vm227, %v2822, %v2810
  %v2832 = vsel %vm227, %v2824, %v2812
  %v2833 = vld [vmem:[%s236] ss:$8 sm:$0xf]
  %v2835 = vperm.slane %v2833, 0
  %v2836 = vperm.slane %v2833, 1
  %v2837 = vperm.slane %v2833, 2
  %v2838 = vperm.slane %v2833, 3
  %v2843 = vmul.f32 %v2831, %v2835
  %v2844 = vmul.f32 %v2829, %v2836
  %v2845 = vmul.f32 %v2827, %v2837
  %v2846 = vmul.f32 %v2825, %v2838
  %v2847 = vmul.f32 %v2832, %v2835
  %v2848 = vmul.f32 %v2830, %v2836
  %v2849 = vmul.f32 %v2828, %v2837
  %v2850 = vmul.f32 %v2826, %v2838
  %v2851 = vpack.c.bf16 %v2844, %v2843
  %v2852 = vpack.c.bf16 %v2846, %v2845
  %v2853 = vpack.c.bf16 %v2848, %v2847
  %v2854 = vpack.c.bf16 %v2850, %v2849
  %2855 = vst [vmem:[#allocation2 + $0x60] sm:$0xff] %v2851
  %2856 = vst [vmem:[#allocation2 + $0x68] sm:$0xff] %v2852
  %2857 = vst [vmem:[#allocation2 + $0x70] sm:$0xff] %v2853
  %2858 = vst [vmem:[#allocation2 + $0x78] sm:$0xff] %v2854
  %v2859 = vpack.c.bf16 %v2563, %v2521
  %v2860 = vpack.c.bf16 %v2647, %v2605
  %v2861 = vpack.c.bf16 %v2565, %v2523
  %v2862 = vpack.c.bf16 %v2649, %v2607
  %2863 = vst [vmem:[#allocation2 + $0x80] sm:$0xff] %v2859
  %2864 = vst [vmem:[#allocation2 + $0x88] sm:$0xff] %v2860
  %2865 = vst [vmem:[#allocation2 + $0x90] sm:$0xff] %v2861
  %2866 = vst [vmem:[#allocation2 + $0x98] sm:$0xff] %v2862
  %2867 = vrot.lane.b32.xlu0 %v2521, 127
  %v2868 = vpop.permute.xlu0 %2867
  %2869 = vrot.lane.b32.xlu0 %v2523, 127
  %v2870 = vpop.permute.xlu0 %2869
  %2871 = vrot.lane.b32.xlu0 %v2563, 127
  %v2872 = vpop.permute.xlu0 %2871
  %2873 = vrot.lane.b32.xlu0 %v2565, 127
  %v2874 = vpop.permute.xlu0 %2873
  %2875 = vrot.lane.b32.xlu0 %v2605, 127
  %v2876 = vpop.permute.xlu0 %2875
  %2877 = vrot.lane.b32.xlu0 %v2607, 127
  %v2878 = vpop.permute.xlu0 %2877
  %2879 = vrot.lane.b32.xlu0 %v2647, 127
  %v2880 = vpop.permute.xlu0 %2879
  %2881 = vrot.lane.b32.xlu0 %v2649, 127
  %v2882 = vpop.permute.xlu0 %2881
  %v2883 = vsel %vm283, %v2876, %v2880
  %v2884 = vsel %vm283, %v2878, %v2882
  %v2885 = vsel %vm283, %v2872, %v2876
  %v2886 = vsel %vm283, %v2874, %v2878
  %v2887 = vsel %vm283, %v2868, %v2872
  %v2888 = vsel %vm283, %v2870, %v2874
  %v2889 = vsel %vm283, %v2880, %v2868
  %v2890 = vsel %vm283, %v2882, %v2870
  %v2891 = vld [vmem:[%s292] ss:$8 sm:$0xf]
  %v2893 = vperm.slane %v2891, 0
  %v2894 = vperm.slane %v2891, 1
  %v2895 = vperm.slane %v2891, 2
  %v2896 = vperm.slane %v2891, 3
  %v2901 = vmul.f32 %v2887, %v2893
  %v2902 = vmul.f32 %v2885, %v2894
  %v2903 = vmul.f32 %v2883, %v2895
  %v2904 = vmul.f32 %v2889, %v2896
  %v2905 = vmul.f32 %v2888, %v2893
  %v2906 = vmul.f32 %v2886, %v2894
  %v2907 = vmul.f32 %v2884, %v2895
  %v2908 = vmul.f32 %v2890, %v2896
  %v2909 = vpack.c.bf16 %v2902, %v2901
  %v2910 = vpack.c.bf16 %v2904, %v2903
  %v2911 = vpack.c.bf16 %v2906, %v2905
  %v2912 = vpack.c.bf16 %v2908, %v2907
  %2913 = vst [vmem:[#allocation2 + $0xa0] sm:$0xff] %v2909
  %2914 = vst [vmem:[#allocation2 + $0xa8] sm:$0xff] %v2910
  %2915 = vst [vmem:[#allocation2 + $0xb0] sm:$0xff] %v2911
  %2916 = vst [vmem:[#allocation2 + $0xb8] sm:$0xff] %v2912
  %2917 = vrot.lane.b32.xlu0 %v2521, 113
  %v2918 = vpop.permute.xlu0 %2917
  %2919 = vrot.lane.b32.xlu0 %v2523, 113
  %v2920 = vpop.permute.xlu0 %2919
  %2921 = vrot.lane.b32.xlu0 %v2563, 113
  %v2922 = vpop.permute.xlu0 %2921
  %2923 = vrot.lane.b32.xlu0 %v2565, 113
  %v2924 = vpop.permute.xlu0 %2923
  %2925 = vrot.lane.b32.xlu0 %v2605, 113
  %v2926 = vpop.permute.xlu0 %2925
  %2927 = vrot.lane.b32.xlu0 %v2607, 113
  %v2928 = vpop.permute.xlu0 %2927
  %2929 = vrot.lane.b32.xlu0 %v2647, 113
  %v2930 = vpop.permute.xlu0 %2929
  %2931 = vrot.lane.b32.xlu0 %v2649, 113
  %v2932 = vpop.permute.xlu0 %2931
  %v2933 = vsel %vm335, %v2926, %v2930
  %v2934 = vsel %vm335, %v2928, %v2932
  %v2935 = vsel %vm335, %v2922, %v2926
  %v2936 = vsel %vm335, %v2924, %v2928
  %v2937 = vsel %vm335, %v2918, %v2922
  %v2938 = vsel %vm335, %v2920, %v2924
  %v2939 = vsel %vm335, %v2930, %v2918
  %v2940 = vsel %vm335, %v2932, %v2920
  %v2941 = vld [vmem:[%s344] ss:$8 sm:$0xf]
  %v2943 = vperm.slane %v2941, 0
  %v2944 = vperm.slane %v2941, 1
  %v2945 = vperm.slane %v2941, 2
  %v2946 = vperm.slane %v2941, 3
  %v2951 = vmul.f32 %v2937, %v2943
  %v2952 = vmul.f32 %v2935, %v2944
  %v2953 = vmul.f32 %v2933, %v2945
  %v2954 = vmul.f32 %v2939, %v2946
  %v2955 = vmul.f32 %v2938, %v2943
  %v2956 = vmul.f32 %v2936, %v2944
  %v2957 = vmul.f32 %v2934, %v2945
  %v2958 = vmul.f32 %v2940, %v2946
  %v2959 = vpack.c.bf16 %v2952, %v2951
  %v2960 = vpack.c.bf16 %v2954, %v2953
  %v2961 = vpack.c.bf16 %v2956, %v2955
  %v2962 = vpack.c.bf16 %v2958, %v2957
  %2963 = vst [vmem:[#allocation2 + $0xc0] sm:$0xff] %v2959
  %2964 = vst [vmem:[#allocation2 + $0xc8] sm:$0xff] %v2960
  %2965 = vst [vmem:[#allocation2 + $0xd0] sm:$0xff] %v2961
  %2966 = vst [vmem:[#allocation2 + $0xd8] sm:$0xff] %v2962
  %2967 = vrot.lane.b32.xlu0 %v2521, 112
  %v2968 = vpop.permute.xlu0 %2967
  %2969 = vrot.lane.b32.xlu0 %v2523, 112
  %v2970 = vpop.permute.xlu0 %2969
  %2971 = vrot.lane.b32.xlu0 %v2563, 112
  %v2972 = vpop.permute.xlu0 %2971
  %2973 = vrot.lane.b32.xlu0 %v2565, 112
  %v2974 = vpop.permute.xlu0 %2973
  %2975 = vrot.lane.b32.xlu0 %v2605, 112
  %v2976 = vpop.permute.xlu0 %2975
  %2977 = vrot.lane.b32.xlu0 %v2607, 112
  %v2978 = vpop.permute.xlu0 %2977
  %2979 = vrot.lane.b32.xlu0 %v2647, 112
  %v2980 = vpop.permute.xlu0 %2979
  %2981 = vrot.lane.b32.xlu0 %v2649, 112
  %v2982 = vpop.permute.xlu0 %2981
  %v2983 = vsel %vm387, %v2976, %v2980
  %v2984 = vsel %vm387, %v2978, %v2982
  %v2985 = vsel %vm387, %v2972, %v2976
  %v2986 = vsel %vm387, %v2974, %v2978
  %v2987 = vsel %vm387, %v2968, %v2972
  %v2988 = vsel %vm387, %v2970, %v2974
  %v2989 = vsel %vm387, %v2980, %v2968
  %v2990 = vsel %vm387, %v2982, %v2970
  %v2991 = vld [vmem:[%s396] ss:$8 sm:$0xf]
  %v2993 = vperm.slane %v2991, 0
  %v2994 = vperm.slane %v2991, 1
  %v2995 = vperm.slane %v2991, 2
  %v2996 = vperm.slane %v2991, 3
  %v3001 = vmul.f32 %v2987, %v2993
  %v3002 = vmul.f32 %v2985, %v2994
  %v3003 = vmul.f32 %v2983, %v2995
  %v3004 = vmul.f32 %v2989, %v2996
  %v3005 = vmul.f32 %v2988, %v2993
  %v3006 = vmul.f32 %v2986, %v2994
  %v3007 = vmul.f32 %v2984, %v2995
  %v3008 = vmul.f32 %v2990, %v2996
  %v3009 = vpack.c.bf16 %v3002, %v3001
  %v3010 = vpack.c.bf16 %v3004, %v3003
  %v3011 = vpack.c.bf16 %v3006, %v3005
  %v3012 = vpack.c.bf16 %v3008, %v3007
  %3013 = vst [vmem:[#allocation2 + $0xe0] sm:$0xff] %v3009
  %3014 = vst [vmem:[#allocation2 + $0xe8] sm:$0xff] %v3010
  %3015 = vst [vmem:[#allocation2 + $0xf0] sm:$0xff] %v3011
  %3016 = vst [vmem:[#allocation2 + $0xf8] sm:$0xff] %v3012
  %3017 = vrot.lane.b32.xlu0 %v2521, 111
  %v3018 = vpop.permute.xlu0 %3017
  %3019 = vrot.lane.b32.xlu0 %v2523, 111
  %v3020 = vpop.permute.xlu0 %3019
  %3021 = vrot.lane.b32.xlu0 %v2563, 111
  %v3022 = vpop.permute.xlu0 %3021
  %3023 = vrot.lane.b32.xlu0 %v2565, 111
  %v3024 = vpop.permute.xlu0 %3023
  %3025 = vrot.lane.b32.xlu0 %v2605, 111
  %v3026 = vpop.permute.xlu0 %3025
  %3027 = vrot.lane.b32.xlu0 %v2607, 111
  %v3028 = vpop.permute.xlu0 %3027
  %3029 = vrot.lane.b32.xlu0 %v2647, 111
  %v3030 = vpop.permute.xlu0 %3029
  %3031 = vrot.lane.b32.xlu0 %v2649, 111
  %v3032 = vpop.permute.xlu0 %3031
  %v3033 = vsel %vm439, %v3026, %v3030
  %v3034 = vsel %vm439, %v3028, %v3032
  %v3035 = vsel %vm439, %v3022, %v3026
  %v3036 = vsel %vm439, %v3024, %v3028
  %v3037 = vsel %vm439, %v3018, %v3022
  %v3038 = vsel %vm439, %v3020, %v3024
  %v3039 = vsel %vm439, %v3030, %v3018
  %v3040 = vsel %vm439, %v3032, %v3020
  %v3041 = vld [vmem:[%s448] ss:$8 sm:$0xf]
  %v3043 = vperm.slane %v3041, 0
  %v3044 = vperm.slane %v3041, 1
  %v3045 = vperm.slane %v3041, 2
  %v3046 = vperm.slane %v3041, 3
  %v3051 = vmul.f32 %v3037, %v3043
  %v3052 = vmul.f32 %v3035, %v3044
  %v3053 = vmul.f32 %v3033, %v3045
  %v3054 = vmul.f32 %v3039, %v3046
  %v3055 = vmul.f32 %v3038, %v3043
  %v3056 = vmul.f32 %v3036, %v3044
  %v3057 = vmul.f32 %v3034, %v3045
  %v3058 = vmul.f32 %v3040, %v3046
  %v3059 = vpack.c.bf16 %v3052, %v3051
  %v3060 = vpack.c.bf16 %v3054, %v3053
  %v3061 = vpack.c.bf16 %v3056, %v3055
  %v3062 = vpack.c.bf16 %v3058, %v3057
  %3063 = vst [vmem:[#allocation2 + $0x100] sm:$0xff] %v3059
  %3064 = vst [vmem:[#allocation2 + $0x108] sm:$0xff] %v3060
  %3065 = vst [vmem:[#allocation2 + $0x110] sm:$0xff] %v3061
  %3066 = vst [vmem:[#allocation2 + $0x118] sm:$0xff] %v3062
  %v3067 = vld [vmem:[%s6] sm:$0xff]
  %v3068 = vld [vmem:[%s6 + $0x8] sm:$0xff]
  %v3069 = vld [vmem:[%s7] sm:$0xff]
  %v3070 = vld [vmem:[%s7 + $0x8] sm:$0xff]
  %v3071 = vld [vmem:[#allocation2] sm:$0xff]
  %v3072 = vld [vmem:[#allocation2 + $0x8] sm:$0xff]
  %v3073 = vld [vmem:[#allocation2 + $0x10] sm:$0xff]
  %v3074 = vld [vmem:[#allocation2 + $0x18] sm:$0xff]
  %v3075 = vld [vmem:[#allocation2 + $0x20] sm:$0xff]
  %v3076 = vld [vmem:[#allocation2 + $0x28] sm:$0xff]
  %v3077 = vld [vmem:[#allocation2 + $0x30] sm:$0xff]
  %v3078 = vld [vmem:[#allocation2 + $0x38] sm:$0xff]
  %v3079 = vld [vmem:[#allocation2 + $0x40] sm:$0xff]
  %v3080 = vld [vmem:[#allocation2 + $0x48] sm:$0xff]
  %v3081 = vld [vmem:[#allocation2 + $0x50] sm:$0xff]
  %v3082 = vld [vmem:[#allocation2 + $0x58] sm:$0xff]
  %v3083 = vld [vmem:[#allocation2 + $0x60] sm:$0xff]
  %v3084 = vld [vmem:[#allocation2 + $0x68] sm:$0xff]
  %v3085 = vld [vmem:[#allocation2 + $0x70] sm:$0xff]
  %v3086 = vld [vmem:[#allocation2 + $0x78] sm:$0xff]
  %v3087 = vld [vmem:[#allocation2 + $0x80] sm:$0xff]
  %v3088 = vld [vmem:[#allocation2 + $0x88] sm:$0xff]
  %v3089 = vld [vmem:[#allocation2 + $0x90] sm:$0xff]
  %v3090 = vld [vmem:[#allocation2 + $0x98] sm:$0xff]
  %v3091 = vld [vmem:[#allocation2 + $0xa0] sm:$0xff]
  %v3092 = vld [vmem:[#allocation2 + $0xa8] sm:$0xff]
  %v3093 = vld [vmem:[#allocation2 + $0xb0] sm:$0xff]
  %v3094 = vld [vmem:[#allocation2 + $0xb8] sm:$0xff]
  %v3095 = vld [vmem:[#allocation2 + $0xc0] sm:$0xff]
  %v3096 = vld [vmem:[#allocation2 + $0xc8] sm:$0xff]
  %v3097 = vld [vmem:[#allocation2 + $0xd0] sm:$0xff]
  %v3098 = vld [vmem:[#allocation2 + $0xd8] sm:$0xff]
  %v3099 = vld [vmem:[#allocation2 + $0xe0] sm:$0xff]
  %v3100 = vld [vmem:[#allocation2 + $0xe8] sm:$0xff]
  %v3101 = vld [vmem:[#allocation2 + $0xf0] sm:$0xff]
  %v3102 = vld [vmem:[#allocation2 + $0xf8] sm:$0xff]
  %v3103 = vld [vmem:[#allocation2 + $0x100] sm:$0xff]
  %v3104 = vld [vmem:[#allocation2 + $0x108] sm:$0xff]
  %v3105 = vld [vmem:[#allocation2 + $0x110] sm:$0xff]
  %v3106 = vld [vmem:[#allocation2 + $0x118] sm:$0xff]
  %3108 = vset.pattern.permute.xlu0 0
  %3109 = vperm.xlu0 %3108, %v3069
  %v3110 = vpop.permute.xlu0 %3109
  %3113 = vset.pattern.permute.xlu0 0
  %3114 = vperm.xlu0 %3113, %v3070
  %v3115 = vpop.permute.xlu0 %3114
  %v3119 = vunpack.c.l.b16 %v3067
  %v3120 = vunpack.c.h.b16 %v3067
  %v3121 = vunpack.c.l.b16 %v3068
  %v3122 = vunpack.c.h.b16 %v3068
  %v3123 = vpack.c.b16 %v3121, %v3119
  %v3124 = vpack.c.b16 %v3122, %v3120
  %v3162 = vunpack.c.l.b16 %v3071
  %v3163 = vunpack.c.h.b16 %v3071
  %v3164 = vunpack.c.l.b16 %v3072
  %v3165 = vunpack.c.h.b16 %v3072
  %v3166 = vunpack.c.l.b16 %v3073
  %v3167 = vunpack.c.h.b16 %v3073
  %v3168 = vunpack.c.l.b16 %v3074
  %v3169 = vunpack.c.h.b16 %v3074
  %v3170 = vunpack.c.l.b16 %v3075
  %v3171 = vunpack.c.h.b16 %v3075
  %v3172 = vunpack.c.l.b16 %v3076
  %v3173 = vunpack.c.h.b16 %v3076
  %v3174 = vunpack.c.l.b16 %v3077
  %v3175 = vunpack.c.h.b16 %v3077
  %v3176 = vunpack.c.l.b16 %v3078
  %v3177 = vunpack.c.h.b16 %v3078
  %v3178 = vunpack.c.l.b16 %v3079
  %v3179 = vunpack.c.h.b16 %v3079
  %v3180 = vunpack.c.l.b16 %v3080
  %v3181 = vunpack.c.h.b16 %v3080
  %v3182 = vunpack.c.l.b16 %v3081
  %v3183 = vunpack.c.h.b16 %v3081
  %v3184 = vunpack.c.l.b16 %v3082
  %v3185 = vunpack.c.h.b16 %v3082
  %v3186 = vunpack.c.l.b16 %v3083
  %v3187 = vunpack.c.h.b16 %v3083
  %v3188 = vunpack.c.l.b16 %v3084
  %v3189 = vunpack.c.h.b16 %v3084
  %v3190 = vunpack.c.l.b16 %v3085
  %v3191 = vunpack.c.h.b16 %v3085
  %v3192 = vunpack.c.l.b16 %v3086
  %v3193 = vunpack.c.h.b16 %v3086
  %v3194 = vunpack.c.l.b16 %v3087
  %v3195 = vunpack.c.h.b16 %v3087
  %v3196 = vunpack.c.l.b16 %v3088
  %v3197 = vunpack.c.h.b16 %v3088
  %v3198 = vunpack.c.l.b16 %v3089
  %v3199 = vunpack.c.h.b16 %v3089
  %v3200 = vunpack.c.l.b16 %v3090
  %v3201 = vunpack.c.h.b16 %v3090
  %v3202 = vunpack.c.l.b16 %v3091
  %v3203 = vunpack.c.h.b16 %v3091
  %v3204 = vunpack.c.l.b16 %v3092
  %v3205 = vunpack.c.h.b16 %v3092
  %v3206 = vunpack.c.l.b16 %v3093
  %v3207 = vunpack.c.h.b16 %v3093
  %v3208 = vunpack.c.l.b16 %v3094
  %v3209 = vunpack.c.h.b16 %v3094
  %v3210 = vunpack.c.l.b16 %v3095
  %v3211 = vunpack.c.h.b16 %v3095
  %v3212 = vunpack.c.l.b16 %v3096
  %v3213 = vunpack.c.h.b16 %v3096
  %v3214 = vunpack.c.l.b16 %v3097
  %v3215 = vunpack.c.h.b16 %v3097
  %v3216 = vunpack.c.l.b16 %v3098
  %v3217 = vunpack.c.h.b16 %v3098
  %v3218 = vunpack.c.l.b16 %v3099
  %v3219 = vunpack.c.h.b16 %v3099
  %v3220 = vunpack.c.l.b16 %v3100
  %v3221 = vunpack.c.h.b16 %v3100
  %v3222 = vunpack.c.l.b16 %v3101
  %v3223 = vunpack.c.h.b16 %v3101
  %v3224 = vunpack.c.l.b16 %v3102
  %v3225 = vunpack.c.h.b16 %v3102
  %v3226 = vunpack.c.l.b16 %v3103
  %v3227 = vunpack.c.h.b16 %v3103
  %v3228 = vunpack.c.l.b16 %v3104
  %v3229 = vunpack.c.h.b16 %v3104
  %v3230 = vunpack.c.l.b16 %v3105
  %v3231 = vunpack.c.h.b16 %v3105
  %v3232 = vunpack.c.l.b16 %v3106
  %v3233 = vunpack.c.h.b16 %v3106
  %v3234 = vpack.c.b16 %v3166, %v3162
  %v3235 = vpack.c.b16 %v3167, %v3163
  %v3236 = vpack.c.b16 %v3168, %v3164
  %v3237 = vpack.c.b16 %v3169, %v3165
  %v3238 = vpack.c.b16 %v3174, %v3170
  %v3239 = vpack.c.b16 %v3175, %v3171
  %v3240 = vpack.c.b16 %v3176, %v3172
  %v3241 = vpack.c.b16 %v3177, %v3173
  %v3242 = vpack.c.b16 %v3182, %v3178
  %v3243 = vpack.c.b16 %v3183, %v3179
  %v3244 = vpack.c.b16 %v3184, %v3180
  %v3245 = vpack.c.b16 %v3185, %v3181
  %v3246 = vpack.c.b16 %v3190, %v3186
  %v3247 = vpack.c.b16 %v3191, %v3187
  %v3248 = vpack.c.b16 %v3192, %v3188
  %v3249 = vpack.c.b16 %v3193, %v3189
  %v3250 = vpack.c.b16 %v3198, %v3194
  %v3251 = vpack.c.b16 %v3199, %v3195
  %v3252 = vpack.c.b16 %v3200, %v3196
  %v3253 = vpack.c.b16 %v3201, %v3197
  %v3254 = vpack.c.b16 %v3206, %v3202
  %v3255 = vpack.c.b16 %v3207, %v3203
  %v3256 = vpack.c.b16 %v3208, %v3204
  %v3257 = vpack.c.b16 %v3209, %v3205
  %v3258 = vpack.c.b16 %v3214, %v3210
  %v3259 = vpack.c.b16 %v3215, %v3211
  %v3260 = vpack.c.b16 %v3216, %v3212
  %v3261 = vpack.c.b16 %v3217, %v3213
  %v3262 = vpack.c.b16 %v3222, %v3218
  %v3263 = vpack.c.b16 %v3223, %v3219
  %v3264 = vpack.c.b16 %v3224, %v3220
  %v3265 = vpack.c.b16 %v3225, %v3221
  %v3266 = vpack.c.b16 %v3230, %v3226
  %v3267 = vpack.c.b16 %v3231, %v3227
  %v3268 = vpack.c.b16 %v3232, %v3228
  %v3269 = vpack.c.b16 %v3233, %v3229
  %v3307 = vsel %vm714, %v3124, 0
  %3309 = vmatpush.bf16.msra.mxu0 %v3262
  %3310 = vmatpush.bf16.msra.mxu0 %v3258
  %3311 = vmatpush.bf16.msra.mxu0 %v3254
  %3312 = vmatpush.bf16.msra.mxu0 %v3250
  %3313 = vmatpush.bf16.msra.mxu0 %v3246
  %3314 = vmatpush.bf16.msra.mxu0 %v3242
  %3315 = vmatpush.bf16.msra.mxu0 %v3238
  %3316 = vmatpush.bf16.msra.mxu0 %v3234
  %3317 = vmatmul.bf16.gmra.mxu0 %v3123
  %v3318 = vpop.f32.mrf.mxu0
  %v3319 = vadd.f32 %v3110, %v3318
  %v3320 = vpop.f32.mrf.mxu0
  %v3321 = vadd.f32 %v3115, %v3320
  %3322 = vdwg.mxu0
  %3323 = vmatpush.bf16.msra.mxu0 0
  %3324 = vmatpush.bf16.msra.mxu0 0
  %3325 = vmatpush.bf16.msra.mxu0 0
  %3326 = vmatpush.bf16.msra.mxu0 0
  %3327 = vmatpush.bf16.msra.mxu0 0
  %3328 = vmatpush.bf16.msra.mxu0 0
  %3329 = vmatpush.bf16.msra.mxu0 0
  %3330 = vmatpush.bf16.msra.mxu0 %v3266
  %3331 = vmatmul.bf16.gmra.mxu0 %v3307
  %v3332 = vpop.f32.mrf.mxu0
  %v3333 = vadd.f32 %v3319, %v3332
  %v3334 = vpop.f32.mrf.mxu0
  %v3335 = vadd.f32 %v3321, %v3334
  %3336 = vdwg.mxu0
  %3337 = vmatpush.bf16.msra.mxu0 %v3263
  %3338 = vmatpush.bf16.msra.mxu0 %v3259
  %3339 = vmatpush.bf16.msra.mxu0 %v3255
  %3340 = vmatpush.bf16.msra.mxu0 %v3251
  %3341 = vmatpush.bf16.msra.mxu0 %v3247
  %3342 = vmatpush.bf16.msra.mxu0 %v3243
  %3343 = vmatpush.bf16.msra.mxu0 %v3239
  %3344 = vmatpush.bf16.msra.mxu0 %v3235
  %3345 = vmatmul.bf16.gmra.mxu0 %v3123
  %v3346 = vpop.f32.mrf.mxu0
  %v3347 = vadd.f32 %v3110, %v3346
  %v3348 = vpop.f32.mrf.mxu0
  %v3349 = vadd.f32 %v3115, %v3348
  %3350 = vdwg.mxu0
  %3351 = vmatpush.bf16.msra.mxu0 0
  %3352 = vmatpush.bf16.msra.mxu0 0
  %3353 = vmatpush.bf16.msra.mxu0 0
  %3354 = vmatpush.bf16.msra.mxu0 0
  %3355 = vmatpush.bf16.msra.mxu0 0
  %3356 = vmatpush.bf16.msra.mxu0 0
  %3357 = vmatpush.bf16.msra.mxu0 0
  %3358 = vmatpush.bf16.msra.mxu0 %v3267
  %3359 = vmatmul.bf16.gmra.mxu0 %v3307
  %v3360 = vpop.f32.mrf.mxu0
  %v3361 = vadd.f32 %v3347, %v3360
  %v3362 = vpop.f32.mrf.mxu0
  %v3363 = vadd.f32 %v3349, %v3362
  %3364 = vdwg.mxu0
  %3365 = vmatpush.bf16.msra.mxu0 %v3264
  %3366 = vmatpush.bf16.msra.mxu0 %v3260
  %3367 = vmatpush.bf16.msra.mxu0 %v3256
  %3368 = vmatpush.bf16.msra.mxu0 %v3252
  %3369 = vmatpush.bf16.msra.mxu0 %v3248
  %3370 = vmatpush.bf16.msra.mxu0 %v3244
  %3371 = vmatpush.bf16.msra.mxu0 %v3240
  %3372 = vmatpush.bf16.msra.mxu0 %v3236
  %3373 = vmatmul.bf16.gmra.mxu0 %v3123
  %v3374 = vpop.f32.mrf.mxu0
  %v3375 = vadd.f32 %v3110, %v3374
  %v3376 = vpop.f32.mrf.mxu0
  %v3377 = vadd.f32 %v3115, %v3376
  %3378 = vdwg.mxu0
  %3379 = vmatpush.bf16.msra.mxu0 0
  %3380 = vmatpush.bf16.msra.mxu0 0
  %3381 = vmatpush.bf16.msra.mxu0 0
  %3382 = vmatpush.bf16.msra.mxu0 0
  %3383 = vmatpush.bf16.msra.mxu0 0
  %3384 = vmatpush.bf16.msra.mxu0 0
  %3385 = vmatpush.bf16.msra.mxu0 0
  %3386 = vmatpush.bf16.msra.mxu0 %v3268
  %3387 = vmatmul.bf16.gmra.mxu0 %v3307
  %v3388 = vpop.f32.mrf.mxu0
  %v3389 = vadd.f32 %v3375, %v3388
  %v3390 = vpop.f32.mrf.mxu0
  %v3391 = vadd.f32 %v3377, %v3390
  %3392 = vdwg.mxu0
  %3393 = vmatpush.bf16.msra.mxu0 %v3265
  %3394 = vmatpush.bf16.msra.mxu0 %v3261
  %3395 = vmatpush.bf16.msra.mxu0 %v3257
  %3396 = vmatpush.bf16.msra.mxu0 %v3253
  %3397 = vmatpush.bf16.msra.mxu0 %v3249
  %3398 = vmatpush.bf16.msra.mxu0 %v3245
  %3399 = vmatpush.bf16.msra.mxu0 %v3241
  %3400 = vmatpush.bf16.msra.mxu0 %v3237
  %3401 = vmatmul.bf16.gmra.mxu0 %v3123
  %v3402 = vpop.f32.mrf.mxu0
  %v3403 = vadd.f32 %v3110, %v3402
  %v3404 = vpop.f32.mrf.mxu0
  %v3405 = vadd.f32 %v3115, %v3404
  %3406 = vdwg.mxu0
  %3407 = vmatpush.bf16.msra.mxu0 0
  %3408 = vmatpush.bf16.msra.mxu0 0
  %3409 = vmatpush.bf16.msra.mxu0 0
  %3410 = vmatpush.bf16.msra.mxu0 0
  %3411 = vmatpush.bf16.msra.mxu0 0
  %3412 = vmatpush.bf16.msra.mxu0 0
  %3413 = vmatpush.bf16.msra.mxu0 0
  %3414 = vmatpush.bf16.msra.mxu0 %v3269
  %3415 = vmatmul.bf16.gmra.mxu0 %v3307
  %v3416 = vpop.f32.mrf.mxu0
  %v3417 = vadd.f32 %v3403, %v3416
  %v3418 = vpop.f32.mrf.mxu0
  %v3419 = vadd.f32 %v3405, %v3418
  %3420 = vdwg.mxu0
  %v3421 = vmax.f32 %v3333, 0.0
  %v3422 = vmax.f32 %v3361, 0.0
  %v3423 = vmax.f32 %v3389, 0.0
  %v3424 = vmax.f32 %v3417, 0.0
  %v3425 = vmax.f32 %v3335, 0.0
  %v3426 = vmax.f32 %v3363, 0.0
  %v3427 = vmax.f32 %v3391, 0.0
  %v3428 = vmax.f32 %v3419, 0.0
  %3429 = vst [vmem:[%s12 + $0x40] sm:$0xff] %v3421
  %3430 = vst [vmem:[%s12 + $0x48] sm:$0xff] %v3422
  %3431 = vst [vmem:[%s12 + $0x50] sm:$0xff] %v3423
  %3432 = vst [vmem:[%s12 + $0x58] sm:$0xff] %v3424
  %3433 = vst [vmem:[%s12 + $0x60] sm:$0xff] %v3425
  %3434 = vst [vmem:[%s12 + $0x68] sm:$0xff] %v3426
  %3435 = vst [vmem:[%s12 + $0x70] sm:$0xff] %v3427
  %3436 = vst [vmem:[%s12 + $0x78] sm:$0xff] %v3428
  %3437 = vrot.lane.b32.xlu0 %v3421, 17
  %v3438 = vpop.permute.xlu0 %3437
  %3439 = vrot.lane.b32.xlu0 %v3425, 17
  %v3440 = vpop.permute.xlu0 %3439
  %3441 = vrot.lane.b32.xlu0 %v3422, 17
  %v3442 = vpop.permute.xlu0 %3441
  %3443 = vrot.lane.b32.xlu0 %v3426, 17
  %v3444 = vpop.permute.xlu0 %3443
  %3445 = vrot.lane.b32.xlu0 %v3423, 17
  %v3446 = vpop.permute.xlu0 %3445
  %3447 = vrot.lane.b32.xlu0 %v3427, 17
  %v3448 = vpop.permute.xlu0 %3447
  %3449 = vrot.lane.b32.xlu0 %v3424, 17
  %v3450 = vpop.permute.xlu0 %3449
  %3451 = vrot.lane.b32.xlu0 %v3428, 17
  %v3452 = vpop.permute.xlu0 %3451
  %v3453 = vsel %vm72, %v3446, %v3450
  %v3454 = vsel %vm72, %v3448, %v3452
  %v3455 = vsel %vm72, %v3442, %v3446
  %v3456 = vsel %vm72, %v3444, %v3448
  %v3457 = vsel %vm72, %v3438, %v3442
  %v3458 = vsel %vm72, %v3440, %v3444
  %v3459 = vsel %vm72, %v3450, %v3438
  %v3460 = vsel %vm72, %v3452, %v3440
  %v3461 = vld [vmem:[%s0] ss:$8 sm:$0xf]
  %v3463 = vperm.slane %v3461, 0
  %v3464 = vperm.slane %v3461, 1
  %v3465 = vperm.slane %v3461, 2
  %v3466 = vperm.slane %v3461, 3
  %v3471 = vmul.f32 %v3459, %v3463
  %v3472 = vmul.f32 %v3457, %v3464
  %v3473 = vmul.f32 %v3455, %v3465
  %v3474 = vmul.f32 %v3453, %v3466
  %v3475 = vmul.f32 %v3460, %v3463
  %v3476 = vmul.f32 %v3458, %v3464
  %v3477 = vmul.f32 %v3456, %v3465
  %v3478 = vmul.f32 %v3454, %v3466
  %v3479 = vpack.c.bf16 %v3472, %v3471
  %v3480 = vpack.c.bf16 %v3474, %v3473
  %v3481 = vpack.c.bf16 %v3476, %v3475
  %v3482 = vpack.c.bf16 %v3478, %v3477
  %3483 = vst [vmem:[#allocation2 + $0x120] sm:$0xff] %v3479
  %3484 = vst [vmem:[#allocation2 + $0x128] sm:$0xff] %v3480
  %3485 = vst [vmem:[#allocation2 + $0x130] sm:$0xff] %v3481
  %3486 = vst [vmem:[#allocation2 + $0x138] sm:$0xff] %v3482
  %3487 = vrot.lane.b32.xlu0 %v3421, 16
  %v3488 = vpop.permute.xlu0 %3487
  %3489 = vrot.lane.b32.xlu0 %v3425, 16
  %v3490 = vpop.permute.xlu0 %3489
  %3491 = vrot.lane.b32.xlu0 %v3422, 16
  %v3492 = vpop.permute.xlu0 %3491
  %3493 = vrot.lane.b32.xlu0 %v3426, 16
  %v3494 = vpop.permute.xlu0 %3493
  %3495 = vrot.lane.b32.xlu0 %v3423, 16
  %v3496 = vpop.permute.xlu0 %3495
  %3497 = vrot.lane.b32.xlu0 %v3427, 16
  %v3498 = vpop.permute.xlu0 %3497
  %3499 = vrot.lane.b32.xlu0 %v3424, 16
  %v3500 = vpop.permute.xlu0 %3499
  %3501 = vrot.lane.b32.xlu0 %v3428, 16
  %v3502 = vpop.permute.xlu0 %3501
  %v3503 = vsel %vm123, %v3496, %v3500
  %v3504 = vsel %vm123, %v3498, %v3502
  %v3505 = vsel %vm123, %v3492, %v3496
  %v3506 = vsel %vm123, %v3494, %v3498
  %v3507 = vsel %vm123, %v3488, %v3492
  %v3508 = vsel %vm123, %v3490, %v3494
  %v3509 = vsel %vm123, %v3500, %v3488
  %v3510 = vsel %vm123, %v3502, %v3490
  %v3511 = vld [vmem:[%s132] ss:$8 sm:$0xf]
  %v3513 = vperm.slane %v3511, 0
  %v3514 = vperm.slane %v3511, 1
  %v3515 = vperm.slane %v3511, 2
  %v3516 = vperm.slane %v3511, 3
  %v3521 = vmul.f32 %v3509, %v3513
  %v3522 = vmul.f32 %v3507, %v3514
  %v3523 = vmul.f32 %v3505, %v3515
  %v3524 = vmul.f32 %v3503, %v3516
  %v3525 = vmul.f32 %v3510, %v3513
  %v3526 = vmul.f32 %v3508, %v3514
  %v3527 = vmul.f32 %v3506, %v3515
  %v3528 = vmul.f32 %v3504, %v3516
  %v3529 = vpack.c.bf16 %v3522, %v3521
  %v3530 = vpack.c.bf16 %v3524, %v3523
  %v3531 = vpack.c.bf16 %v3526, %v3525
  %v3532 = vpack.c.bf16 %v3528, %v3527
  %3533 = vst [vmem:[#allocation2 + $0x140] sm:$0xff] %v3529
  %3534 = vst [vmem:[#allocation2 + $0x148] sm:$0xff] %v3530
  %3535 = vst [vmem:[#allocation2 + $0x150] sm:$0xff] %v3531
  %3536 = vst [vmem:[#allocation2 + $0x158] sm:$0xff] %v3532
  %3537 = vrot.lane.b32.xlu0 %v3421, 15
  %v3538 = vpop.permute.xlu0 %3537
  %3539 = vrot.lane.b32.xlu0 %v3425, 15
  %v3540 = vpop.permute.xlu0 %3539
  %3541 = vrot.lane.b32.xlu0 %v3422, 15
  %v3542 = vpop.permute.xlu0 %3541
  %3543 = vrot.lane.b32.xlu0 %v3426, 15
  %v3544 = vpop.permute.xlu0 %3543
  %3545 = vrot.lane.b32.xlu0 %v3423, 15
  %v3546 = vpop.permute.xlu0 %3545
  %3547 = vrot.lane.b32.xlu0 %v3427, 15
  %v3548 = vpop.permute.xlu0 %3547
  %3549 = vrot.lane.b32.xlu0 %v3424, 15
  %v3550 = vpop.permute.xlu0 %3549
  %3551 = vrot.lane.b32.xlu0 %v3428, 15
  %v3552 = vpop.permute.xlu0 %3551
  %v3553 = vsel %vm175, %v3546, %v3550
  %v3554 = vsel %vm175, %v3548, %v3552
  %v3555 = vsel %vm175, %v3542, %v3546
  %v3556 = vsel %vm175, %v3544, %v3548
  %v3557 = vsel %vm175, %v3538, %v3542
  %v3558 = vsel %vm175, %v3540, %v3544
  %v3559 = vsel %vm175, %v3550, %v3538
  %v3560 = vsel %vm175, %v3552, %v3540
  %v3561 = vld [vmem:[%s184] ss:$8 sm:$0xf]
  %v3563 = vperm.slane %v3561, 0
  %v3564 = vperm.slane %v3561, 1
  %v3565 = vperm.slane %v3561, 2
  %v3566 = vperm.slane %v3561, 3
  %v3571 = vmul.f32 %v3559, %v3563
  %v3572 = vmul.f32 %v3557, %v3564
  %v3573 = vmul.f32 %v3555, %v3565
  %v3574 = vmul.f32 %v3553, %v3566
  %v3575 = vmul.f32 %v3560, %v3563
  %v3576 = vmul.f32 %v3558, %v3564
  %v3577 = vmul.f32 %v3556, %v3565
  %v3578 = vmul.f32 %v3554, %v3566
  %v3579 = vpack.c.bf16 %v3572, %v3571
  %v3580 = vpack.c.bf16 %v3574, %v3573
  %v3581 = vpack.c.bf16 %v3576, %v3575
  %v3582 = vpack.c.bf16 %v3578, %v3577
  %3583 = vst [vmem:[#allocation2 + $0x160] sm:$0xff] %v3579
  %3584 = vst [vmem:[#allocation2 + $0x168] sm:$0xff] %v3580
  %3585 = vst [vmem:[#allocation2 + $0x170] sm:$0xff] %v3581
  %3586 = vst [vmem:[#allocation2 + $0x178] sm:$0xff] %v3582
  %3587 = vrot.lane.b32.xlu0 %v3421, 1
  %v3588 = vpop.permute.xlu0 %3587
  %3589 = vrot.lane.b32.xlu0 %v3425, 1
  %v3590 = vpop.permute.xlu0 %3589
  %3591 = vrot.lane.b32.xlu0 %v3422, 1
  %v3592 = vpop.permute.xlu0 %3591
  %3593 = vrot.lane.b32.xlu0 %v3426, 1
  %v3594 = vpop.permute.xlu0 %3593
  %3595 = vrot.lane.b32.xlu0 %v3423, 1
  %v3596 = vpop.permute.xlu0 %3595
  %3597 = vrot.lane.b32.xlu0 %v3427, 1
  %v3598 = vpop.permute.xlu0 %3597
  %3599 = vrot.lane.b32.xlu0 %v3424, 1
  %v3600 = vpop.permute.xlu0 %3599
  %3601 = vrot.lane.b32.xlu0 %v3428, 1
  %v3602 = vpop.permute.xlu0 %3601
  %v3603 = vsel %vm227, %v3596, %v3600
  %v3604 = vsel %vm227, %v3598, %v3602
  %v3605 = vsel %vm227, %v3592, %v3596
  %v3606 = vsel %vm227, %v3594, %v3598
  %v3607 = vsel %vm227, %v3588, %v3592
  %v3608 = vsel %vm227, %v3590, %v3594
  %v3609 = vsel %vm227, %v3600, %v3588
  %v3610 = vsel %vm227, %v3602, %v3590
  %v3611 = vld [vmem:[%s236] ss:$8 sm:$0xf]
  %v3613 = vperm.slane %v3611, 0
  %v3614 = vperm.slane %v3611, 1
  %v3615 = vperm.slane %v3611, 2
  %v3616 = vperm.slane %v3611, 3
  %v3621 = vmul.f32 %v3609, %v3613
  %v3622 = vmul.f32 %v3607, %v3614
  %v3623 = vmul.f32 %v3605, %v3615
  %v3624 = vmul.f32 %v3603, %v3616
  %v3625 = vmul.f32 %v3610, %v3613
  %v3626 = vmul.f32 %v3608, %v3614
  %v3627 = vmul.f32 %v3606, %v3615
  %v3628 = vmul.f32 %v3604, %v3616
  %v3629 = vpack.c.bf16 %v3622, %v3621
  %v3630 = vpack.c.bf16 %v3624, %v3623
  %v3631 = vpack.c.bf16 %v3626, %v3625
  %v3632 = vpack.c.bf16 %v3628, %v3627
  %3633 = vst [vmem:[#allocation2 + $0x180] sm:$0xff] %v3629
  %3634 = vst [vmem:[#allocation2 + $0x188] sm:$0xff] %v3630
  %3635 = vst [vmem:[#allocation2 + $0x190] sm:$0xff] %v3631
  %3636 = vst [vmem:[#allocation2 + $0x198] sm:$0xff] %v3632
  %v3637 = vpack.c.bf16 %v3422, %v3421
  %v3638 = vpack.c.bf16 %v3424, %v3423
  %v3639 = vpack.c.bf16 %v3426, %v3425
  %v3640 = vpack.c.bf16 %v3428, %v3427
  %3641 = vst [vmem:[#allocation2 + $0x1a0] sm:$0xff] %v3637
  %3642 = vst [vmem:[#allocation2 + $0x1a8] sm:$0xff] %v3638
  %3643 = vst [vmem:[#allocation2 + $0x1b0] sm:$0xff] %v3639
  %3644 = vst [vmem:[#allocation2 + $0x1b8] sm:$0xff] %v3640
  %3645 = vrot.lane.b32.xlu0 %v3421, 127
  %v3646 = vpop.permute.xlu0 %3645
  %3647 = vrot.lane.b32.xlu0 %v3425, 127
  %v3648 = vpop.permute.xlu0 %3647
  %3649 = vrot.lane.b32.xlu0 %v3422, 127
  %v3650 = vpop.permute.xlu0 %3649
  %3651 = vrot.lane.b32.xlu0 %v3426, 127
  %v3652 = vpop.permute.xlu0 %3651
  %3653 = vrot.lane.b32.xlu0 %v3423, 127
  %v3654 = vpop.permute.xlu0 %3653
  %3655 = vrot.lane.b32.xlu0 %v3427, 127
  %v3656 = vpop.permute.xlu0 %3655
  %3657 = vrot.lane.b32.xlu0 %v3424, 127
  %v3658 = vpop.permute.xlu0 %3657
  %3659 = vrot.lane.b32.xlu0 %v3428, 127
  %v3660 = vpop.permute.xlu0 %3659
  %v3661 = vsel %vm283, %v3654, %v3658
  %v3662 = vsel %vm283, %v3656, %v3660
  %v3663 = vsel %vm283, %v3650, %v3654
  %v3664 = vsel %vm283, %v3652, %v3656
  %v3665 = vsel %vm283, %v3646, %v3650
  %v3666 = vsel %vm283, %v3648, %v3652
  %v3667 = vsel %vm283, %v3658, %v3646
  %v3668 = vsel %vm283, %v3660, %v3648
  %v3669 = vld [vmem:[%s292] ss:$8 sm:$0xf]
  %v3671 = vperm.slane %v3669, 0
  %v3672 = vperm.slane %v3669, 1
  %v3673 = vperm.slane %v3669, 2
  %v3674 = vperm.slane %v3669, 3
  %v3679 = vmul.f32 %v3665, %v3671
  %v3680 = vmul.f32 %v3663, %v3672
  %v3681 = vmul.f32 %v3661, %v3673
  %v3682 = vmul.f32 %v3667, %v3674
  %v3683 = vmul.f32 %v3666, %v3671
  %v3684 = vmul.f32 %v3664, %v3672
  %v3685 = vmul.f32 %v3662, %v3673
  %v3686 = vmul.f32 %v3668, %v3674
  %v3687 = vpack.c.bf16 %v3680, %v3679
  %v3688 = vpack.c.bf16 %v3682, %v3681
  %v3689 = vpack.c.bf16 %v3684, %v3683
  %v3690 = vpack.c.bf16 %v3686, %v3685
  %3691 = vst [vmem:[#allocation2 + $0x1c0] sm:$0xff] %v3687
  %3692 = vst [vmem:[#allocation2 + $0x1c8] sm:$0xff] %v3688
  %3693 = vst [vmem:[#allocation2 + $0x1d0] sm:$0xff] %v3689
  %3694 = vst [vmem:[#allocation2 + $0x1d8] sm:$0xff] %v3690
  %3695 = vrot.lane.b32.xlu0 %v3421, 113
  %v3696 = vpop.permute.xlu0 %3695
  %3697 = vrot.lane.b32.xlu0 %v3425, 113
  %v3698 = vpop.permute.xlu0 %3697
  %3699 = vrot.lane.b32.xlu0 %v3422, 113
  %v3700 = vpop.permute.xlu0 %3699
  %3701 = vrot.lane.b32.xlu0 %v3426, 113
  %v3702 = vpop.permute.xlu0 %3701
  %3703 = vrot.lane.b32.xlu0 %v3423, 113
  %v3704 = vpop.permute.xlu0 %3703
  %3705 = vrot.lane.b32.xlu0 %v3427, 113
  %v3706 = vpop.permute.xlu0 %3705
  %3707 = vrot.lane.b32.xlu0 %v3424, 113
  %v3708 = vpop.permute.xlu0 %3707
  %3709 = vrot.lane.b32.xlu0 %v3428, 113
  %v3710 = vpop.permute.xlu0 %3709
  %v3711 = vsel %vm335, %v3704, %v3708
  %v3712 = vsel %vm335, %v3706, %v3710
  %v3713 = vsel %vm335, %v3700, %v3704
  %v3714 = vsel %vm335, %v3702, %v3706
  %v3715 = vsel %vm335, %v3696, %v3700
  %v3716 = vsel %vm335, %v3698, %v3702
  %v3717 = vsel %vm335, %v3708, %v3696
  %v3718 = vsel %vm335, %v3710, %v3698
  %v3719 = vld [vmem:[%s344] ss:$8 sm:$0xf]
  %v3721 = vperm.slane %v3719, 0
  %v3722 = vperm.slane %v3719, 1
  %v3723 = vperm.slane %v3719, 2
  %v3724 = vperm.slane %v3719, 3
  %v3729 = vmul.f32 %v3715, %v3721
  %v3730 = vmul.f32 %v3713, %v3722
  %v3731 = vmul.f32 %v3711, %v3723
  %v3732 = vmul.f32 %v3717, %v3724
  %v3733 = vmul.f32 %v3716, %v3721
  %v3734 = vmul.f32 %v3714, %v3722
  %v3735 = vmul.f32 %v3712, %v3723
  %v3736 = vmul.f32 %v3718, %v3724
  %v3737 = vpack.c.bf16 %v3730, %v3729
  %v3738 = vpack.c.bf16 %v3732, %v3731
  %v3739 = vpack.c.bf16 %v3734, %v3733
  %v3740 = vpack.c.bf16 %v3736, %v3735
  %3741 = vst [vmem:[#allocation2 + $0x1e0] sm:$0xff] %v3737
  %3742 = vst [vmem:[#allocation2 + $0x1e8] sm:$0xff] %v3738
  %3743 = vst [vmem:[#allocation2 + $0x1f0] sm:$0xff] %v3739
  %3744 = vst [vmem:[#allocation2 + $0x1f8] sm:$0xff] %v3740
  %3745 = vrot.lane.b32.xlu0 %v3421, 112
  %v3746 = vpop.permute.xlu0 %3745
  %3747 = vrot.lane.b32.xlu0 %v3425, 112
  %v3748 = vpop.permute.xlu0 %3747
  %3749 = vrot.lane.b32.xlu0 %v3422, 112
  %v3750 = vpop.permute.xlu0 %3749
  %3751 = vrot.lane.b32.xlu0 %v3426, 112
  %v3752 = vpop.permute.xlu0 %3751
  %3753 = vrot.lane.b32.xlu0 %v3423, 112
  %v3754 = vpop.permute.xlu0 %3753
  %3755 = vrot.lane.b32.xlu0 %v3427, 112
  %v3756 = vpop.permute.xlu0 %3755
  %3757 = vrot.lane.b32.xlu0 %v3424, 112
  %v3758 = vpop.permute.xlu0 %3757
  %3759 = vrot.lane.b32.xlu0 %v3428, 112
  %v3760 = vpop.permute.xlu0 %3759
  %v3761 = vsel %vm387, %v3754, %v3758
  %v3762 = vsel %vm387, %v3756, %v3760
  %v3763 = vsel %vm387, %v3750, %v3754
  %v3764 = vsel %vm387, %v3752, %v3756
  %v3765 = vsel %vm387, %v3746, %v3750
  %v3766 = vsel %vm387, %v3748, %v3752
  %v3767 = vsel %vm387, %v3758, %v3746
  %v3768 = vsel %vm387, %v3760, %v3748
  %v3769 = vld [vmem:[%s396] ss:$8 sm:$0xf]
  %v3771 = vperm.slane %v3769, 0
  %v3772 = vperm.slane %v3769, 1
  %v3773 = vperm.slane %v3769, 2
  %v3774 = vperm.slane %v3769, 3
  %v3779 = vmul.f32 %v3765, %v3771
  %v3780 = vmul.f32 %v3763, %v3772
  %v3781 = vmul.f32 %v3761, %v3773
  %v3782 = vmul.f32 %v3767, %v3774
  %v3783 = vmul.f32 %v3766, %v3771
  %v3784 = vmul.f32 %v3764, %v3772
  %v3785 = vmul.f32 %v3762, %v3773
  %v3786 = vmul.f32 %v3768, %v3774
  %v3787 = vpack.c.bf16 %v3780, %v3779
  %v3788 = vpack.c.bf16 %v3782, %v3781
  %v3789 = vpack.c.bf16 %v3784, %v3783
  %v3790 = vpack.c.bf16 %v3786, %v3785
  %3791 = vst [vmem:[#allocation2 + $0x200] sm:$0xff] %v3787
  %3792 = vst [vmem:[#allocation2 + $0x208] sm:$0xff] %v3788
  %3793 = vst [vmem:[#allocation2 + $0x210] sm:$0xff] %v3789
  %3794 = vst [vmem:[#allocation2 + $0x218] sm:$0xff] %v3790
  %3795 = vrot.lane.b32.xlu0 %v3421, 111
  %v3796 = vpop.permute.xlu0 %3795
  %3797 = vrot.lane.b32.xlu0 %v3425, 111
  %v3798 = vpop.permute.xlu0 %3797
  %3799 = vrot.lane.b32.xlu0 %v3422, 111
  %v3800 = vpop.permute.xlu0 %3799
  %3801 = vrot.lane.b32.xlu0 %v3426, 111
  %v3802 = vpop.permute.xlu0 %3801
  %3803 = vrot.lane.b32.xlu0 %v3423, 111
  %v3804 = vpop.permute.xlu0 %3803
  %3805 = vrot.lane.b32.xlu0 %v3427, 111
  %v3806 = vpop.permute.xlu0 %3805
  %3807 = vrot.lane.b32.xlu0 %v3424, 111
  %v3808 = vpop.permute.xlu0 %3807
  %3809 = vrot.lane.b32.xlu0 %v3428, 111
  %v3810 = vpop.permute.xlu0 %3809
  %v3811 = vsel %vm439, %v3804, %v3808
  %v3812 = vsel %vm439, %v3806, %v3810
  %v3813 = vsel %vm439, %v3800, %v3804
  %v3814 = vsel %vm439, %v3802, %v3806
  %v3815 = vsel %vm439, %v3796, %v3800
  %v3816 = vsel %vm439, %v3798, %v3802
  %v3817 = vsel %vm439, %v3808, %v3796
  %v3818 = vsel %vm439, %v3810, %v3798
  %v3819 = vld [vmem:[%s448] ss:$8 sm:$0xf]
  %v3821 = vperm.slane %v3819, 0
  %v3822 = vperm.slane %v3819, 1
  %v3823 = vperm.slane %v3819, 2
  %v3824 = vperm.slane %v3819, 3
  %v3829 = vmul.f32 %v3815, %v3821
  %v3830 = vmul.f32 %v3813, %v3822
  %v3831 = vmul.f32 %v3811, %v3823
  %v3832 = vmul.f32 %v3817, %v3824
  %v3833 = vmul.f32 %v3816, %v3821
  %v3834 = vmul.f32 %v3814, %v3822
  %v3835 = vmul.f32 %v3812, %v3823
  %v3836 = vmul.f32 %v3818, %v3824
  %v3837 = vpack.c.bf16 %v3830, %v3829
  %v3838 = vpack.c.bf16 %v3832, %v3831
  %v3839 = vpack.c.bf16 %v3834, %v3833
  %v3840 = vpack.c.bf16 %v3836, %v3835
  %3841 = vst [vmem:[#allocation2 + $0x220] sm:$0xff] %v3837
  %3842 = vst [vmem:[#allocation2 + $0x228] sm:$0xff] %v3838
  %3843 = vst [vmem:[#allocation2 + $0x230] sm:$0xff] %v3839
  %3844 = vst [vmem:[#allocation2 + $0x238] sm:$0xff] %v3840
  %v3845 = vld [vmem:[%s8] sm:$0xff]
  %v3846 = vld [vmem:[%s8 + $0x8] sm:$0xf]
  %v3847 = vld [vmem:[%s8 + $0xc] sm:$0xff]
  %v3848 = vld [vmem:[%s8 + $0x14] sm:$0xf]
  %v3849 = vld [vmem:[%s9] sm:$0xff]
  %v3850 = vld [vmem:[%s9 + $0x8] sm:$0xff]
  %v3851 = vld [vmem:[#allocation2] sm:$0xff]
  %v3852 = vld [vmem:[#allocation2 + $0x8] sm:$0xff]
  %v3853 = vld [vmem:[#allocation2 + $0x10] sm:$0xff]
  %v3854 = vld [vmem:[#allocation2 + $0x18] sm:$0xff]
  %v3855 = vld [vmem:[#allocation2 + $0x20] sm:$0xff]
  %v3856 = vld [vmem:[#allocation2 + $0x28] sm:$0xff]
  %v3857 = vld [vmem:[#allocation2 + $0x30] sm:$0xff]
  %v3858 = vld [vmem:[#allocation2 + $0x38] sm:$0xff]
  %v3859 = vld [vmem:[#allocation2 + $0x40] sm:$0xff]
  %v3860 = vld [vmem:[#allocation2 + $0x48] sm:$0xff]
  %v3861 = vld [vmem:[#allocation2 + $0x50] sm:$0xff]
  %v3862 = vld [vmem:[#allocation2 + $0x58] sm:$0xff]
  %v3863 = vld [vmem:[#allocation2 + $0x60] sm:$0xff]
  %v3864 = vld [vmem:[#allocation2 + $0x68] sm:$0xff]
  %v3865 = vld [vmem:[#allocation2 + $0x70] sm:$0xff]
  %v3866 = vld [vmem:[#allocation2 + $0x78] sm:$0xff]
  %v3867 = vld [vmem:[#allocation2 + $0x80] sm:$0xff]
  %v3868 = vld [vmem:[#allocation2 + $0x88] sm:$0xff]
  %v3869 = vld [vmem:[#allocation2 + $0x90] sm:$0xff]
  %v3870 = vld [vmem:[#allocation2 + $0x98] sm:$0xff]
  %v3871 = vld [vmem:[#allocation2 + $0xa0] sm:$0xff]
  %v3872 = vld [vmem:[#allocation2 + $0xa8] sm:$0xff]
  %v3873 = vld [vmem:[#allocation2 + $0xb0] sm:$0xff]
  %v3874 = vld [vmem:[#allocation2 + $0xb8] sm:$0xff]
  %v3875 = vld [vmem:[#allocation2 + $0xc0] sm:$0xff]
  %v3876 = vld [vmem:[#allocation2 + $0xc8] sm:$0xff]
  %v3877 = vld [vmem:[#allocation2 + $0xd0] sm:$0xff]
  %v3878 = vld [vmem:[#allocation2 + $0xd8] sm:$0xff]
  %v3879 = vld [vmem:[#allocation2 + $0xe0] sm:$0xff]
  %v3880 = vld [vmem:[#allocation2 + $0xe8] sm:$0xff]
  %v3881 = vld [vmem:[#allocation2 + $0xf0] sm:$0xff]
  %v3882 = vld [vmem:[#allocation2 + $0xf8] sm:$0xff]
  %v3883 = vld [vmem:[#allocation2 + $0x100] sm:$0xff]
  %v3884 = vld [vmem:[#allocation2 + $0x108] sm:$0xff]
  %v3885 = vld [vmem:[#allocation2 + $0x110] sm:$0xff]
  %v3886 = vld [vmem:[#allocation2 + $0x118] sm:$0xff]
  %v3887 = vld [vmem:[#allocation2 + $0x120] sm:$0xff]
  %v3888 = vld [vmem:[#allocation2 + $0x128] sm:$0xff]
  %v3889 = vld [vmem:[#allocation2 + $0x130] sm:$0xff]
  %v3890 = vld [vmem:[#allocation2 + $0x138] sm:$0xff]
  %v3891 = vld [vmem:[#allocation2 + $0x140] sm:$0xff]
  %v3892 = vld [vmem:[#allocation2 + $0x148] sm:$0xff]
  %v3893 = vld [vmem:[#allocation2 + $0x150] sm:$0xff]
  %v3894 = vld [vmem:[#allocation2 + $0x158] sm:$0xff]
  %v3895 = vld [vmem:[#allocation2 + $0x160] sm:$0xff]
  %v3896 = vld [vmem:[#allocation2 + $0x168] sm:$0xff]
  %v3897 = vld [vmem:[#allocation2 + $0x170] sm:$0xff]
  %v3898 = vld [vmem:[#allocation2 + $0x178] sm:$0xff]
  %v3899 = vld [vmem:[#allocation2 + $0x180] sm:$0xff]
  %v3900 = vld [vmem:[#allocation2 + $0x188] sm:$0xff]
  %v3901 = vld [vmem:[#allocation2 + $0x190] sm:$0xff]
  %v3902 = vld [vmem:[#allocation2 + $0x198] sm:$0xff]
  %v3903 = vld [vmem:[#allocation2 + $0x1a0] sm:$0xff]
  %v3904 = vld [vmem:[#allocation2 + $0x1a8] sm:$0xff]
  %v3905 = vld [vmem:[#allocation2 + $0x1b0] sm:$0xff]
  %v3906 = vld [vmem:[#allocation2 + $0x1b8] sm:$0xff]
  %v3907 = vld [vmem:[#allocation2 + $0x1c0] sm:$0xff]
  %v3908 = vld [vmem:[#allocation2 + $0x1c8] sm:$0xff]
  %v3909 = vld [vmem:[#allocation2 + $0x1d0] sm:$0xff]
  %v3910 = vld [vmem:[#allocation2 + $0x1d8] sm:$0xff]
  %v3911 = vld [vmem:[#allocation2 + $0x1e0] sm:$0xff]
  %v3912 = vld [vmem:[#allocation2 + $0x1e8] sm:$0xff]
  %v3913 = vld [vmem:[#allocation2 + $0x1f0] sm:$0xff]
  %v3914 = vld [vmem:[#allocation2 + $0x1f8] sm:$0xff]
  %v3915 = vld [vmem:[#allocation2 + $0x200] sm:$0xff]
  %v3916 = vld [vmem:[#allocation2 + $0x208] sm:$0xff]
  %v3917 = vld [vmem:[#allocation2 + $0x210] sm:$0xff]
  %v3918 = vld [vmem:[#allocation2 + $0x218] sm:$0xff]
  %v3919 = vld [vmem:[#allocation2 + $0x220] sm:$0xff]
  %v3920 = vld [vmem:[#allocation2 + $0x228] sm:$0xff]
  %v3921 = vld [vmem:[#allocation2 + $0x230] sm:$0xff]
  %v3922 = vld [vmem:[#allocation2 + $0x238] sm:$0xff]
  %3924 = vset.pattern.permute.xlu0 0
  %3925 = vperm.xlu0 %3924, %v3849
  %v3926 = vpop.permute.xlu0 %3925
  %3929 = vset.pattern.permute.xlu0 0
  %3930 = vperm.xlu0 %3929, %v3850
  %v3931 = vpop.permute.xlu0 %3930
  %v3937 = vunpack.c.l.b16 %v3845
  %v3938 = vunpack.c.h.b16 %v3845
  %v3939 = vunpack.c.l.b16 %v3846
  %v3940 = vunpack.c.l.b16 %v3847
  %v3941 = vunpack.c.h.b16 %v3847
  %v3942 = vunpack.c.l.b16 %v3848
  %v3943 = vpack.c.b16 %v3940, %v3937
  %v3944 = vpack.c.b16 %v3941, %v3938
  %v3945 = vpack.c.b16 %v3942, %v3939
  %v4020 = vunpack.c.l.b16 %v3851
  %v4021 = vunpack.c.h.b16 %v3851
  %v4022 = vunpack.c.l.b16 %v3852
  %v4023 = vunpack.c.h.b16 %v3852
  %v4024 = vunpack.c.l.b16 %v3853
  %v4025 = vunpack.c.h.b16 %v3853
  %v4026 = vunpack.c.l.b16 %v3854
  %v4027 = vunpack.c.h.b16 %v3854
  %v4028 = vunpack.c.l.b16 %v3855
  %v4029 = vunpack.c.h.b16 %v3855
  %v4030 = vunpack.c.l.b16 %v3856
  %v4031 = vunpack.c.h.b16 %v3856
  %v4032 = vunpack.c.l.b16 %v3857
  %v4033 = vunpack.c.h.b16 %v3857
  %v4034 = vunpack.c.l.b16 %v3858
  %v4035 = vunpack.c.h.b16 %v3858
  %v4036 = vunpack.c.l.b16 %v3859
  %v4037 = vunpack.c.h.b16 %v3859
  %v4038 = vunpack.c.l.b16 %v3860
  %v4039 = vunpack.c.h.b16 %v3860
  %v4040 = vunpack.c.l.b16 %v3861
  %v4041 = vunpack.c.h.b16 %v3861
  %v4042 = vunpack.c.l.b16 %v3862
  %v4043 = vunpack.c.h.b16 %v3862
  %v4044 = vunpack.c.l.b16 %v3863
  %v4045 = vunpack.c.h.b16 %v3863
  %v4046 = vunpack.c.l.b16 %v3864
  %v4047 = vunpack.c.h.b16 %v3864
  %v4048 = vunpack.c.l.b16 %v3865
  %v4049 = vunpack.c.h.b16 %v3865
  %v4050 = vunpack.c.l.b16 %v3866
  %v4051 = vunpack.c.h.b16 %v3866
  %v4052 = vunpack.c.l.b16 %v3867
  %v4053 = vunpack.c.h.b16 %v3867
  %v4054 = vunpack.c.l.b16 %v3868
  %v4055 = vunpack.c.h.b16 %v3868
  %v4056 = vunpack.c.l.b16 %v3869
  %v4057 = vunpack.c.h.b16 %v3869
  %v4058 = vunpack.c.l.b16 %v3870
  %v4059 = vunpack.c.h.b16 %v3870
  %v4060 = vunpack.c.l.b16 %v3871
  %v4061 = vunpack.c.h.b16 %v3871
  %v4062 = vunpack.c.l.b16 %v3872
  %v4063 = vunpack.c.h.b16 %v3872
  %v4064 = vunpack.c.l.b16 %v3873
  %v4065 = vunpack.c.h.b16 %v3873
  %v4066 = vunpack.c.l.b16 %v3874
  %v4067 = vunpack.c.h.b16 %v3874
  %v4068 = vunpack.c.l.b16 %v3875
  %v4069 = vunpack.c.h.b16 %v3875
  %v4070 = vunpack.c.l.b16 %v3876
  %v4071 = vunpack.c.h.b16 %v3876
  %v4072 = vunpack.c.l.b16 %v3877
  %v4073 = vunpack.c.h.b16 %v3877
  %v4074 = vunpack.c.l.b16 %v3878
  %v4075 = vunpack.c.h.b16 %v3878
  %v4076 = vunpack.c.l.b16 %v3879
  %v4077 = vunpack.c.h.b16 %v3879
  %v4078 = vunpack.c.l.b16 %v3880
  %v4079 = vunpack.c.h.b16 %v3880
  %v4080 = vunpack.c.l.b16 %v3881
  %v4081 = vunpack.c.h.b16 %v3881
  %v4082 = vunpack.c.l.b16 %v3882
  %v4083 = vunpack.c.h.b16 %v3882
  %v4084 = vunpack.c.l.b16 %v3883
  %v4085 = vunpack.c.h.b16 %v3883
  %v4086 = vunpack.c.l.b16 %v3884
  %v4087 = vunpack.c.h.b16 %v3884
  %v4088 = vunpack.c.l.b16 %v3885
  %v4089 = vunpack.c.h.b16 %v3885
  %v4090 = vunpack.c.l.b16 %v3886
  %v4091 = vunpack.c.h.b16 %v3886
  %v4092 = vunpack.c.l.b16 %v3887
  %v4093 = vunpack.c.h.b16 %v3887
  %v4094 = vunpack.c.l.b16 %v3888
  %v4095 = vunpack.c.h.b16 %v3888
  %v4096 = vunpack.c.l.b16 %v3889
  %v4097 = vunpack.c.h.b16 %v3889
  %v4098 = vunpack.c.l.b16 %v3890
  %v4099 = vunpack.c.h.b16 %v3890
  %v4100 = vunpack.c.l.b16 %v3891
  %v4101 = vunpack.c.h.b16 %v3891
  %v4102 = vunpack.c.l.b16 %v3892
  %v4103 = vunpack.c.h.b16 %v3892
  %v4104 = vunpack.c.l.b16 %v3893
  %v4105 = vunpack.c.h.b16 %v3893
  %v4106 = vunpack.c.l.b16 %v3894
  %v4107 = vunpack.c.h.b16 %v3894
  %v4108 = vunpack.c.l.b16 %v3895
  %v4109 = vunpack.c.h.b16 %v3895
  %v4110 = vunpack.c.l.b16 %v3896
  %v4111 = vunpack.c.h.b16 %v3896
  %v4112 = vunpack.c.l.b16 %v3897
  %v4113 = vunpack.c.h.b16 %v3897
  %v4114 = vunpack.c.l.b16 %v3898
  %v4115 = vunpack.c.h.b16 %v3898
  %v4116 = vunpack.c.l.b16 %v3899
  %v4117 = vunpack.c.h.b16 %v3899
  %v4118 = vunpack.c.l.b16 %v3900
  %v4119 = vunpack.c.h.b16 %v3900
  %v4120 = vunpack.c.l.b16 %v3901
  %v4121 = vunpack.c.h.b16 %v3901
  %v4122 = vunpack.c.l.b16 %v3902
  %v4123 = vunpack.c.h.b16 %v3902
  %v4124 = vunpack.c.l.b16 %v3903
  %v4125 = vunpack.c.h.b16 %v3903
  %v4126 = vunpack.c.l.b16 %v3904
  %v4127 = vunpack.c.h.b16 %v3904
  %v4128 = vunpack.c.l.b16 %v3905
  %v4129 = vunpack.c.h.b16 %v3905
  %v4130 = vunpack.c.l.b16 %v3906
  %v4131 = vunpack.c.h.b16 %v3906
  %v4132 = vunpack.c.l.b16 %v3907
  %v4133 = vunpack.c.h.b16 %v3907
  %v4134 = vunpack.c.l.b16 %v3908
  %v4135 = vunpack.c.h.b16 %v3908
  %v4136 = vunpack.c.l.b16 %v3909
  %v4137 = vunpack.c.h.b16 %v3909
  %v4138 = vunpack.c.l.b16 %v3910
  %v4139 = vunpack.c.h.b16 %v3910
  %v4140 = vunpack.c.l.b16 %v3911
  %v4141 = vunpack.c.h.b16 %v3911
  %v4142 = vunpack.c.l.b16 %v3912
  %v4143 = vunpack.c.h.b16 %v3912
  %v4144 = vunpack.c.l.b16 %v3913
  %v4145 = vunpack.c.h.b16 %v3913
  %v4146 = vunpack.c.l.b16 %v3914
  %v4147 = vunpack.c.h.b16 %v3914
  %v4148 = vunpack.c.l.b16 %v3915
  %v4149 = vunpack.c.h.b16 %v3915
  %v4150 = vunpack.c.l.b16 %v3916
  %v4151 = vunpack.c.h.b16 %v3916
  %v4152 = vunpack.c.l.b16 %v3917
  %v4153 = vunpack.c.h.b16 %v3917
  %v4154 = vunpack.c.l.b16 %v3918
  %v4155 = vunpack.c.h.b16 %v3918
  %v4156 = vunpack.c.l.b16 %v3919
  %v4157 = vunpack.c.h.b16 %v3919
  %v4158 = vunpack.c.l.b16 %v3920
  %v4159 = vunpack.c.h.b16 %v3920
  %v4160 = vunpack.c.l.b16 %v3921
  %v4161 = vunpack.c.h.b16 %v3921
  %v4162 = vunpack.c.l.b16 %v3922
  %v4163 = vunpack.c.h.b16 %v3922
  %v4164 = vpack.c.b16 %v4024, %v4020
  %v4165 = vpack.c.b16 %v4025, %v4021
  %v4166 = vpack.c.b16 %v4026, %v4022
  %v4167 = vpack.c.b16 %v4027, %v4023
  %v4168 = vpack.c.b16 %v4032, %v4028
  %v4169 = vpack.c.b16 %v4033, %v4029
  %v4170 = vpack.c.b16 %v4034, %v4030
  %v4171 = vpack.c.b16 %v4035, %v4031
  %v4172 = vpack.c.b16 %v4040, %v4036
  %v4173 = vpack.c.b16 %v4041, %v4037
  %v4174 = vpack.c.b16 %v4042, %v4038
  %v4175 = vpack.c.b16 %v4043, %v4039
  %v4176 = vpack.c.b16 %v4048, %v4044
  %v4177 = vpack.c.b16 %v4049, %v4045
  %v4178 = vpack.c.b16 %v4050, %v4046
  %v4179 = vpack.c.b16 %v4051, %v4047
  %v4180 = vpack.c.b16 %v4056, %v4052
  %v4181 = vpack.c.b16 %v4057, %v4053
  %v4182 = vpack.c.b16 %v4058, %v4054
  %v4183 = vpack.c.b16 %v4059, %v4055
  %v4184 = vpack.c.b16 %v4064, %v4060
  %v4185 = vpack.c.b16 %v4065, %v4061
  %v4186 = vpack.c.b16 %v4066, %v4062
  %v4187 = vpack.c.b16 %v4067, %v4063
  %v4188 = vpack.c.b16 %v4072, %v4068
  %v4189 = vpack.c.b16 %v4073, %v4069
  %v4190 = vpack.c.b16 %v4074, %v4070
  %v4191 = vpack.c.b16 %v4075, %v4071
  %v4192 = vpack.c.b16 %v4080, %v4076
  %v4193 = vpack.c.b16 %v4081, %v4077
  %v4194 = vpack.c.b16 %v4082, %v4078
  %v4195 = vpack.c.b16 %v4083, %v4079
  %v4196 = vpack.c.b16 %v4088, %v4084
  %v4197 = vpack.c.b16 %v4089, %v4085
  %v4198 = vpack.c.b16 %v4090, %v4086
  %v4199 = vpack.c.b16 %v4091, %v4087
  %v4200 = vpack.c.b16 %v4096, %v4092
  %v4201 = vpack.c.b16 %v4097, %v4093
  %v4202 = vpack.c.b16 %v4098, %v4094
  %v4203 = vpack.c.b16 %v4099, %v4095
  %v4204 = vpack.c.b16 %v4104, %v4100
  %v4205 = vpack.c.b16 %v4105, %v4101
  %v4206 = vpack.c.b16 %v4106, %v4102
  %v4207 = vpack.c.b16 %v4107, %v4103
  %v4208 = vpack.c.b16 %v4112, %v4108
  %v4209 = vpack.c.b16 %v4113, %v4109
  %v4210 = vpack.c.b16 %v4114, %v4110
  %v4211 = vpack.c.b16 %v4115, %v4111
  %v4212 = vpack.c.b16 %v4120, %v4116
  %v4213 = vpack.c.b16 %v4121, %v4117
  %v4214 = vpack.c.b16 %v4122, %v4118
  %v4215 = vpack.c.b16 %v4123, %v4119
  %v4216 = vpack.c.b16 %v4128, %v4124
  %v4217 = vpack.c.b16 %v4129, %v4125
  %v4218 = vpack.c.b16 %v4130, %v4126
  %v4219 = vpack.c.b16 %v4131, %v4127
  %v4220 = vpack.c.b16 %v4136, %v4132
  %v4221 = vpack.c.b16 %v4137, %v4133
  %v4222 = vpack.c.b16 %v4138, %v4134
  %v4223 = vpack.c.b16 %v4139, %v4135
  %v4224 = vpack.c.b16 %v4144, %v4140
  %v4225 = vpack.c.b16 %v4145, %v4141
  %v4226 = vpack.c.b16 %v4146, %v4142
  %v4227 = vpack.c.b16 %v4147, %v4143
  %v4228 = vpack.c.b16 %v4152, %v4148
  %v4229 = vpack.c.b16 %v4153, %v4149
  %v4230 = vpack.c.b16 %v4154, %v4150
  %v4231 = vpack.c.b16 %v4155, %v4151
  %v4232 = vpack.c.b16 %v4160, %v4156
  %v4233 = vpack.c.b16 %v4161, %v4157
  %v4234 = vpack.c.b16 %v4162, %v4158
  %v4235 = vpack.c.b16 %v4163, %v4159
  %v4309 = vsel %vm2479, %v3945, 0
  %4311 = vmatpush.bf16.msra.mxu0 %v4192
  %4312 = vmatpush.bf16.msra.mxu0 %v4188
  %4313 = vmatpush.bf16.msra.mxu0 %v4184
  %4314 = vmatpush.bf16.msra.mxu0 %v4180
  %4315 = vmatpush.bf16.msra.mxu0 %v4176
  %4316 = vmatpush.bf16.msra.mxu0 %v4172
  %4317 = vmatpush.bf16.msra.mxu0 %v4168
  %4318 = vmatpush.bf16.msra.mxu0 %v4164
  %4319 = vmatmul.bf16.gmra.mxu0 %v3943
  %v4320 = vpop.f32.mrf.mxu0
  %v4321 = vadd.f32 %v3926, %v4320
  %v4322 = vpop.f32.mrf.mxu0
  %v4323 = vadd.f32 %v3931, %v4322
  %4324 = vdwg.mxu0
  %4325 = vmatpush.bf16.msra.mxu0 %v4224
  %4326 = vmatpush.bf16.msra.mxu0 %v4220
  %4327 = vmatpush.bf16.msra.mxu0 %v4216
  %4328 = vmatpush.bf16.msra.mxu0 %v4212
  %4329 = vmatpush.bf16.msra.mxu0 %v4208
  %4330 = vmatpush.bf16.msra.mxu0 %v4204
  %4331 = vmatpush.bf16.msra.mxu0 %v4200
  %4332 = vmatpush.bf16.msra.mxu0 %v4196
  %4333 = vmatmul.bf16.gmra.mxu0 %v3944
  %v4334 = vpop.f32.mrf.mxu0
  %v4335 = vadd.f32 %v4321, %v4334
  %v4336 = vpop.f32.mrf.mxu0
  %v4337 = vadd.f32 %v4323, %v4336
  %4338 = vdwg.mxu0
  %4339 = vmatpush.bf16.msra.mxu0 0
  %4340 = vmatpush.bf16.msra.mxu0 0
  %4341 = vmatpush.bf16.msra.mxu0 0
  %4342 = vmatpush.bf16.msra.mxu0 0
  %4343 = vmatpush.bf16.msra.mxu0 0
  %4344 = vmatpush.bf16.msra.mxu0 0
  %4345 = vmatpush.bf16.msra.mxu0 %v4232
  %4346 = vmatpush.bf16.msra.mxu0 %v4228
  %4347 = vmatmul.bf16.gmra.mxu0 %v4309
  %v4348 = vpop.f32.mrf.mxu0
  %v4349 = vadd.f32 %v4335, %v4348
  %v4350 = vpop.f32.mrf.mxu0
  %v4351 = vadd.f32 %v4337, %v4350
  %4352 = vdwg.mxu0
  %4353 = vmatpush.bf16.msra.mxu0 %v4193
  %4354 = vmatpush.bf16.msra.mxu0 %v4189
  %4355 = vmatpush.bf16.msra.mxu0 %v4185
  %4356 = vmatpush.bf16.msra.mxu0 %v4181
  %4357 = vmatpush.bf16.msra.mxu0 %v4177
  %4358 = vmatpush.bf16.msra.mxu0 %v4173
  %4359 = vmatpush.bf16.msra.mxu0 %v4169
  %4360 = vmatpush.bf16.msra.mxu0 %v4165
  %4361 = vmatmul.bf16.gmra.mxu0 %v3943
  %v4362 = vpop.f32.mrf.mxu0
  %v4363 = vadd.f32 %v3926, %v4362
  %v4364 = vpop.f32.mrf.mxu0
  %v4365 = vadd.f32 %v3931, %v4364
  %4366 = vdwg.mxu0
  %4367 = vmatpush.bf16.msra.mxu0 %v4225
  %4368 = vmatpush.bf16.msra.mxu0 %v4221
  %4369 = vmatpush.bf16.msra.mxu0 %v4217
  %4370 = vmatpush.bf16.msra.mxu0 %v4213
  %4371 = vmatpush.bf16.msra.mxu0 %v4209
  %4372 = vmatpush.bf16.msra.mxu0 %v4205
  %4373 = vmatpush.bf16.msra.mxu0 %v4201
  %4374 = vmatpush.bf16.msra.mxu0 %v4197
  %4375 = vmatmul.bf16.gmra.mxu0 %v3944
  %v4376 = vpop.f32.mrf.mxu0
  %v4377 = vadd.f32 %v4363, %v4376
  %v4378 = vpop.f32.mrf.mxu0
  %v4379 = vadd.f32 %v4365, %v4378
  %4380 = vdwg.mxu0
  %4381 = vmatpush.bf16.msra.mxu0 0
  %4382 = vmatpush.bf16.msra.mxu0 0
  %4383 = vmatpush.bf16.msra.mxu0 0
  %4384 = vmatpush.bf16.msra.mxu0 0
  %4385 = vmatpush.bf16.msra.mxu0 0
  %4386 = vmatpush.bf16.msra.mxu0 0
  %4387 = vmatpush.bf16.msra.mxu0 %v4233
  %4388 = vmatpush.bf16.msra.mxu0 %v4229
  %4389 = vmatmul.bf16.gmra.mxu0 %v4309
  %v4390 = vpop.f32.mrf.mxu0
  %v4391 = vadd.f32 %v4377, %v4390
  %v4392 = vpop.f32.mrf.mxu0
  %v4393 = vadd.f32 %v4379, %v4392
  %4394 = vdwg.mxu0
  %4395 = vmatpush.bf16.msra.mxu0 %v4194
  %4396 = vmatpush.bf16.msra.mxu0 %v4190
  %4397 = vmatpush.bf16.msra.mxu0 %v4186
  %4398 = vmatpush.bf16.msra.mxu0 %v4182
  %4399 = vmatpush.bf16.msra.mxu0 %v4178
  %4400 = vmatpush.bf16.msra.mxu0 %v4174
  %4401 = vmatpush.bf16.msra.mxu0 %v4170
  %4402 = vmatpush.bf16.msra.mxu0 %v4166
  %4403 = vmatmul.bf16.gmra.mxu0 %v3943
  %v4404 = vpop.f32.mrf.mxu0
  %v4405 = vadd.f32 %v3926, %v4404
  %v4406 = vpop.f32.mrf.mxu0
  %v4407 = vadd.f32 %v3931, %v4406
  %4408 = vdwg.mxu0
  %4409 = vmatpush.bf16.msra.mxu0 %v4226
  %4410 = vmatpush.bf16.msra.mxu0 %v4222
  %4411 = vmatpush.bf16.msra.mxu0 %v4218
  %4412 = vmatpush.bf16.msra.mxu0 %v4214
  %4413 = vmatpush.bf16.msra.mxu0 %v4210
  %4414 = vmatpush.bf16.msra.mxu0 %v4206
  %4415 = vmatpush.bf16.msra.mxu0 %v4202
  %4416 = vmatpush.bf16.msra.mxu0 %v4198
  %4417 = vmatmul.bf16.gmra.mxu0 %v3944
  %v4418 = vpop.f32.mrf.mxu0
  %v4419 = vadd.f32 %v4405, %v4418
  %v4420 = vpop.f32.mrf.mxu0
  %v4421 = vadd.f32 %v4407, %v4420
  %4422 = vdwg.mxu0
  %4423 = vmatpush.bf16.msra.mxu0 0
  %4424 = vmatpush.bf16.msra.mxu0 0
  %4425 = vmatpush.bf16.msra.mxu0 0
  %4426 = vmatpush.bf16.msra.mxu0 0
  %4427 = vmatpush.bf16.msra.mxu0 0
  %4428 = vmatpush.bf16.msra.mxu0 0
  %4429 = vmatpush.bf16.msra.mxu0 %v4234
  %4430 = vmatpush.bf16.msra.mxu0 %v4230
  %4431 = vmatmul.bf16.gmra.mxu0 %v4309
  %v4432 = vpop.f32.mrf.mxu0
  %v4433 = vadd.f32 %v4419, %v4432
  %v4434 = vpop.f32.mrf.mxu0
  %v4435 = vadd.f32 %v4421, %v4434
  %4436 = vdwg.mxu0
  %4437 = vmatpush.bf16.msra.mxu0 %v4195
  %4438 = vmatpush.bf16.msra.mxu0 %v4191
  %4439 = vmatpush.bf16.msra.mxu0 %v4187
  %4440 = vmatpush.bf16.msra.mxu0 %v4183
  %4441 = vmatpush.bf16.msra.mxu0 %v4179
  %4442 = vmatpush.bf16.msra.mxu0 %v4175
  %4443 = vmatpush.bf16.msra.mxu0 %v4171
  %4444 = vmatpush.bf16.msra.mxu0 %v4167
  %4445 = vmatmul.bf16.gmra.mxu0 %v3943
  %v4446 = vpop.f32.mrf.mxu0
  %v4447 = vadd.f32 %v3926, %v4446
  %v4448 = vpop.f32.mrf.mxu0
  %v4449 = vadd.f32 %v3931, %v4448
  %4450 = vdwg.mxu0
  %4451 = vmatpush.bf16.msra.mxu0 %v4227
  %4452 = vmatpush.bf16.msra.mxu0 %v4223
  %4453 = vmatpush.bf16.msra.mxu0 %v4219
  %4454 = vmatpush.bf16.msra.mxu0 %v4215
  %4455 = vmatpush.bf16.msra.mxu0 %v4211
  %4456 = vmatpush.bf16.msra.mxu0 %v4207
  %4457 = vmatpush.bf16.msra.mxu0 %v4203
  %4458 = vmatpush.bf16.msra.mxu0 %v4199
  %4459 = vmatmul.bf16.gmra.mxu0 %v3944
  %v4460 = vpop.f32.mrf.mxu0
  %v4461 = vadd.f32 %v4447, %v4460
  %v4462 = vpop.f32.mrf.mxu0
  %v4463 = vadd.f32 %v4449, %v4462
  %4464 = vdwg.mxu0
  %4465 = vmatpush.bf16.msra.mxu0 0
  %4466 = vmatpush.bf16.msra.mxu0 0
  %4467 = vmatpush.bf16.msra.mxu0 0
  %4468 = vmatpush.bf16.msra.mxu0 0
  %4469 = vmatpush.bf16.msra.mxu0 0
  %4470 = vmatpush.bf16.msra.mxu0 0
  %4471 = vmatpush.bf16.msra.mxu0 %v4235
  %4472 = vmatpush.bf16.msra.mxu0 %v4231
  %4473 = vmatmul.bf16.gmra.mxu0 %v4309
  %v4474 = vpop.f32.mrf.mxu0
  %v4475 = vadd.f32 %v4461, %v4474
  %v4476 = vpop.f32.mrf.mxu0
  %v4477 = vadd.f32 %v4463, %v4476
  %4478 = vdwg.mxu0
  %v4479 = vmax.f32 %v4349, 0.0
  %v4480 = vmax.f32 %v4391, 0.0
  %v4481 = vmax.f32 %v4433, 0.0
  %v4482 = vmax.f32 %v4475, 0.0
  %v4483 = vmax.f32 %v4351, 0.0
  %v4484 = vmax.f32 %v4393, 0.0
  %v4485 = vmax.f32 %v4435, 0.0
  %v4486 = vmax.f32 %v4477, 0.0
  %4487 = vst [vmem:[%s12 + $0x80] sm:$0xff] %v4479
  %4488 = vst [vmem:[%s12 + $0x88] sm:$0xff] %v4480
  %4489 = vst [vmem:[%s12 + $0x90] sm:$0xff] %v4481
  %4490 = vst [vmem:[%s12 + $0x98] sm:$0xff] %v4482
  %4491 = vst [vmem:[%s12 + $0xa0] sm:$0xff] %v4483
  %4492 = vst [vmem:[%s12 + $0xa8] sm:$0xff] %v4484
  %4493 = vst [vmem:[%s12 + $0xb0] sm:$0xff] %v4485
  %4494 = vst [vmem:[%s12 + $0xb8] sm:$0xff] %v4486
  %4495 = vrot.lane.b32.xlu0 %v4479, 17
  %v4496 = vpop.permute.xlu0 %4495
  %4497 = vrot.lane.b32.xlu0 %v4483, 17
  %v4498 = vpop.permute.xlu0 %4497
  %4499 = vrot.lane.b32.xlu0 %v4480, 17
  %v4500 = vpop.permute.xlu0 %4499
  %4501 = vrot.lane.b32.xlu0 %v4484, 17
  %v4502 = vpop.permute.xlu0 %4501
  %4503 = vrot.lane.b32.xlu0 %v4481, 17
  %v4504 = vpop.permute.xlu0 %4503
  %4505 = vrot.lane.b32.xlu0 %v4485, 17
  %v4506 = vpop.permute.xlu0 %4505
  %4507 = vrot.lane.b32.xlu0 %v4482, 17
  %v4508 = vpop.permute.xlu0 %4507
  %4509 = vrot.lane.b32.xlu0 %v4486, 17
  %v4510 = vpop.permute.xlu0 %4509
  %v4511 = vsel %vm72, %v4504, %v4508
  %v4512 = vsel %vm72, %v4506, %v4510
  %v4513 = vsel %vm72, %v4500, %v4504
  %v4514 = vsel %vm72, %v4502, %v4506
  %v4515 = vsel %vm72, %v4496, %v4500
  %v4516 = vsel %vm72, %v4498, %v4502
  %v4517 = vsel %vm72, %v4508, %v4496
  %v4518 = vsel %vm72, %v4510, %v4498
  %v4519 = vld [vmem:[%s0] ss:$8 sm:$0xf]
  %v4521 = vperm.slane %v4519, 0
  %v4522 = vperm.slane %v4519, 1
  %v4523 = vperm.slane %v4519, 2
  %v4524 = vperm.slane %v4519, 3
  %v4529 = vmul.f32 %v4517, %v4521
  %v4530 = vmul.f32 %v4515, %v4522
  %v4531 = vmul.f32 %v4513, %v4523
  %v4532 = vmul.f32 %v4511, %v4524
  %v4533 = vmul.f32 %v4518, %v4521
  %v4534 = vmul.f32 %v4516, %v4522
  %v4535 = vmul.f32 %v4514, %v4523
  %v4536 = vmul.f32 %v4512, %v4524
  %v4537 = vpack.c.bf16 %v4530, %v4529
  %v4538 = vpack.c.bf16 %v4532, %v4531
  %v4539 = vpack.c.bf16 %v4534, %v4533
  %v4540 = vpack.c.bf16 %v4536, %v4535
  %4541 = vst [vmem:[#allocation2 + $0x240] sm:$0xff] %v4537
  %4542 = vst [vmem:[#allocation2 + $0x248] sm:$0xff] %v4538
  %4543 = vst [vmem:[#allocation2 + $0x250] sm:$0xff] %v4539
  %4544 = vst [vmem:[#allocation2 + $0x258] sm:$0xff] %v4540
  %4545 = vrot.lane.b32.xlu0 %v4479, 16
  %v4546 = vpop.permute.xlu0 %4545
  %4547 = vrot.lane.b32.xlu0 %v4483, 16
  %v4548 = vpop.permute.xlu0 %4547
  %4549 = vrot.lane.b32.xlu0 %v4480, 16
  %v4550 = vpop.permute.xlu0 %4549
  %4551 = vrot.lane.b32.xlu0 %v4484, 16
  %v4552 = vpop.permute.xlu0 %4551
  %4553 = vrot.lane.b32.xlu0 %v4481, 16
  %v4554 = vpop.permute.xlu0 %4553
  %4555 = vrot.lane.b32.xlu0 %v4485, 16
  %v4556 = vpop.permute.xlu0 %4555
  %4557 = vrot.lane.b32.xlu0 %v4482, 16
  %v4558 = vpop.permute.xlu0 %4557
  %4559 = vrot.lane.b32.xlu0 %v4486, 16
  %v4560 = vpop.permute.xlu0 %4559
  %v4561 = vsel %vm123, %v4554, %v4558
  %v4562 = vsel %vm123, %v4556, %v4560
  %v4563 = vsel %vm123, %v4550, %v4554
  %v4564 = vsel %vm123, %v4552, %v4556
  %v4565 = vsel %vm123, %v4546, %v4550
  %v4566 = vsel %vm123, %v4548, %v4552
  %v4567 = vsel %vm123, %v4558, %v4546
  %v4568 = vsel %vm123, %v4560, %v4548
  %v4569 = vld [vmem:[%s132] ss:$8 sm:$0xf]
  %v4571 = vperm.slane %v4569, 0
  %v4572 = vperm.slane %v4569, 1
  %v4573 = vperm.slane %v4569, 2
  %v4574 = vperm.slane %v4569, 3
  %v4579 = vmul.f32 %v4567, %v4571
  %v4580 = vmul.f32 %v4565, %v4572
  %v4581 = vmul.f32 %v4563, %v4573
  %v4582 = vmul.f32 %v4561, %v4574
  %v4583 = vmul.f32 %v4568, %v4571
  %v4584 = vmul.f32 %v4566, %v4572
  %v4585 = vmul.f32 %v4564, %v4573
  %v4586 = vmul.f32 %v4562, %v4574
  %v4587 = vpack.c.bf16 %v4580, %v4579
  %v4588 = vpack.c.bf16 %v4582, %v4581
  %v4589 = vpack.c.bf16 %v4584, %v4583
  %v4590 = vpack.c.bf16 %v4586, %v4585
  %4591 = vst [vmem:[#allocation2 + $0x260] sm:$0xff] %v4587
  %4592 = vst [vmem:[#allocation2 + $0x268] sm:$0xff] %v4588
  %4593 = vst [vmem:[#allocation2 + $0x270] sm:$0xff] %v4589
  %4594 = vst [vmem:[#allocation2 + $0x278] sm:$0xff] %v4590
  %4595 = vrot.lane.b32.xlu0 %v4479, 15
  %v4596 = vpop.permute.xlu0 %4595
  %4597 = vrot.lane.b32.xlu0 %v4483, 15
  %v4598 = vpop.permute.xlu0 %4597
  %4599 = vrot.lane.b32.xlu0 %v4480, 15
  %v4600 = vpop.permute.xlu0 %4599
  %4601 = vrot.lane.b32.xlu0 %v4484, 15
  %v4602 = vpop.permute.xlu0 %4601
  %4603 = vrot.lane.b32.xlu0 %v4481, 15
  %v4604 = vpop.permute.xlu0 %4603
  %4605 = vrot.lane.b32.xlu0 %v4485, 15
  %v4606 = vpop.permute.xlu0 %4605
  %4607 = vrot.lane.b32.xlu0 %v4482, 15
  %v4608 = vpop.permute.xlu0 %4607
  %4609 = vrot.lane.b32.xlu0 %v4486, 15
  %v4610 = vpop.permute.xlu0 %4609
  %v4611 = vsel %vm175, %v4604, %v4608
  %v4612 = vsel %vm175, %v4606, %v4610
  %v4613 = vsel %vm175, %v4600, %v4604
  %v4614 = vsel %vm175, %v4602, %v4606
  %v4615 = vsel %vm175, %v4596, %v4600
  %v4616 = vsel %vm175, %v4598, %v4602
  %v4617 = vsel %vm175, %v4608, %v4596
  %v4618 = vsel %vm175, %v4610, %v4598
  %v4619 = vld [vmem:[%s184] ss:$8 sm:$0xf]
  %v4621 = vperm.slane %v4619, 0
  %v4622 = vperm.slane %v4619, 1
  %v4623 = vperm.slane %v4619, 2
  %v4624 = vperm.slane %v4619, 3
  %v4629 = vmul.f32 %v4617, %v4621
  %v4630 = vmul.f32 %v4615, %v4622
  %v4631 = vmul.f32 %v4613, %v4623
  %v4632 = vmul.f32 %v4611, %v4624
  %v4633 = vmul.f32 %v4618, %v4621
  %v4634 = vmul.f32 %v4616, %v4622
  %v4635 = vmul.f32 %v4614, %v4623
  %v4636 = vmul.f32 %v4612, %v4624
  %v4637 = vpack.c.bf16 %v4630, %v4629
  %v4638 = vpack.c.bf16 %v4632, %v4631
  %v4639 = vpack.c.bf16 %v4634, %v4633
  %v4640 = vpack.c.bf16 %v4636, %v4635
  %4641 = vst [vmem:[#allocation2 + $0x280] sm:$0xff] %v4637
  %4642 = vst [vmem:[#allocation2 + $0x288] sm:$0xff] %v4638
  %4643 = vst [vmem:[#allocation2 + $0x290] sm:$0xff] %v4639
  %4644 = vst [vmem:[#allocation2 + $0x298] sm:$0xff] %v4640
  %4645 = vrot.lane.b32.xlu0 %v4479, 1
  %v4646 = vpop.permute.xlu0 %4645
  %4647 = vrot.lane.b32.xlu0 %v4483, 1
  %v4648 = vpop.permute.xlu0 %4647
  %4649 = vrot.lane.b32.xlu0 %v4480, 1
  %v4650 = vpop.permute.xlu0 %4649
  %4651 = vrot.lane.b32.xlu0 %v4484, 1
  %v4652 = vpop.permute.xlu0 %4651
  %4653 = vrot.lane.b32.xlu0 %v4481, 1
  %v4654 = vpop.permute.xlu0 %4653
  %4655 = vrot.lane.b32.xlu0 %v4485, 1
  %v4656 = vpop.permute.xlu0 %4655
  %4657 = vrot.lane.b32.xlu0 %v4482, 1
  %v4658 = vpop.permute.xlu0 %4657
  %4659 = vrot.lane.b32.xlu0 %v4486, 1
  %v4660 = vpop.permute.xlu0 %4659
  %v4661 = vsel %vm227, %v4654, %v4658
  %v4662 = vsel %vm227, %v4656, %v4660
  %v4663 = vsel %vm227, %v4650, %v4654
  %v4664 = vsel %vm227, %v4652, %v4656
  %v4665 = vsel %vm227, %v4646, %v4650
  %v4666 = vsel %vm227, %v4648, %v4652
  %v4667 = vsel %vm227, %v4658, %v4646
  %v4668 = vsel %vm227, %v4660, %v4648
  %v4669 = vld [vmem:[%s236] ss:$8 sm:$0xf]
  %v4671 = vperm.slane %v4669, 0
  %v4672 = vperm.slane %v4669, 1
  %v4673 = vperm.slane %v4669, 2
  %v4674 = vperm.slane %v4669, 3
  %v4679 = vmul.f32 %v4667, %v4671
  %v4680 = vmul.f32 %v4665, %v4672
  %v4681 = vmul.f32 %v4663, %v4673
  %v4682 = vmul.f32 %v4661, %v4674
  %v4683 = vmul.f32 %v4668, %v4671
  %v4684 = vmul.f32 %v4666, %v4672
  %v4685 = vmul.f32 %v4664, %v4673
  %v4686 = vmul.f32 %v4662, %v4674
  %v4687 = vpack.c.bf16 %v4680, %v4679
  %v4688 = vpack.c.bf16 %v4682, %v4681
  %v4689 = vpack.c.bf16 %v4684, %v4683
  %v4690 = vpack.c.bf16 %v4686, %v4685
  %4691 = vst [vmem:[#allocation2 + $0x2a0] sm:$0xff] %v4687
  %4692 = vst [vmem:[#allocation2 + $0x2a8] sm:$0xff] %v4688
  %4693 = vst [vmem:[#allocation2 + $0x2b0] sm:$0xff] %v4689
  %4694 = vst [vmem:[#allocation2 + $0x2b8] sm:$0xff] %v4690
  %v4695 = vpack.c.bf16 %v4480, %v4479
  %v4696 = vpack.c.bf16 %v4482, %v4481
  %v4697 = vpack.c.bf16 %v4484, %v4483
  %v4698 = vpack.c.bf16 %v4486, %v4485
  %4699 = vst [vmem:[#allocation2 + $0x2c0] sm:$0xff] %v4695
  %4700 = vst [vmem:[#allocation2 + $0x2c8] sm:$0xff] %v4696
  %4701 = vst [vmem:[#allocation2 + $0x2d0] sm:$0xff] %v4697
  %4702 = vst [vmem:[#allocation2 + $0x2d8] sm:$0xff] %v4698
  %4703 = vrot.lane.b32.xlu0 %v4479, 127
  %v4704 = vpop.permute.xlu0 %4703
  %4705 = vrot.lane.b32.xlu0 %v4483, 127
  %v4706 = vpop.permute.xlu0 %4705
  %4707 = vrot.lane.b32.xlu0 %v4480, 127
  %v4708 = vpop.permute.xlu0 %4707
  %4709 = vrot.lane.b32.xlu0 %v4484, 127
  %v4710 = vpop.permute.xlu0 %4709
  %4711 = vrot.lane.b32.xlu0 %v4481, 127
  %v4712 = vpop.permute.xlu0 %4711
  %4713 = vrot.lane.b32.xlu0 %v4485, 127
  %v4714 = vpop.permute.xlu0 %4713
  %4715 = vrot.lane.b32.xlu0 %v4482, 127
  %v4716 = vpop.permute.xlu0 %4715
  %4717 = vrot.lane.b32.xlu0 %v4486, 127
  %v4718 = vpop.permute.xlu0 %4717
  %v4719 = vsel %vm283, %v4712, %v4716
  %v4720 = vsel %vm283, %v4714, %v4718
  %v4721 = vsel %vm283, %v4708, %v4712
  %v4722 = vsel %vm283, %v4710, %v4714
  %v4723 = vsel %vm283, %v4704, %v4708
  %v4724 = vsel %vm283, %v4706, %v4710
  %v4725 = vsel %vm283, %v4716, %v4704
  %v4726 = vsel %vm283, %v4718, %v4706
  %v4727 = vld [vmem:[%s292] ss:$8 sm:$0xf]
  %v4729 = vperm.slane %v4727, 0
  %v4730 = vperm.slane %v4727, 1
  %v4731 = vperm.slane %v4727, 2
  %v4732 = vperm.slane %v4727, 3
  %v4737 = vmul.f32 %v4723, %v4729
  %v4738 = vmul.f32 %v4721, %v4730
  %v4739 = vmul.f32 %v4719, %v4731
  %v4740 = vmul.f32 %v4725, %v4732
  %v4741 = vmul.f32 %v4724, %v4729
  %v4742 = vmul.f32 %v4722, %v4730
  %v4743 = vmul.f32 %v4720, %v4731
  %v4744 = vmul.f32 %v4726, %v4732
  %v4745 = vpack.c.bf16 %v4738, %v4737
  %v4746 = vpack.c.bf16 %v4740, %v4739
  %v4747 = vpack.c.bf16 %v4742, %v4741
  %v4748 = vpack.c.bf16 %v4744, %v4743
  %4749 = vst [vmem:[#allocation2 + $0x2e0] sm:$0xff] %v4745
  %4750 = vst [vmem:[#allocation2 + $0x2e8] sm:$0xff] %v4746
  %4751 = vst [vmem:[#allocation2 + $0x2f0] sm:$0xff] %v4747
  %4752 = vst [vmem:[#allocation2 + $0x2f8] sm:$0xff] %v4748
  %4753 = vrot.lane.b32.xlu0 %v4479, 113
  %v4754 = vpop.permute.xlu0 %4753
  %4755 = vrot.lane.b32.xlu0 %v4483, 113
  %v4756 = vpop.permute.xlu0 %4755
  %4757 = vrot.lane.b32.xlu0 %v4480, 113
  %v4758 = vpop.permute.xlu0 %4757
  %4759 = vrot.lane.b32.xlu0 %v4484, 113
  %v4760 = vpop.permute.xlu0 %4759
  %4761 = vrot.lane.b32.xlu0 %v4481, 113
  %v4762 = vpop.permute.xlu0 %4761
  %4763 = vrot.lane.b32.xlu0 %v4485, 113
  %v4764 = vpop.permute.xlu0 %4763
  %4765 = vrot.lane.b32.xlu0 %v4482, 113
  %v4766 = vpop.permute.xlu0 %4765
  %4767 = vrot.lane.b32.xlu0 %v4486, 113
  %v4768 = vpop.permute.xlu0 %4767
  %v4769 = vsel %vm335, %v4762, %v4766
  %v4770 = vsel %vm335, %v4764, %v4768
  %v4771 = vsel %vm335, %v4758, %v4762
  %v4772 = vsel %vm335, %v4760, %v4764
  %v4773 = vsel %vm335, %v4754, %v4758
  %v4774 = vsel %vm335, %v4756, %v4760
  %v4775 = vsel %vm335, %v4766, %v4754
  %v4776 = vsel %vm335, %v4768, %v4756
  %v4777 = vld [vmem:[%s344] ss:$8 sm:$0xf]
  %v4779 = vperm.slane %v4777, 0
  %v4780 = vperm.slane %v4777, 1
  %v4781 = vperm.slane %v4777, 2
  %v4782 = vperm.slane %v4777, 3
  %v4787 = vmul.f32 %v4773, %v4779
  %v4788 = vmul.f32 %v4771, %v4780
  %v4789 = vmul.f32 %v4769, %v4781
  %v4790 = vmul.f32 %v4775, %v4782
  %v4791 = vmul.f32 %v4774, %v4779
  %v4792 = vmul.f32 %v4772, %v4780
  %v4793 = vmul.f32 %v4770, %v4781
  %v4794 = vmul.f32 %v4776, %v4782
  %v4795 = vpack.c.bf16 %v4788, %v4787
  %v4796 = vpack.c.bf16 %v4790, %v4789
  %v4797 = vpack.c.bf16 %v4792, %v4791
  %v4798 = vpack.c.bf16 %v4794, %v4793
  %4799 = vst [vmem:[#allocation2 + $0x300] sm:$0xff] %v4795
  %4800 = vst [vmem:[#allocation2 + $0x308] sm:$0xff] %v4796
  %4801 = vst [vmem:[#allocation2 + $0x310] sm:$0xff] %v4797
  %4802 = vst [vmem:[#allocation2 + $0x318] sm:$0xff] %v4798
  %4803 = vrot.lane.b32.xlu0 %v4479, 112
  %v4804 = vpop.permute.xlu0 %4803
  %4805 = vrot.lane.b32.xlu0 %v4483, 112
  %v4806 = vpop.permute.xlu0 %4805
  %4807 = vrot.lane.b32.xlu0 %v4480, 112
  %v4808 = vpop.permute.xlu0 %4807
  %4809 = vrot.lane.b32.xlu0 %v4484, 112
  %v4810 = vpop.permute.xlu0 %4809
  %4811 = vrot.lane.b32.xlu0 %v4481, 112
  %v4812 = vpop.permute.xlu0 %4811
  %4813 = vrot.lane.b32.xlu0 %v4485, 112
  %v4814 = vpop.permute.xlu0 %4813
  %4815 = vrot.lane.b32.xlu0 %v4482, 112
  %v4816 = vpop.permute.xlu0 %4815
  %4817 = vrot.lane.b32.xlu0 %v4486, 112
  %v4818 = vpop.permute.xlu0 %4817
  %v4819 = vsel %vm387, %v4812, %v4816
  %v4820 = vsel %vm387, %v4814, %v4818
  %v4821 = vsel %vm387, %v4808, %v4812
  %v4822 = vsel %vm387, %v4810, %v4814
  %v4823 = vsel %vm387, %v4804, %v4808
  %v4824 = vsel %vm387, %v4806, %v4810
  %v4825 = vsel %vm387, %v4816, %v4804
  %v4826 = vsel %vm387, %v4818, %v4806
  %v4827 = vld [vmem:[%s396] ss:$8 sm:$0xf]
  %v4829 = vperm.slane %v4827, 0
  %v4830 = vperm.slane %v4827, 1
  %v4831 = vperm.slane %v4827, 2
  %v4832 = vperm.slane %v4827, 3
  %v4837 = vmul.f32 %v4823, %v4829
  %v4838 = vmul.f32 %v4821, %v4830
  %v4839 = vmul.f32 %v4819, %v4831
  %v4840 = vmul.f32 %v4825, %v4832
  %v4841 = vmul.f32 %v4824, %v4829
  %v4842 = vmul.f32 %v4822, %v4830
  %v4843 = vmul.f32 %v4820, %v4831
  %v4844 = vmul.f32 %v4826, %v4832
  %v4845 = vpack.c.bf16 %v4838, %v4837
  %v4846 = vpack.c.bf16 %v4840, %v4839
  %v4847 = vpack.c.bf16 %v4842, %v4841
  %v4848 = vpack.c.bf16 %v4844, %v4843
  %4849 = vst [vmem:[#allocation2 + $0x320] sm:$0xff] %v4845
  %4850 = vst [vmem:[#allocation2 + $0x328] sm:$0xff] %v4846
  %4851 = vst [vmem:[#allocation2 + $0x330] sm:$0xff] %v4847
  %4852 = vst [vmem:[#allocation2 + $0x338] sm:$0xff] %v4848
  %4853 = vrot.lane.b32.xlu0 %v4479, 111
  %v4854 = vpop.permute.xlu0 %4853
  %4855 = vrot.lane.b32.xlu0 %v4483, 111
  %v4856 = vpop.permute.xlu0 %4855
  %4857 = vrot.lane.b32.xlu0 %v4480, 111
  %v4858 = vpop.permute.xlu0 %4857
  %4859 = vrot.lane.b32.xlu0 %v4484, 111
  %v4860 = vpop.permute.xlu0 %4859
  %4861 = vrot.lane.b32.xlu0 %v4481, 111
  %v4862 = vpop.permute.xlu0 %4861
  %4863 = vrot.lane.b32.xlu0 %v4485, 111
  %v4864 = vpop.permute.xlu0 %4863
  %4865 = vrot.lane.b32.xlu0 %v4482, 111
  %v4866 = vpop.permute.xlu0 %4865
  %4867 = vrot.lane.b32.xlu0 %v4486, 111
  %v4868 = vpop.permute.xlu0 %4867
  %v4869 = vsel %vm439, %v4862, %v4866
  %v4870 = vsel %vm439, %v4864, %v4868
  %v4871 = vsel %vm439, %v4858, %v4862
  %v4872 = vsel %vm439, %v4860, %v4864
  %v4873 = vsel %vm439, %v4854, %v4858
  %v4874 = vsel %vm439, %v4856, %v4860
  %v4875 = vsel %vm439, %v4866, %v4854
  %v4876 = vsel %vm439, %v4868, %v4856
  %v4877 = vld [vmem:[%s448] ss:$8 sm:$0xf]
  %v4879 = vperm.slane %v4877, 0
  %v4880 = vperm.slane %v4877, 1
  %v4881 = vperm.slane %v4877, 2
  %v4882 = vperm.slane %v4877, 3
  %v4887 = vmul.f32 %v4873, %v4879
  %v4888 = vmul.f32 %v4871, %v4880
  %v4889 = vmul.f32 %v4869, %v4881
  %v4890 = vmul.f32 %v4875, %v4882
  %v4891 = vmul.f32 %v4874, %v4879
  %v4892 = vmul.f32 %v4872, %v4880
  %v4893 = vmul.f32 %v4870, %v4881
  %v4894 = vmul.f32 %v4876, %v4882
  %v4895 = vpack.c.bf16 %v4888, %v4887
  %v4896 = vpack.c.bf16 %v4890, %v4889
  %v4897 = vpack.c.bf16 %v4892, %v4891
  %v4898 = vpack.c.bf16 %v4894, %v4893
  %4899 = vst [vmem:[#allocation2 + $0x340] sm:$0xff] %v4895
  %4900 = vst [vmem:[#allocation2 + $0x348] sm:$0xff] %v4896
  %4901 = vst [vmem:[#allocation2 + $0x350] sm:$0xff] %v4897
  %4902 = vst [vmem:[#allocation2 + $0x358] sm:$0xff] %v4898
  %v4903 = vld [vmem:[%s10] sm:$0xff]
  %v4904 = vld [vmem:[%s10 + $0x8] sm:$0xff]
  %v4905 = vld [vmem:[%s10 + $0x10] sm:$0xff]
  %v4906 = vld [vmem:[%s10 + $0x18] sm:$0xff]
  %v4907 = vld [vmem:[%s11] sm:$0xff]
  %v4908 = vld [vmem:[%s11 + $0x8] sm:$0xff]
  %v4909 = vld [vmem:[#allocation2] sm:$0xff]
  %v4910 = vld [vmem:[#allocation2 + $0x8] sm:$0xff]
  %v4911 = vld [vmem:[#allocation2 + $0x10] sm:$0xff]
  %v4912 = vld [vmem:[#allocation2 + $0x18] sm:$0xff]
  %v4913 = vld [vmem:[#allocation2 + $0x20] sm:$0xff]
  %v4914 = vld [vmem:[#allocation2 + $0x28] sm:$0xff]
  %v4915 = vld [vmem:[#allocation2 + $0x30] sm:$0xff]
  %v4916 = vld [vmem:[#allocation2 + $0x38] sm:$0xff]
  %v4917 = vld [vmem:[#allocation2 + $0x40] sm:$0xff]
  %v4918 = vld [vmem:[#allocation2 + $0x48] sm:$0xff]
  %v4919 = vld [vmem:[#allocation2 + $0x50] sm:$0xff]
  %v4920 = vld [vmem:[#allocation2 + $0x58] sm:$0xff]
  %v4921 = vld [vmem:[#allocation2 + $0x60] sm:$0xff]
  %v4922 = vld [vmem:[#allocation2 + $0x68] sm:$0xff]
  %v4923 = vld [vmem:[#allocation2 + $0x70] sm:$0xff]
  %v4924 = vld [vmem:[#allocation2 + $0x78] sm:$0xff]
  %v4925 = vld [vmem:[#allocation2 + $0x80] sm:$0xff]
  %v4926 = vld [vmem:[#allocation2 + $0x88] sm:$0xff]
  %v4927 = vld [vmem:[#allocation2 + $0x90] sm:$0xff]
  %v4928 = vld [vmem:[#allocation2 + $0x98] sm:$0xff]
  %v4929 = vld [vmem:[#allocation2 + $0xa0] sm:$0xff]
  %v4930 = vld [vmem:[#allocation2 + $0xa8] sm:$0xff]
  %v4931 = vld [vmem:[#allocation2 + $0xb0] sm:$0xff]
  %v4932 = vld [vmem:[#allocation2 + $0xb8] sm:$0xff]
  %v4933 = vld [vmem:[#allocation2 + $0xc0] sm:$0xff]
  %v4934 = vld [vmem:[#allocation2 + $0xc8] sm:$0xff]
  %v4935 = vld [vmem:[#allocation2 + $0xd0] sm:$0xff]
  %v4936 = vld [vmem:[#allocation2 + $0xd8] sm:$0xff]
  %v4937 = vld [vmem:[#allocation2 + $0xe0] sm:$0xff]
  %v4938 = vld [vmem:[#allocation2 + $0xe8] sm:$0xff]
  %v4939 = vld [vmem:[#allocation2 + $0xf0] sm:$0xff]
  %v4940 = vld [vmem:[#allocation2 + $0xf8] sm:$0xff]
  %v4941 = vld [vmem:[#allocation2 + $0x100] sm:$0xff]
  %v4942 = vld [vmem:[#allocation2 + $0x108] sm:$0xff]
  %v4943 = vld [vmem:[#allocation2 + $0x110] sm:$0xff]
  %v4944 = vld [vmem:[#allocation2 + $0x118] sm:$0xff]
  %v4945 = vld [vmem:[#allocation2 + $0x120] sm:$0xff]
  %v4946 = vld [vmem:[#allocation2 + $0x128] sm:$0xff]
  %v4947 = vld [vmem:[#allocation2 + $0x130] sm:$0xff]
  %v4948 = vld [vmem:[#allocation2 + $0x138] sm:$0xff]
  %v4949 = vld [vmem:[#allocation2 + $0x140] sm:$0xff]
  %v4950 = vld [vmem:[#allocation2 + $0x148] sm:$0xff]
  %v4951 = vld [vmem:[#allocation2 + $0x150] sm:$0xff]
  %v4952 = vld [vmem:[#allocation2 + $0x158] sm:$0xff]
  %v4953 = vld [vmem:[#allocation2 + $0x160] sm:$0xff]
  %v4954 = vld [vmem:[#allocation2 + $0x168] sm:$0xff]
  %v4955 = vld [vmem:[#allocation2 + $0x170] sm:$0xff]
  %v4956 = vld [vmem:[#allocation2 + $0x178] sm:$0xff]
  %v4957 = vld [vmem:[#allocation2 + $0x180] sm:$0xff]
  %v4958 = vld [vmem:[#allocation2 + $0x188] sm:$0xff]
  %v4959 = vld [vmem:[#allocation2 + $0x190] sm:$0xff]
  %v4960 = vld [vmem:[#allocation2 + $0x198] sm:$0xff]
  %v4961 = vld [vmem:[#allocation2 + $0x1a0] sm:$0xff]
  %v4962 = vld [vmem:[#allocation2 + $0x1a8] sm:$0xff]
  %v4963 = vld [vmem:[#allocation2 + $0x1b0] sm:$0xff]
  %v4964 = vld [vmem:[#allocation2 + $0x1b8] sm:$0xff]
  %v4965 = vld [vmem:[#allocation2 + $0x1c0] sm:$0xff]
  %v4966 = vld [vmem:[#allocation2 + $0x1c8] sm:$0xff]
  %v4967 = vld [vmem:[#allocation2 + $0x1d0] sm:$0xff]
  %v4968 = vld [vmem:[#allocation2 + $0x1d8] sm:$0xff]
  %v4969 = vld [vmem:[#allocation2 + $0x1e0] sm:$0xff]
  %v4970 = vld [vmem:[#allocation2 + $0x1e8] sm:$0xff]
  %v4971 = vld [vmem:[#allocation2 + $0x1f0] sm:$0xff]
  %v4972 = vld [vmem:[#allocation2 + $0x1f8] sm:$0xff]
  %v4973 = vld [vmem:[#allocation2 + $0x200] sm:$0xff]
  %v4974 = vld [vmem:[#allocation2 + $0x208] sm:$0xff]
  %v4975 = vld [vmem:[#allocation2 + $0x210] sm:$0xff]
  %v4976 = vld [vmem:[#allocation2 + $0x218] sm:$0xff]
  %v4977 = vld [vmem:[#allocation2 + $0x220] sm:$0xff]
  %v4978 = vld [vmem:[#allocation2 + $0x228] sm:$0xff]
  %v4979 = vld [vmem:[#allocation2 + $0x230] sm:$0xff]
  %v4980 = vld [vmem:[#allocation2 + $0x238] sm:$0xff]
  %v4981 = vld [vmem:[#allocation2 + $0x240] sm:$0xff]
  %v4982 = vld [vmem:[#allocation2 + $0x248] sm:$0xff]
  %v4983 = vld [vmem:[#allocation2 + $0x250] sm:$0xff]
  %v4984 = vld [vmem:[#allocation2 + $0x258] sm:$0xff]
  %v4985 = vld [vmem:[#allocation2 + $0x260] sm:$0xff]
  %v4986 = vld [vmem:[#allocation2 + $0x268] sm:$0xff]
  %v4987 = vld [vmem:[#allocation2 + $0x270] sm:$0xff]
  %v4988 = vld [vmem:[#allocation2 + $0x278] sm:$0xff]
  %v4989 = vld [vmem:[#allocation2 + $0x280] sm:$0xff]
  %v4990 = vld [vmem:[#allocation2 + $0x288] sm:$0xff]
  %v4991 = vld [vmem:[#allocation2 + $0x290] sm:$0xff]
  %v4992 = vld [vmem:[#allocation2 + $0x298] sm:$0xff]
  %v4993 = vld [vmem:[#allocation2 + $0x2a0] sm:$0xff]
  %v4994 = vld [vmem:[#allocation2 + $0x2a8] sm:$0xff]
  %v4995 = vld [vmem:[#allocation2 + $0x2b0] sm:$0xff]
  %v4996 = vld [vmem:[#allocation2 + $0x2b8] sm:$0xff]
  %v4997 = vld [vmem:[#allocation2 + $0x2c0] sm:$0xff]
  %v4998 = vld [vmem:[#allocation2 + $0x2c8] sm:$0xff]
  %v4999 = vld [vmem:[#allocation2 + $0x2d0] sm:$0xff]
  %v5000 = vld [vmem:[#allocation2 + $0x2d8] sm:$0xff]
  %v5001 = vld [vmem:[#allocation2 + $0x2e0] sm:$0xff]
  %v5002 = vld [vmem:[#allocation2 + $0x2e8] sm:$0xff]
  %v5003 = vld [vmem:[#allocation2 + $0x2f0] sm:$0xff]
  %v5004 = vld [vmem:[#allocation2 + $0x2f8] sm:$0xff]
  %v5005 = vld [vmem:[#allocation2 + $0x300] sm:$0xff]
  %v5006 = vld [vmem:[#allocation2 + $0x308] sm:$0xff]
  %v5007 = vld [vmem:[#allocation2 + $0x310] sm:$0xff]
  %v5008 = vld [vmem:[#allocation2 + $0x318] sm:$0xff]
  %v5009 = vld [vmem:[#allocation2 + $0x320] sm:$0xff]
  %v5010 = vld [vmem:[#allocation2 + $0x328] sm:$0xff]
  %v5011 = vld [vmem:[#allocation2 + $0x330] sm:$0xff]
  %v5012 = vld [vmem:[#allocation2 + $0x338] sm:$0xff]
  %v5013 = vld [vmem:[#allocation2 + $0x340] sm:$0xff]
  %v5014 = vld [vmem:[#allocation2 + $0x348] sm:$0xff]
  %v5015 = vld [vmem:[#allocation2 + $0x350] sm:$0xff]
  %v5016 = vld [vmem:[#allocation2 + $0x358] sm:$0xff]
  %5018 = vset.pattern.permute.xlu0 0
  %5019 = vperm.xlu0 %5018, %v4907
  %v5020 = vpop.permute.xlu0 %5019
  %5023 = vset.pattern.permute.xlu0 0
  %5024 = vperm.xlu0 %5023, %v4908
  %v5025 = vpop.permute.xlu0 %5024
  %v5031 = vunpack.c.l.b16 %v4903
  %v5032 = vunpack.c.h.b16 %v4903
  %v5033 = vunpack.c.l.b16 %v4904
  %v5034 = vunpack.c.h.b16 %v4904
  %v5035 = vunpack.c.l.b16 %v4905
  %v5036 = vunpack.c.h.b16 %v4905
  %v5037 = vunpack.c.l.b16 %v4906
  %v5038 = vunpack.c.h.b16 %v4906
  %v5039 = vpack.c.b16 %v5035, %v5031
  %v5040 = vpack.c.b16 %v5036, %v5032
  %v5041 = vpack.c.b16 %v5037, %v5033
  %v5042 = vpack.c.b16 %v5038, %v5034
  %v5154 = vunpack.c.l.b16 %v4909
  %v5155 = vunpack.c.h.b16 %v4909
  %v5156 = vunpack.c.l.b16 %v4910
  %v5157 = vunpack.c.h.b16 %v4910
  %v5158 = vunpack.c.l.b16 %v4911
  %v5159 = vunpack.c.h.b16 %v4911
  %v5160 = vunpack.c.l.b16 %v4912
  %v5161 = vunpack.c.h.b16 %v4912
  %v5162 = vunpack.c.l.b16 %v4913
  %v5163 = vunpack.c.h.b16 %v4913
  %v5164 = vunpack.c.l.b16 %v4914
  %v5165 = vunpack.c.h.b16 %v4914
  %v5166 = vunpack.c.l.b16 %v4915
  %v5167 = vunpack.c.h.b16 %v4915
  %v5168 = vunpack.c.l.b16 %v4916
  %v5169 = vunpack.c.h.b16 %v4916
  %v5170 = vunpack.c.l.b16 %v4917
  %v5171 = vunpack.c.h.b16 %v4917
  %v5172 = vunpack.c.l.b16 %v4918
  %v5173 = vunpack.c.h.b16 %v4918
  %v5174 = vunpack.c.l.b16 %v4919
  %v5175 = vunpack.c.h.b16 %v4919
  %v5176 = vunpack.c.l.b16 %v4920
  %v5177 = vunpack.c.h.b16 %v4920
  %v5178 = vunpack.c.l.b16 %v4921
  %v5179 = vunpack.c.h.b16 %v4921
  %v5180 = vunpack.c.l.b16 %v4922
  %v5181 = vunpack.c.h.b16 %v4922
  %v5182 = vunpack.c.l.b16 %v4923
  %v5183 = vunpack.c.h.b16 %v4923
  %v5184 = vunpack.c.l.b16 %v4924
  %v5185 = vunpack.c.h.b16 %v4924
  %v5186 = vunpack.c.l.b16 %v4925
  %v5187 = vunpack.c.h.b16 %v4925
  %v5188 = vunpack.c.l.b16 %v4926
  %v5189 = vunpack.c.h.b16 %v4926
  %v5190 = vunpack.c.l.b16 %v4927
  %v5191 = vunpack.c.h.b16 %v4927
  %v5192 = vunpack.c.l.b16 %v4928
  %v5193 = vunpack.c.h.b16 %v4928
  %v5194 = vunpack.c.l.b16 %v4929
  %v5195 = vunpack.c.h.b16 %v4929
  %v5196 = vunpack.c.l.b16 %v4930
  %v5197 = vunpack.c.h.b16 %v4930
  %v5198 = vunpack.c.l.b16 %v4931
  %v5199 = vunpack.c.h.b16 %v4931
  %v5200 = vunpack.c.l.b16 %v4932
  %v5201 = vunpack.c.h.b16 %v4932
  %v5202 = vunpack.c.l.b16 %v4933
  %v5203 = vunpack.c.h.b16 %v4933
  %v5204 = vunpack.c.l.b16 %v4934
  %v5205 = vunpack.c.h.b16 %v4934
  %v5206 = vunpack.c.l.b16 %v4935
  %v5207 = vunpack.c.h.b16 %v4935
  %v5208 = vunpack.c.l.b16 %v4936
  %v5209 = vunpack.c.h.b16 %v4936
  %v5210 = vunpack.c.l.b16 %v4937
  %v5211 = vunpack.c.h.b16 %v4937
  %v5212 = vunpack.c.l.b16 %v4938
  %v5213 = vunpack.c.h.b16 %v4938
  %v5214 = vunpack.c.l.b16 %v4939
  %v5215 = vunpack.c.h.b16 %v4939
  %v5216 = vunpack.c.l.b16 %v4940
  %v5217 = vunpack.c.h.b16 %v4940
  %v5218 = vunpack.c.l.b16 %v4941
  %v5219 = vunpack.c.h.b16 %v4941
  %v5220 = vunpack.c.l.b16 %v4942
  %v5221 = vunpack.c.h.b16 %v4942
  %v5222 = vunpack.c.l.b16 %v4943
  %v5223 = vunpack.c.h.b16 %v4943
  %v5224 = vunpack.c.l.b16 %v4944
  %v5225 = vunpack.c.h.b16 %v4944
  %v5226 = vunpack.c.l.b16 %v4945
  %v5227 = vunpack.c.h.b16 %v4945
  %v5228 = vunpack.c.l.b16 %v4946
  %v5229 = vunpack.c.h.b16 %v4946
  %v5230 = vunpack.c.l.b16 %v4947
  %v5231 = vunpack.c.h.b16 %v4947
  %v5232 = vunpack.c.l.b16 %v4948
  %v5233 = vunpack.c.h.b16 %v4948
  %v5234 = vunpack.c.l.b16 %v4949
  %v5235 = vunpack.c.h.b16 %v4949
  %v5236 = vunpack.c.l.b16 %v4950
  %v5237 = vunpack.c.h.b16 %v4950
  %v5238 = vunpack.c.l.b16 %v4951
  %v5239 = vunpack.c.h.b16 %v4951
  %v5240 = vunpack.c.l.b16 %v4952
  %v5241 = vunpack.c.h.b16 %v4952
  %v5242 = vunpack.c.l.b16 %v4953
  %v5243 = vunpack.c.h.b16 %v4953
  %v5244 = vunpack.c.l.b16 %v4954
  %v5245 = vunpack.c.h.b16 %v4954
  %v5246 = vunpack.c.l.b16 %v4955
  %v5247 = vunpack.c.h.b16 %v4955
  %v5248 = vunpack.c.l.b16 %v4956
  %v5249 = vunpack.c.h.b16 %v4956
  %v5250 = vunpack.c.l.b16 %v4957
  %v5251 = vunpack.c.h.b16 %v4957
  %v5252 = vunpack.c.l.b16 %v4958
  %v5253 = vunpack.c.h.b16 %v4958
  %v5254 = vunpack.c.l.b16 %v4959
  %v5255 = vunpack.c.h.b16 %v4959
  %v5256 = vunpack.c.l.b16 %v4960
  %v5257 = vunpack.c.h.b16 %v4960
  %v5258 = vunpack.c.l.b16 %v4961
  %v5259 = vunpack.c.h.b16 %v4961
  %v5260 = vunpack.c.l.b16 %v4962
  %v5261 = vunpack.c.h.b16 %v4962
  %v5262 = vunpack.c.l.b16 %v4963
  %v5263 = vunpack.c.h.b16 %v4963
  %v5264 = vunpack.c.l.b16 %v4964
  %v5265 = vunpack.c.h.b16 %v4964
  %v5266 = vunpack.c.l.b16 %v4965
  %v5267 = vunpack.c.h.b16 %v4965
  %v5268 = vunpack.c.l.b16 %v4966
  %v5269 = vunpack.c.h.b16 %v4966
  %v5270 = vunpack.c.l.b16 %v4967
  %v5271 = vunpack.c.h.b16 %v4967
  %v5272 = vunpack.c.l.b16 %v4968
  %v5273 = vunpack.c.h.b16 %v4968
  %v5274 = vunpack.c.l.b16 %v4969
  %v5275 = vunpack.c.h.b16 %v4969
  %v5276 = vunpack.c.l.b16 %v4970
  %v5277 = vunpack.c.h.b16 %v4970
  %v5278 = vunpack.c.l.b16 %v4971
  %v5279 = vunpack.c.h.b16 %v4971
  %v5280 = vunpack.c.l.b16 %v4972
  %v5281 = vunpack.c.h.b16 %v4972
  %v5282 = vunpack.c.l.b16 %v4973
  %v5283 = vunpack.c.h.b16 %v4973
  %v5284 = vunpack.c.l.b16 %v4974
  %v5285 = vunpack.c.h.b16 %v4974
  %v5286 = vunpack.c.l.b16 %v4975
  %v5287 = vunpack.c.h.b16 %v4975
  %v5288 = vunpack.c.l.b16 %v4976
  %v5289 = vunpack.c.h.b16 %v4976
  %v5290 = vunpack.c.l.b16 %v4977
  %v5291 = vunpack.c.h.b16 %v4977
  %v5292 = vunpack.c.l.b16 %v4978
  %v5293 = vunpack.c.h.b16 %v4978
  %v5294 = vunpack.c.l.b16 %v4979
  %v5295 = vunpack.c.h.b16 %v4979
  %v5296 = vunpack.c.l.b16 %v4980
  %v5297 = vunpack.c.h.b16 %v4980
  %v5298 = vunpack.c.l.b16 %v4981
  %v5299 = vunpack.c.h.b16 %v4981
  %v5300 = vunpack.c.l.b16 %v4982
  %v5301 = vunpack.c.h.b16 %v4982
  %v5302 = vunpack.c.l.b16 %v4983
  %v5303 = vunpack.c.h.b16 %v4983
  %v5304 = vunpack.c.l.b16 %v4984
  %v5305 = vunpack.c.h.b16 %v4984
  %v5306 = vunpack.c.l.b16 %v4985
  %v5307 = vunpack.c.h.b16 %v4985
  %v5308 = vunpack.c.l.b16 %v4986
  %v5309 = vunpack.c.h.b16 %v4986
  %v5310 = vunpack.c.l.b16 %v4987
  %v5311 = vunpack.c.h.b16 %v4987
  %v5312 = vunpack.c.l.b16 %v4988
  %v5313 = vunpack.c.h.b16 %v4988
  %v5314 = vunpack.c.l.b16 %v4989
  %v5315 = vunpack.c.h.b16 %v4989
  %v5316 = vunpack.c.l.b16 %v4990
  %v5317 = vunpack.c.h.b16 %v4990
  %v5318 = vunpack.c.l.b16 %v4991
  %v5319 = vunpack.c.h.b16 %v4991
  %v5320 = vunpack.c.l.b16 %v4992
  %v5321 = vunpack.c.h.b16 %v4992
  %v5322 = vunpack.c.l.b16 %v4993
  %v5323 = vunpack.c.h.b16 %v4993
  %v5324 = vunpack.c.l.b16 %v4994
  %v5325 = vunpack.c.h.b16 %v4994
  %v5326 = vunpack.c.l.b16 %v4995
  %v5327 = vunpack.c.h.b16 %v4995
  %v5328 = vunpack.c.l.b16 %v4996
  %v5329 = vunpack.c.h.b16 %v4996
  %v5330 = vunpack.c.l.b16 %v4997
  %v5331 = vunpack.c.h.b16 %v4997
  %v5332 = vunpack.c.l.b16 %v4998
  %v5333 = vunpack.c.h.b16 %v4998
  %v5334 = vunpack.c.l.b16 %v4999
  %v5335 = vunpack.c.h.b16 %v4999
  %v5336 = vunpack.c.l.b16 %v5000
  %v5337 = vunpack.c.h.b16 %v5000
  %v5338 = vunpack.c.l.b16 %v5001
  %v5339 = vunpack.c.h.b16 %v5001
  %v5340 = vunpack.c.l.b16 %v5002
  %v5341 = vunpack.c.h.b16 %v5002
  %v5342 = vunpack.c.l.b16 %v5003
  %v5343 = vunpack.c.h.b16 %v5003
  %v5344 = vunpack.c.l.b16 %v5004
  %v5345 = vunpack.c.h.b16 %v5004
  %v5346 = vunpack.c.l.b16 %v5005
  %v5347 = vunpack.c.h.b16 %v5005
  %v5348 = vunpack.c.l.b16 %v5006
  %v5349 = vunpack.c.h.b16 %v5006
  %v5350 = vunpack.c.l.b16 %v5007
  %v5351 = vunpack.c.h.b16 %v5007
  %v5352 = vunpack.c.l.b16 %v5008
  %v5353 = vunpack.c.h.b16 %v5008
  %v5354 = vunpack.c.l.b16 %v5009
  %v5355 = vunpack.c.h.b16 %v5009
  %v5356 = vunpack.c.l.b16 %v5010
  %v5357 = vunpack.c.h.b16 %v5010
  %v5358 = vunpack.c.l.b16 %v5011
  %v5359 = vunpack.c.h.b16 %v5011
  %v5360 = vunpack.c.l.b16 %v5012
  %v5361 = vunpack.c.h.b16 %v5012
  %v5362 = vunpack.c.l.b16 %v5013
  %v5363 = vunpack.c.h.b16 %v5013
  %v5364 = vunpack.c.l.b16 %v5014
  %v5365 = vunpack.c.h.b16 %v5014
  %v5366 = vunpack.c.l.b16 %v5015
  %v5367 = vunpack.c.h.b16 %v5015
  %v5368 = vunpack.c.l.b16 %v5016
  %v5369 = vunpack.c.h.b16 %v5016
  %v5370 = vpack.c.b16 %v5158, %v5154
  %v5371 = vpack.c.b16 %v5159, %v5155
  %v5372 = vpack.c.b16 %v5160, %v5156
  %v5373 = vpack.c.b16 %v5161, %v5157
  %v5374 = vpack.c.b16 %v5166, %v5162
  %v5375 = vpack.c.b16 %v5167, %v5163
  %v5376 = vpack.c.b16 %v5168, %v5164
  %v5377 = vpack.c.b16 %v5169, %v5165
  %v5378 = vpack.c.b16 %v5174, %v5170
  %v5379 = vpack.c.b16 %v5175, %v5171
  %v5380 = vpack.c.b16 %v5176, %v5172
  %v5381 = vpack.c.b16 %v5177, %v5173
  %v5382 = vpack.c.b16 %v5182, %v5178
  %v5383 = vpack.c.b16 %v5183, %v5179
  %v5384 = vpack.c.b16 %v5184, %v5180
  %v5385 = vpack.c.b16 %v5185, %v5181
  %v5386 = vpack.c.b16 %v5190, %v5186
  %v5387 = vpack.c.b16 %v5191, %v5187
  %v5388 = vpack.c.b16 %v5192, %v5188
  %v5389 = vpack.c.b16 %v5193, %v5189
  %v5390 = vpack.c.b16 %v5198, %v5194
  %v5391 = vpack.c.b16 %v5199, %v5195
  %v5392 = vpack.c.b16 %v5200, %v5196
  %v5393 = vpack.c.b16 %v5201, %v5197
  %v5394 = vpack.c.b16 %v5206, %v5202
  %v5395 = vpack.c.b16 %v5207, %v5203
  %v5396 = vpack.c.b16 %v5208, %v5204
  %v5397 = vpack.c.b16 %v5209, %v5205
  %v5398 = vpack.c.b16 %v5214, %v5210
  %v5399 = vpack.c.b16 %v5215, %v5211
  %v5400 = vpack.c.b16 %v5216, %v5212
  %v5401 = vpack.c.b16 %v5217, %v5213
  %v5402 = vpack.c.b16 %v5222, %v5218
  %v5403 = vpack.c.b16 %v5223, %v5219
  %v5404 = vpack.c.b16 %v5224, %v5220
  %v5405 = vpack.c.b16 %v5225, %v5221
  %v5406 = vpack.c.b16 %v5230, %v5226
  %v5407 = vpack.c.b16 %v5231, %v5227
  %v5408 = vpack.c.b16 %v5232, %v5228
  %v5409 = vpack.c.b16 %v5233, %v5229
  %v5410 = vpack.c.b16 %v5238, %v5234
  %v5411 = vpack.c.b16 %v5239, %v5235
  %v5412 = vpack.c.b16 %v5240, %v5236
  %v5413 = vpack.c.b16 %v5241, %v5237
  %v5414 = vpack.c.b16 %v5246, %v5242
  %v5415 = vpack.c.b16 %v5247, %v5243
  %v5416 = vpack.c.b16 %v5248, %v5244
  %v5417 = vpack.c.b16 %v5249, %v5245
  %v5418 = vpack.c.b16 %v5254, %v5250
  %v5419 = vpack.c.b16 %v5255, %v5251
  %v5420 = vpack.c.b16 %v5256, %v5252
  %v5421 = vpack.c.b16 %v5257, %v5253
  %v5422 = vpack.c.b16 %v5262, %v5258
  %v5423 = vpack.c.b16 %v5263, %v5259
  %v5424 = vpack.c.b16 %v5264, %v5260
  %v5425 = vpack.c.b16 %v5265, %v5261
  %v5426 = vpack.c.b16 %v5270, %v5266
  %v5427 = vpack.c.b16 %v5271, %v5267
  %v5428 = vpack.c.b16 %v5272, %v5268
  %v5429 = vpack.c.b16 %v5273, %v5269
  %v5430 = vpack.c.b16 %v5278, %v5274
  %v5431 = vpack.c.b16 %v5279, %v5275
  %v5432 = vpack.c.b16 %v5280, %v5276
  %v5433 = vpack.c.b16 %v5281, %v5277
  %v5434 = vpack.c.b16 %v5286, %v5282
  %v5435 = vpack.c.b16 %v5287, %v5283
  %v5436 = vpack.c.b16 %v5288, %v5284
  %v5437 = vpack.c.b16 %v5289, %v5285
  %v5438 = vpack.c.b16 %v5294, %v5290
  %v5439 = vpack.c.b16 %v5295, %v5291
  %v5440 = vpack.c.b16 %v5296, %v5292
  %v5441 = vpack.c.b16 %v5297, %v5293
  %v5442 = vpack.c.b16 %v5302, %v5298
  %v5443 = vpack.c.b16 %v5303, %v5299
  %v5444 = vpack.c.b16 %v5304, %v5300
  %v5445 = vpack.c.b16 %v5305, %v5301
  %v5446 = vpack.c.b16 %v5310, %v5306
  %v5447 = vpack.c.b16 %v5311, %v5307
  %v5448 = vpack.c.b16 %v5312, %v5308
  %v5449 = vpack.c.b16 %v5313, %v5309
  %v5450 = vpack.c.b16 %v5318, %v5314
  %v5451 = vpack.c.b16 %v5319, %v5315
  %v5452 = vpack.c.b16 %v5320, %v5316
  %v5453 = vpack.c.b16 %v5321, %v5317
  %v5454 = vpack.c.b16 %v5326, %v5322
  %v5455 = vpack.c.b16 %v5327, %v5323
  %v5456 = vpack.c.b16 %v5328, %v5324
  %v5457 = vpack.c.b16 %v5329, %v5325
  %v5458 = vpack.c.b16 %v5334, %v5330
  %v5459 = vpack.c.b16 %v5335, %v5331
  %v5460 = vpack.c.b16 %v5336, %v5332
  %v5461 = vpack.c.b16 %v5337, %v5333
  %v5462 = vpack.c.b16 %v5342, %v5338
  %v5463 = vpack.c.b16 %v5343, %v5339
  %v5464 = vpack.c.b16 %v5344, %v5340
  %v5465 = vpack.c.b16 %v5345, %v5341
  %v5466 = vpack.c.b16 %v5350, %v5346
  %v5467 = vpack.c.b16 %v5351, %v5347
  %v5468 = vpack.c.b16 %v5352, %v5348
  %v5469 = vpack.c.b16 %v5353, %v5349
  %v5470 = vpack.c.b16 %v5358, %v5354
  %v5471 = vpack.c.b16 %v5359, %v5355
  %v5472 = vpack.c.b16 %v5360, %v5356
  %v5473 = vpack.c.b16 %v5361, %v5357
  %v5474 = vpack.c.b16 %v5366, %v5362
  %v5475 = vpack.c.b16 %v5367, %v5363
  %v5476 = vpack.c.b16 %v5368, %v5364
  %v5477 = vpack.c.b16 %v5369, %v5365
  %vm5586 = vcmask 392192
  %v5588 = vsel %vm5586, %v5042, 0
  %5590 = vmatpush.bf16.msra.mxu0 %v5398
  %5591 = vmatpush.bf16.msra.mxu0 %v5394
  %5592 = vmatpush.bf16.msra.mxu0 %v5390
  %5593 = vmatpush.bf16.msra.mxu0 %v5386
  %5594 = vmatpush.bf16.msra.mxu0 %v5382
  %5595 = vmatpush.bf16.msra.mxu0 %v5378
  %5596 = vmatpush.bf16.msra.mxu0 %v5374
  %5597 = vmatpush.bf16.msra.mxu0 %v5370
  %5598 = vmatmul.bf16.gmra.mxu0 %v5039
  %v5599 = vpop.f32.mrf.mxu0
  %v5600 = vadd.f32 %v5020, %v5599
  %v5601 = vpop.f32.mrf.mxu0
  %v5602 = vadd.f32 %v5025, %v5601
  %5603 = vdwg.mxu0
  %5604 = vmatpush.bf16.msra.mxu0 %v5430
  %5605 = vmatpush.bf16.msra.mxu0 %v5426
  %5606 = vmatpush.bf16.msra.mxu0 %v5422
  %5607 = vmatpush.bf16.msra.mxu0 %v5418
  %5608 = vmatpush.bf16.msra.mxu0 %v5414
  %5609 = vmatpush.bf16.msra.mxu0 %v5410
  %5610 = vmatpush.bf16.msra.mxu0 %v5406
  %5611 = vmatpush.bf16.msra.mxu0 %v5402
  %5612 = vmatmul.bf16.gmra.mxu0 %v5040
  %v5613 = vpop.f32.mrf.mxu0
  %v5614 = vadd.f32 %v5600, %v5613
  %v5615 = vpop.f32.mrf.mxu0
  %v5616 = vadd.f32 %v5602, %v5615
  %5617 = vdwg.mxu0
  %5618 = vmatpush.bf16.msra.mxu0 %v5462
  %5619 = vmatpush.bf16.msra.mxu0 %v5458
  %5620 = vmatpush.bf16.msra.mxu0 %v5454
  %5621 = vmatpush.bf16.msra.mxu0 %v5450
  %5622 = vmatpush.bf16.msra.mxu0 %v5446
  %5623 = vmatpush.bf16.msra.mxu0 %v5442
  %5624 = vmatpush.bf16.msra.mxu0 %v5438
  %5625 = vmatpush.bf16.msra.mxu0 %v5434
  %5626 = vmatmul.bf16.gmra.mxu0 %v5041
  %v5627 = vpop.f32.mrf.mxu0
  %v5628 = vadd.f32 %v5614, %v5627
  %v5629 = vpop.f32.mrf.mxu0
  %v5630 = vadd.f32 %v5616, %v5629
  %5631 = vdwg.mxu0
  %5632 = vmatpush.bf16.msra.mxu0 0
  %5633 = vmatpush.bf16.msra.mxu0 0
  %5634 = vmatpush.bf16.msra.mxu0 0
  %5635 = vmatpush.bf16.msra.mxu0 0
  %5636 = vmatpush.bf16.msra.mxu0 0
  %5637 = vmatpush.bf16.msra.mxu0 %v5474
  %5638 = vmatpush.bf16.msra.mxu0 %v5470
  %5639 = vmatpush.bf16.msra.mxu0 %v5466
  %5640 = vmatmul.bf16.gmra.mxu0 %v5588
  %v5641 = vpop.f32.mrf.mxu0
  %v5642 = vadd.f32 %v5628, %v5641
  %v5643 = vpop.f32.mrf.mxu0
  %v5644 = vadd.f32 %v5630, %v5643
  %5645 = vdwg.mxu0
  %5646 = vmatpush.bf16.msra.mxu0 %v5399
  %5647 = vmatpush.bf16.msra.mxu0 %v5395
  %5648 = vmatpush.bf16.msra.mxu0 %v5391
  %5649 = vmatpush.bf16.msra.mxu0 %v5387
  %5650 = vmatpush.bf16.msra.mxu0 %v5383
  %5651 = vmatpush.bf16.msra.mxu0 %v5379
  %5652 = vmatpush.bf16.msra.mxu0 %v5375
  %5653 = vmatpush.bf16.msra.mxu0 %v5371
  %5654 = vmatmul.bf16.gmra.mxu0 %v5039
  %v5655 = vpop.f32.mrf.mxu0
  %v5656 = vadd.f32 %v5020, %v5655
  %v5657 = vpop.f32.mrf.mxu0
  %v5658 = vadd.f32 %v5025, %v5657
  %5659 = vdwg.mxu0
  %5660 = vmatpush.bf16.msra.mxu0 %v5431
  %5661 = vmatpush.bf16.msra.mxu0 %v5427
  %5662 = vmatpush.bf16.msra.mxu0 %v5423
  %5663 = vmatpush.bf16.msra.mxu0 %v5419
  %5664 = vmatpush.bf16.msra.mxu0 %v5415
  %5665 = vmatpush.bf16.msra.mxu0 %v5411
  %5666 = vmatpush.bf16.msra.mxu0 %v5407
  %5667 = vmatpush.bf16.msra.mxu0 %v5403
  %5668 = vmatmul.bf16.gmra.mxu0 %v5040
  %v5669 = vpop.f32.mrf.mxu0
  %v5670 = vadd.f32 %v5656, %v5669
  %v5671 = vpop.f32.mrf.mxu0
  %v5672 = vadd.f32 %v5658, %v5671
  %5673 = vdwg.mxu0
  %5674 = vmatpush.bf16.msra.mxu0 %v5463
  %5675 = vmatpush.bf16.msra.mxu0 %v5459
  %5676 = vmatpush.bf16.msra.mxu0 %v5455
  %5677 = vmatpush.bf16.msra.mxu0 %v5451
  %5678 = vmatpush.bf16.msra.mxu0 %v5447
  %5679 = vmatpush.bf16.msra.mxu0 %v5443
  %5680 = vmatpush.bf16.msra.mxu0 %v5439
  %5681 = vmatpush.bf16.msra.mxu0 %v5435
  %5682 = vmatmul.bf16.gmra.mxu0 %v5041
  %v5683 = vpop.f32.mrf.mxu0
  %v5684 = vadd.f32 %v5670, %v5683
  %v5685 = vpop.f32.mrf.mxu0
  %v5686 = vadd.f32 %v5672, %v5685
  %5687 = vdwg.mxu0
  %5688 = vmatpush.bf16.msra.mxu0 0
  %5689 = vmatpush.bf16.msra.mxu0 0
  %5690 = vmatpush.bf16.msra.mxu0 0
  %5691 = vmatpush.bf16.msra.mxu0 0
  %5692 = vmatpush.bf16.msra.mxu0 0
  %5693 = vmatpush.bf16.msra.mxu0 %v5475
  %5694 = vmatpush.bf16.msra.mxu0 %v5471
  %5695 = vmatpush.bf16.msra.mxu0 %v5467
  %5696 = vmatmul.bf16.gmra.mxu0 %v5588
  %v5697 = vpop.f32.mrf.mxu0
  %v5698 = vadd.f32 %v5684, %v5697
  %v5699 = vpop.f32.mrf.mxu0
  %v5700 = vadd.f32 %v5686, %v5699
  %5701 = vdwg.mxu0
  %5702 = vmatpush.bf16.msra.mxu0 %v5400
  %5703 = vmatpush.bf16.msra.mxu0 %v5396
  %5704 = vmatpush.bf16.msra.mxu0 %v5392
  %5705 = vmatpush.bf16.msra.mxu0 %v5388
  %5706 = vmatpush.bf16.msra.mxu0 %v5384
  %5707 = vmatpush.bf16.msra.mxu0 %v5380
  %5708 = vmatpush.bf16.msra.mxu0 %v5376
  %5709 = vmatpush.bf16.msra.mxu0 %v5372
  %5710 = vmatmul.bf16.gmra.mxu0 %v5039
  %v5711 = vpop.f32.mrf.mxu0
  %v5712 = vadd.f32 %v5020, %v5711
  %v5713 = vpop.f32.mrf.mxu0
  %v5714 = vadd.f32 %v5025, %v5713
  %5715 = vdwg.mxu0
  %5716 = vmatpush.bf16.msra.mxu0 %v5432
  %5717 = vmatpush.bf16.msra.mxu0 %v5428
  %5718 = vmatpush.bf16.msra.mxu0 %v5424
  %5719 = vmatpush.bf16.msra.mxu0 %v5420
  %5720 = vmatpush.bf16.msra.mxu0 %v5416
  %5721 = vmatpush.bf16.msra.mxu0 %v5412
  %5722 = vmatpush.bf16.msra.mxu0 %v5408
  %5723 = vmatpush.bf16.msra.mxu0 %v5404
  %5724 = vmatmul.bf16.gmra.mxu0 %v5040
  %v5725 = vpop.f32.mrf.mxu0
  %v5726 = vadd.f32 %v5712, %v5725
  %v5727 = vpop.f32.mrf.mxu0
  %v5728 = vadd.f32 %v5714, %v5727
  %5729 = vdwg.mxu0
  %5730 = vmatpush.bf16.msra.mxu0 %v5464
  %5731 = vmatpush.bf16.msra.mxu0 %v5460
  %5732 = vmatpush.bf16.msra.mxu0 %v5456
  %5733 = vmatpush.bf16.msra.mxu0 %v5452
  %5734 = vmatpush.bf16.msra.mxu0 %v5448
  %5735 = vmatpush.bf16.msra.mxu0 %v5444
  %5736 = vmatpush.bf16.msra.mxu0 %v5440
  %5737 = vmatpush.bf16.msra.mxu0 %v5436
  %5738 = vmatmul.bf16.gmra.mxu0 %v5041
  %v5739 = vpop.f32.mrf.mxu0
  %v5740 = vadd.f32 %v5726, %v5739
  %v5741 = vpop.f32.mrf.mxu0
  %v5742 = vadd.f32 %v5728, %v5741
  %5743 = vdwg.mxu0
  %5744 = vmatpush.bf16.msra.mxu0 0
  %5745 = vmatpush.bf16.msra.mxu0 0
  %5746 = vmatpush.bf16.msra.mxu0 0
  %5747 = vmatpush.bf16.msra.mxu0 0
  %5748 = vmatpush.bf16.msra.mxu0 0
  %5749 = vmatpush.bf16.msra.mxu0 %v5476
  %5750 = vmatpush.bf16.msra.mxu0 %v5472
  %5751 = vmatpush.bf16.msra.mxu0 %v5468
  %5752 = vmatmul.bf16.gmra.mxu0 %v5588
  %v5753 = vpop.f32.mrf.mxu0
  %v5754 = vadd.f32 %v5740, %v5753
  %v5755 = vpop.f32.mrf.mxu0
  %v5756 = vadd.f32 %v5742, %v5755
  %5757 = vdwg.mxu0
  %5758 = vmatpush.bf16.msra.mxu0 %v5401
  %5759 = vmatpush.bf16.msra.mxu0 %v5397
  %5760 = vmatpush.bf16.msra.mxu0 %v5393
  %5761 = vmatpush.bf16.msra.mxu0 %v5389
  %5762 = vmatpush.bf16.msra.mxu0 %v5385
  %5763 = vmatpush.bf16.msra.mxu0 %v5381
  %5764 = vmatpush.bf16.msra.mxu0 %v5377
  %5765 = vmatpush.bf16.msra.mxu0 %v5373
  %5766 = vmatmul.bf16.gmra.mxu0 %v5039
  %v5767 = vpop.f32.mrf.mxu0
  %v5768 = vadd.f32 %v5020, %v5767
  %v5769 = vpop.f32.mrf.mxu0
  %v5770 = vadd.f32 %v5025, %v5769
  %5771 = vdwg.mxu0
  %5772 = vmatpush.bf16.msra.mxu0 %v5433
  %5773 = vmatpush.bf16.msra.mxu0 %v5429
  %5774 = vmatpush.bf16.msra.mxu0 %v5425
  %5775 = vmatpush.bf16.msra.mxu0 %v5421
  %5776 = vmatpush.bf16.msra.mxu0 %v5417
  %5777 = vmatpush.bf16.msra.mxu0 %v5413
  %5778 = vmatpush.bf16.msra.mxu0 %v5409
  %5779 = vmatpush.bf16.msra.mxu0 %v5405
  %5780 = vmatmul.bf16.gmra.mxu0 %v5040
  %v5781 = vpop.f32.mrf.mxu0
  %v5782 = vadd.f32 %v5768, %v5781
  %v5783 = vpop.f32.mrf.mxu0
  %v5784 = vadd.f32 %v5770, %v5783
  %5785 = vdwg.mxu0
  %5786 = vmatpush.bf16.msra.mxu0 %v5465
  %5787 = vmatpush.bf16.msra.mxu0 %v5461
  %5788 = vmatpush.bf16.msra.mxu0 %v5457
  %5789 = vmatpush.bf16.msra.mxu0 %v5453
  %5790 = vmatpush.bf16.msra.mxu0 %v5449
  %5791 = vmatpush.bf16.msra.mxu0 %v5445
  %5792 = vmatpush.bf16.msra.mxu0 %v5441
  %5793 = vmatpush.bf16.msra.mxu0 %v5437
  %5794 = vmatmul.bf16.gmra.mxu0 %v5041
  %v5795 = vpop.f32.mrf.mxu0
  %v5796 = vadd.f32 %v5782, %v5795
  %v5797 = vpop.f32.mrf.mxu0
  %v5798 = vadd.f32 %v5784, %v5797
  %5799 = vdwg.mxu0
  %5800 = vmatpush.bf16.msra.mxu0 0
  %5801 = vmatpush.bf16.msra.mxu0 0
  %5802 = vmatpush.bf16.msra.mxu0 0
  %5803 = vmatpush.bf16.msra.mxu0 0
  %5804 = vmatpush.bf16.msra.mxu0 0
  %5805 = vmatpush.bf16.msra.mxu0 %v5477
  %5806 = vmatpush.bf16.msra.mxu0 %v5473
  %5807 = vmatpush.bf16.msra.mxu0 %v5469
  %5808 = vmatmul.bf16.gmra.mxu0 %v5588
  %v5809 = vpop.f32.mrf.mxu0
  %v5810 = vadd.f32 %v5796, %v5809
  %v5811 = vpop.f32.mrf.mxu0
  %v5812 = vadd.f32 %v5798, %v5811
  %5813 = vdwg.mxu0
  %v5814 = vmax.f32 %v5642, 0.0
  %v5815 = vmax.f32 %v5698, 0.0
  %v5816 = vmax.f32 %v5754, 0.0
  %v5817 = vmax.f32 %v5810, 0.0
  %v5818 = vmax.f32 %v5644, 0.0
  %v5819 = vmax.f32 %v5700, 0.0
  %v5820 = vmax.f32 %v5756, 0.0
  %v5821 = vmax.f32 %v5812, 0.0
  %5822 = vst [vmem:[%s12 + $0xc0] sm:$0xff] %v5814
  %5823 = vst [vmem:[%s12 + $0xc8] sm:$0xff] %v5815
  %5824 = vst [vmem:[%s12 + $0xd0] sm:$0xff] %v5816
  %5825 = vst [vmem:[%s12 + $0xd8] sm:$0xff] %v5817
  %5826 = vst [vmem:[%s12 + $0xe0] sm:$0xff] %v5818
  %5827 = vst [vmem:[%s12 + $0xe8] sm:$0xff] %v5819
  %5828 = vst [vmem:[%s12 + $0xf0] sm:$0xff] %v5820
  %5829 = vst [vmem:[%s12 + $0xf8] sm:$0xff] %v5821
  // Predicated region
  $region50: #{encoder1_forward.1} parent=0 // pred_check
    _
  $region51: #{encoder1_forward.1} parent=0 // pred_check_branch
    %5831 = sbr.rel (0) target = $region53
  $region52: #{encoder1_forward.1} parent=0 // pred_region
    _
  $region53: #{encoder1_forward.1} parent=0 // pred_fallthru
    _
  // Predicated region
  $region54: #{encoder1_forward.1} parent=0 // pred_check
    _
  $region55: #{encoder1_forward.1} parent=0 // pred_check_branch
    %5833 = sbr.rel (0) target = $region57
  $region56: #{encoder1_forward.1} parent=0 // pred_region
    _
  $region57: #{encoder1_forward.1} parent=0 // pred_fallthru
    _

</llo_original>
